<compile_context>
chip_gen: v5e
topology: v5e:2x2
jax: 0.10.0
libtpu: 0.0.40
codegen_flags: <defaults>
</compile_context>

<pallas_src>
import functools

import jax
import jax.numpy as jnp
from jax.experimental import pallas as pl
from jax.experimental.pallas import tpu as pltpu

LEAKY_02 = 0.2        # LeakyReLU(0.2) after convs 1-3
LEAKY_DEFAULT = 0.01  # nn.LeakyReLU() default after conv 4
BN_EPS = 1e-5

N_HAIRS = 12
N_EYES = 11


# ---------------------------------------------------------------------------
# Pallas kernels
# ---------------------------------------------------------------------------
def _gemm_bias_act_kernel(p_ref, w_ref, b_ref, o_ref, *, slope):
    # bf16 x bf16 -> f32 on the MXU; bias + LeakyReLU in f32 on the VPU.
    x = jnp.dot(p_ref[...], w_ref[...], preferred_element_type=jnp.float32)
    x = x + b_ref[...]
    o_ref[...] = jnp.where(x >= 0.0, x, slope * x).astype(o_ref.dtype)


def _conv_bn_act_kernel(p_ref, w_ref, b_ref, g_ref, bt_ref, o_ref,
                        y_scr, s_scr, q_scr, *, slope, tm):
    # Fused: tiled matmul + bias, global BN stats accumulation, BN finalize +
    # scale/shift + LeakyReLU at the last grid step.  Pre-BN y stays in VMEM.
    i = pl.program_id(0)

    @pl.when(i == 0)
    def _init():
        s_scr[...] = jnp.zeros_like(s_scr)
        q_scr[...] = jnp.zeros_like(q_scr)

    y = jnp.dot(p_ref[...], w_ref[...], preferred_element_type=jnp.float32)
    y = y + b_ref[...]
    r0 = pl.multiple_of(i * tm, tm)
    y_scr[pl.ds(r0, tm), :] = y
    s_scr[...] = s_scr[...] + jnp.sum(y, axis=0, keepdims=True)
    q_scr[...] = q_scr[...] + jnp.sum(y * y, axis=0, keepdims=True)

    @pl.when(i == pl.num_programs(0) - 1)
    def _finalize():
        # Train-mode BatchNorm2d: biased variance over M = N*H*W, eps=1e-5.
        inv_m = 1.0 / y_scr.shape[0]
        mean = s_scr[...] * inv_m
        var = jnp.maximum(q_scr[...] * inv_m - mean * mean, 0.0)
        scale = g_ref[...] * jax.lax.rsqrt(var + BN_EPS)
        shift = bt_ref[...] - mean * scale
        z = y_scr[...] * scale + shift
        o_ref[...] = jnp.where(z >= 0.0, z, slope * z).astype(o_ref.dtype)


def _conv4_bn_heads_kernel(p_ref, w_ref, b_ref, g_ref, bt_ref,
                           wh_ref, hb_ref, o_ref, *, slope, n_spatial, batch):
    # conv4 matmul + bias + train-mode BN + LeakyReLU, then the three fused
    # Linear heads (label|hair|eye) without ever writing conv4's activations
    # to HBM.  Patch rows are ordered (spatial, batch) so each spatial tap is a
    # contiguous row block; head weights are (spatial, Cpad, Opad).
    y = jnp.dot(p_ref[...], w_ref[...], preferred_element_type=jnp.float32)
    y = y + b_ref[...]
    inv_m = 1.0 / (n_spatial * batch)
    mean = jnp.sum(y, axis=0, keepdims=True) * inv_m
    var = jnp.maximum(jnp.sum(y * y, axis=0, keepdims=True) * inv_m - mean * mean, 0.0)
    scale = g_ref[...] * jax.lax.rsqrt(var + BN_EPS)
    shift = bt_ref[...] - mean * scale
    z = y * scale + shift
    z = jnp.where(z >= 0.0, z, slope * z)

    opad = o_ref.shape[1]
    acc = jnp.zeros((batch, opad), jnp.float32)
    for s in range(n_spatial):                          # static unrolled loop
        zs = z[s * batch:(s + 1) * batch, :].astype(jnp.bfloat16)
        acc = acc + jnp.dot(zs, wh_ref[s], preferred_element_type=jnp.float32)
    yh = acc + hb_ref[...]
    lane = jax.lax.broadcasted_iota(jnp.int32, yh.shape, 1)
    o_ref[...] = jnp.where(lane == 0, jax.nn.sigmoid(yh), yh)   # sigmoid: label head only


# ---------------------------------------------------------------------------
# pallas_call wrappers
# ---------------------------------------------------------------------------
def _pick_tm(m):
    # Largest tile <= 1024 rows that divides M.  Per-step footprint stays well
    # below the scoped-VMEM default (16 MiB v5e / 32 MiB v6e+v7x), so TM is
    # purely an overhead / pipelining knob here, not a VMEM limit.
    for tm in (1024, 512, 256, 128, 64, 32, 16, 8):
        if m % tm == 0:
            return tm
    return m


def gemm_bias_act(patches, w, b, *, slope):
    m, kp = patches.shape
    npad = w.shape[1]
    tm = _pick_tm(m)
    return pl.pallas_call(
        functools.partial(_gemm_bias_act_kernel, slope=slope),
        grid=(m // tm,),
        out_shape=jax.ShapeDtypeStruct((m, npad), jnp.bfloat16),
        in_specs=[
            pl.BlockSpec((tm, kp), lambda i: (i, 0)),
            pl.BlockSpec((kp, npad), lambda i: (0, 0)),
            pl.BlockSpec((1, npad), lambda i: (0, 0)),
        ],
        out_specs=pl.BlockSpec((tm, npad), lambda i: (i, 0)),
        compiler_params=pltpu.CompilerParams(
            dimension_semantics=("parallel",)),
    )(patches, w, b)


def conv_bn_act(patches, w, b, gamma, beta, *, slope):
    m, kp = patches.shape
    npad = w.shape[1]
    tm = _pick_tm(m)
    return pl.pallas_call(
        functools.partial(_conv_bn_act_kernel, slope=slope, tm=tm),
        grid=(m // tm,),
        out_shape=jax.ShapeDtypeStruct((m, npad), jnp.bfloat16),
        in_specs=[
            pl.BlockSpec((tm, kp), lambda i: (i, 0)),
            pl.BlockSpec((kp, npad), lambda i: (0, 0)),
            pl.BlockSpec((1, npad), lambda i: (0, 0)),
            pl.BlockSpec((1, npad), lambda i: (0, 0)),
            pl.BlockSpec((1, npad), lambda i: (0, 0)),
        ],
        # Full-array resident output block, written once at the last grid step.
        out_specs=pl.BlockSpec((m, npad), lambda i: (0, 0)),
        scratch_shapes=[
            pltpu.VMEM((m, npad), jnp.float32),   # pre-BN y (full M)
            pltpu.VMEM((1, npad), jnp.float32),   # per-channel sum
            pltpu.VMEM((1, npad), jnp.float32),   # per-channel sum of squares
        ],
        compiler_params=pltpu.CompilerParams(
            dimension_semantics=("arbitrary",)),
    )(patches, w, b, gamma, beta)


def conv4_bn_heads(patches, w, b, gamma, beta, head_w, head_b,
                   *, batch, n_spatial, slope):
    m, kp = patches.shape           # m = n_spatial * batch (tiny: 16*B)
    npad = w.shape[1]
    opad = head_w.shape[2]
    return pl.pallas_call(
        functools.partial(_conv4_bn_heads_kernel, slope=slope,
                          n_spatial=n_spatial, batch=batch),
        grid=(1,),
        out_shape=jax.ShapeDtypeStruct((batch, opad), jnp.float32),
        in_specs=[
            pl.BlockSpec((m, kp), lambda i: (0, 0)),
            pl.BlockSpec((kp, npad), lambda i: (0, 0)),
            pl.BlockSpec((1, npad), lambda i: (0, 0)),
            pl.BlockSpec((1, npad), lambda i: (0, 0)),
            pl.BlockSpec((1, npad), lambda i: (0, 0)),
            pl.BlockSpec((n_spatial, npad, opad), lambda i: (0, 0, 0)),
            pl.BlockSpec((1, opad), lambda i: (0, 0)),
        ],
        out_specs=pl.BlockSpec((batch, opad), lambda i: (0, 0)),
        compiler_params=pltpu.CompilerParams(
            dimension_semantics=("arbitrary",)),
    )(patches, w, b, gamma, beta, head_w, head_b)


# ---------------------------------------------------------------------------
# Plain-JAX glue: fused patch extraction + layer plumbing (all NHWC, bf16)
# ---------------------------------------------------------------------------
def _round_up(x, m):
    return ((x + m - 1) // m) * m


def extract_patches(x, kh, kw, stride, pad, kpad):
    # One fused XLA op; output rows ordered (b, oh, ow), K ordered (cin, kh, kw)
    # to match the pre-permuted weight rows.  K is zero-padded to kpad.
    b, h, w, c = x.shape
    p = jax.lax.conv_general_dilated_patches(
        x, filter_shape=(kh, kw), window_strides=(stride, stride),
        padding=((pad, pad), (pad, pad)),
        dimension_numbers=("NHWC", "HWIO", "NHWC"))
    oh, ow = p.shape[1], p.shape[2]
    k = c * kh * kw
    p = p.reshape(b * oh * ow, k)
    if kpad > k:
        p = jnp.pad(p, ((0, 0), (0, kpad - k)))
    return p.astype(jnp.bfloat16), oh, ow


def conv_act_layer(x, lw, *, stride, pad, slope):
    b = x.shape[0]
    patches, oh, ow = extract_patches(x, lw["kh"], lw["kw"], stride, pad, lw["kpad"])
    y = gemm_bias_act(patches, lw["w"], lw["b"], slope=slope)
    return y.reshape(b, oh, ow, -1)[..., :lw["cout"]]           # stays NHWC


def conv_bn_layer(x, lw, *, stride, pad, slope):
    b = x.shape[0]
    patches, oh, ow = extract_patches(x, lw["kh"], lw["kw"], stride, pad, lw["kpad"])
    y = conv_bn_act(patches, lw["w"], lw["b"], lw["gamma"], lw["beta"], slope=slope)
    return y.reshape(b, oh, ow, -1)[..., :lw["cout"]]           # stays NHWC


def conv_bn_heads_layer(x, lw, *, stride, pad, slope):
    b = x.shape[0]
    patches, oh, ow = extract_patches(x, lw["kh"], lw["kw"], stride, pad, lw["kpad"])
    s = oh * ow
    kp = patches.shape[1]
    # Reorder rows (b, s) -> (s, b): contiguous per-spatial row blocks for the
    # fused head GEMM; PyTorch's NCHW flatten is absorbed in the head weights.
    patches = patches.reshape(b, s, kp).transpose(1, 0, 2).reshape(s * b, kp)
    return conv4_bn_heads(patches, lw["w"], lw["b"], lw["gamma"], lw["beta"],
                          lw["head_w"], lw["head_b"],
                          batch=b, n_spatial=s, slope=slope)


def discriminator_forward(x_nchw, pp):
    x = jnp.transpose(x_nchw, (0, 2, 3, 1)).astype(jnp.bfloat16)   # NCHW->NHWC once
    x = conv_act_layer(x, pp["c1"], stride=3, pad=1, slope=LEAKY_02)
    x = conv_bn_layer(x, pp["c2"], stride=2, pad=1, slope=LEAKY_02)
    x = conv_bn_layer(x, pp["c3"], stride=2, pad=1, slope=LEAKY_02)
    y = conv_bn_heads_layer(x, pp["c4"], stride=2, pad=1, slope=LEAKY_DEFAULT)
    y_label = y[:, 0:1]
    y_hair = y[:, 1:1 + N_HAIRS]
    y_eye = y[:, 1 + N_HAIRS:1 + N_HAIRS + N_EYES]
    return y_label, y_hair, y_eye


# ---------------------------------------------------------------------------
# Parameter prep (done ONCE, outside the jitted forward)
# ---------------------------------------------------------------------------
def _prep_conv(w, b, gamma=None, beta=None):
    cout, cin, kh, kw = w.shape
    k = cin * kh * kw
    kp = _round_up(k, 128)
    npad = _round_up(cout, 128)
    # PyTorch weight [Cout, Cin, KH, KW] -> rows ordered (cin, kh, kw) to match
    # conv_general_dilated_patches' feature order; cols = Cout, zero-padded.
    wk = jnp.transpose(w, (1, 2, 3, 0)).reshape(k, cout)
    wk = jnp.pad(wk, ((0, kp - k), (0, npad - cout))).astype(jnp.bfloat16)
    out = dict(
        w=wk,
        b=jnp.pad(b, (0, npad - cout)).reshape(1, npad).astype(jnp.float32),
        kh=kh, kw=kw, cout=cout, kpad=kp, npad=npad)
    if gamma is not None:
        # Zero-padded gamma/beta keep padded BN lanes exactly 0 (required).
        out["gamma"] = jnp.pad(gamma, (0, npad - cout)).reshape(1, npad).astype(jnp.float32)
        out["beta"] = jnp.pad(beta, (0, npad - cout)).reshape(1, npad).astype(jnp.float32)
    return out


def _prep_heads(wl, bl, wh, bh, we, be, cout, npad, hh, ww):
    # PyTorch flatten order is (c, h, w); the conv4 kernel consumes features
    # per spatial tap with npad channel lanes, so build fused head weights of
    # shape (hh*ww, npad, opad): [spatial, channel, output], zero-padded.
    def per_spatial(w_pt):
        o = w_pt.shape[0]
        v = jnp.transpose(w_pt.reshape(o, cout, hh, ww), (2, 3, 1, 0))  # (h,w,c,o)
        return v.reshape(hh * ww, cout, o)

    w_all = jnp.concatenate([per_spatial(wl), per_spatial(wh), per_spatial(we)], axis=2)
    b_all = jnp.concatenate([bl, bh, be])
    o = w_all.shape[2]
    opad = _round_up(o, 128)
    w_all = jnp.pad(w_all, ((0, 0), (0, npad - cout), (0, opad - o))).astype(jnp.bfloat16)
    b_all = jnp.pad(b_all, (0, opad - o)).reshape(1, opad).astype(jnp.float32)
    return w_all, b_all


def prepare_params(p, hidden):
    pp = {
        "c1": _prep_conv(p["w1"], p["b1"]),
        "c2": _prep_conv(p["w2"], p["b2"], p["g2"], p["be2"]),
        "c3": _prep_conv(p["w3"], p["b3"], p["g3"], p["be3"]),
        "c4": _prep_conv(p["w4"], p["b4"], p["g4"], p["be4"]),
    }
    head_w, head_b = _prep_heads(p["wl"], p["bl"], p["wh"], p["bh"],
                                 p["we"], p["be"],
                                 cout=8 * hidden, npad=pp["c4"]["npad"],
                                 hh=4, ww=4)
    pp["c4"]["head_w"] = head_w
    pp["c4"]["head_b"] = head_b
    return pp


def init_params(key, hidden):
    ks = jax.random.split(key, 20)
    nrm = lambda k, s: (0.05 * jax.random.normal(k, s)).astype(jnp.float32)
    H = hidden
    F = H * 8 * 16
    return {
        "w1": nrm(ks[0], (H, 3, 5, 5)),          "b1": nrm(ks[1], (H,)),
        "w2": nrm(ks[2], (2 * H, H, 4, 4)),      "b2": nrm(ks[3], (2 * H,)),
        "g2": 1.0 + nrm(ks[4], (2 * H,)),        "be2": nrm(ks[5], (2 * H,)),
        "w3": nrm(ks[6], (4 * H, 2 * H, 4, 4)),  "b3": nrm(ks[7], (4 * H,)),
        "g3": 1.0 + nrm(ks[8], (4 * H,)),        "be3": nrm(ks[9], (4 * H,)),
        "w4": nrm(ks[10], (8 * H, 4 * H, 4, 4)), "b4": nrm(ks[11], (8 * H,)),
        "g4": 1.0 + nrm(ks[12], (8 * H,)),       "be4": nrm(ks[13], (8 * H,)),
        "wl": nrm(ks[14], (1, F)),               "bl": nrm(ks[15], (1,)),
        "wh": nrm(ks[16], (N_HAIRS, F)),         "bh": nrm(ks[17], (N_HAIRS,)),
        "we": nrm(ks[18], (N_EYES, F)),          "be": nrm(ks[19], (N_EYES,)),
    }


# ---------------------------------------------------------------------------
# Pure-XLA f32 reference (training-mode BN) for a loose layout/accuracy check
# ---------------------------------------------------------------------------
def _ref_forward(x, p):
    hp = jax.lax.Precision.HIGHEST

    def conv(h, w, b, stride, pad):
        y = jax.lax.conv_general_dilated(
            h, w, (stride, stride), ((pad, pad), (pad, pad)),
            dimension_numbers=("NCHW", "OIHW", "NCHW"), precision=hp)
        return y + b[None, :, None, None]

    def bn(y, g, bt):
        mean = jnp.mean(y, axis=(0, 2, 3), keepdims=True)
        var = jnp.mean((y - mean) ** 2, axis=(0, 2, 3), keepdims=True)
        yhat = (y - mean) * jax.lax.rsqrt(var + BN_EPS)
        return yhat * g[None, :, None, None] + bt[None, :, None, None]

    def leaky(y, s):
        return jnp.where(y >= 0, y, s * y)

    h = leaky(conv(x, p["w1"], p["b1"], 3, 1), LEAKY_02)
    h = leaky(bn(conv(h, p["w2"], p["b2"], 2, 1), p["g2"], p["be2"]), LEAKY_02)
    h = leaky(bn(conv(h, p["w3"], p["b3"], 2, 1), p["g3"], p["be3"]), LEAKY_02)
    h = leaky(bn(conv(h, p["w4"], p["b4"], 2, 1), p["g4"], p["be4"]), LEAKY_DEFAULT)
    feat = h.reshape(h.shape[0], -1)                      # NCHW flatten
    y_label = jax.nn.sigmoid(jnp.dot(feat, p["wl"].T, precision=hp) + p["bl"])
    y_hair = jnp.dot(feat, p["wh"].T, precision=hp) + p["bh"]
    y_eye = jnp.dot(feat, p["we"].T, precision=hp) + p["be"]
    return y_label, y_hair, y_eye


if __name__ == "__main__":
    key = jax.random.PRNGKey(0)
    k_param, k_x = jax.random.split(key)

    hidden_size = 8                      # conf.hidden_size (small)
    B = 2
    x = jax.random.normal(k_x, (B, 3, 96, 96), dtype=jnp.float32)

    raw_params = init_params(k_param, hidden_size)
    prepared = prepare_params(raw_params, hidden_size)    # once, outside jit

    fwd = jax.jit(lambda xx: discriminator_forward(xx, prepared))
    y_label, y_hair, y_eye = fwd(x)
    jax.block_until_ready((y_label, y_hair, y_eye))

    assert y_label.shape == (B, 1)
    assert y_hair.shape == (B, N_HAIRS)
    assert y_eye.shape == (B, N_EYES)
    assert bool(jnp.all((y_label >= 0.0) & (y_label <= 1.0)))
    assert bool(jnp.all(jnp.isfinite(y_hair)))
    assert bool(jnp.all(jnp.isfinite(y_eye)))

    # Loose tolerance vs. an f32 XLA reference (kernels use bf16 MXU operands;
    # a layout bug would produce O(1)+ logit discrepancies, bf16 noise is ~0.1).
    rl, rh, re = jax.jit(lambda xx: _ref_forward(xx, raw_params))(x)
    jax.block_until_ready((rl, rh, re))
    assert float(jnp.max(jnp.abs(y_label - rl))) < 0.25
    assert float(jnp.max(jnp.abs(y_hair - rh))) < 0.75
    assert float(jnp.max(jnp.abs(y_eye - re))) < 0.75

    print("KERNEL_OK")
</pallas_src>

<mosaic_0001>
module attributes {stable_mosaic.version = 11 : i64} {
  func.func @_gemm_bias_act_kernel(%arg0: i32, %arg1: memref<1024x128xbf16, #tpu.memory_space<vmem>>, %arg2: memref<128x128xbf16, #tpu.memory_space<vmem>>, %arg3: memref<1x128xf32, #tpu.memory_space<vmem>>, %arg4: memref<1024x128xbf16, #tpu.memory_space<vmem>>) attributes {dimension_semantics = [#tpu.dimension_semantics<parallel>], iteration_bounds = array<i64: 2>, scalar_prefetch = 0 : i64, scratch_operands = 0 : i64, tpu.core_type = #tpu.core_type<tc>, window_params = [{transform_indices = @transform_0, window_bounds = array<i64: 1024, 128>}, {pipeline_mode = #tpu.pipeline_mode<synchronous>, transform_indices = @transform_1, window_bounds = array<i64: 128, 128>}, {pipeline_mode = #tpu.pipeline_mode<synchronous>, transform_indices = @transform_2, window_bounds = array<i64: 1, 128>}, {transform_indices = @transform_3, window_bounds = array<i64: 1024, 128>}]} {
    %c0 = arith.constant 0 : index
    %c0_0 = arith.constant 0 : index
    %0 = vector.load %arg1[%c0, %c0_0] : memref<1024x128xbf16, #tpu.memory_space<vmem>>, vector<1024x128xbf16>
    %c0_1 = arith.constant 0 : index
    %c0_2 = arith.constant 0 : index
    %1 = vector.load %arg2[%c0_1, %c0_2] : memref<128x128xbf16, #tpu.memory_space<vmem>>, vector<128x128xbf16>
    %cst = arith.constant dense<0.000000e+00> : vector<1024x128xf32>
    %2 = tpu.matmul %0, %1, %cst {dimension_numbers = #tpu.dot_dimension_numbers<[1], [0], [0], [1], [0, 0, 1, 1], [], []>} : vector<1024x128xbf16>, vector<128x128xbf16>, vector<1024x128xf32> -> vector<1024x128xf32>
    %c0_3 = arith.constant 0 : index
    %c0_4 = arith.constant 0 : index
    %3 = vector.load %arg3[%c0_3, %c0_4] : memref<1x128xf32, #tpu.memory_space<vmem>>, vector<1x128xf32>
    %4 = vector.broadcast %3 : vector<1x128xf32> to vector<1024x128xf32>
    %5 = arith.addf %2, %4 : vector<1024x128xf32>
    %cst_5 = arith.constant 0.000000e+00 : f32
    %6 = vector.broadcast %cst_5 : f32 to vector<1024x128xf32>
    %7 = arith.cmpf oge, %5, %6 : vector<1024x128xf32>
    %cst_6 = arith.constant 2.000000e-01 : f32
    %8 = vector.broadcast %cst_6 : f32 to vector<1024x128xf32>
    %9 = arith.mulf %8, %5 : vector<1024x128xf32>
    %10 = arith.select %7, %5, %9 : vector<1024x128xi1>, vector<1024x128xf32>
    %11 = arith.truncf %10 : vector<1024x128xf32> to vector<1024x128xbf16>
    %c0_7 = arith.constant 0 : index
    %c0_8 = arith.constant 0 : index
    %12 = vector.load %arg4[%c0_7, %c0_8] : memref<1024x128xbf16, #tpu.memory_space<vmem>>, vector<1024x128xbf16>
    tpu.vector_store %arg4[%c0_7, %c0_8], %11 {strides = array<i32>} : memref<1024x128xbf16, #tpu.memory_space<vmem>>, vector<1024x128xbf16>,
    return
  }
  func.func @transform_0(%arg0: i32) -> (i32, i32) {
    %c0_i32 = arith.constant 0 : i32
    %c0_i32_0 = arith.constant 0 : i32
    return %arg0, %c0_i32 : i32, i32
  }
  func.func @transform_1(%arg0: i32) -> (i32, i32) {
    %c0_i32 = arith.constant 0 : i32
    %c0_i32_0 = arith.constant 0 : i32
    %c0_i32_1 = arith.constant 0 : i32
    return %c0_i32, %c0_i32_0 : i32, i32
  }
  func.func @transform_2(%arg0: i32) -> (i32, i32) {
    %c0_i32 = arith.constant 0 : i32
    %c0_i32_0 = arith.constant 0 : i32
    %c0_i32_1 = arith.constant 0 : i32
    return %c0_i32, %c0_i32_0 : i32, i32
  }
  func.func @transform_3(%arg0: i32) -> (i32, i32) {
    %c0_i32 = arith.constant 0 : i32
    %c0_i32_0 = arith.constant 0 : i32
    return %arg0, %c0_i32 : i32, i32
  }
}

module attributes {stable_mosaic.version = 11 : i64} {
  func.func @_conv_bn_act_kernel(%arg0: i32, %arg1: memref<512x128xbf16, #tpu.memory_space<vmem>>, %arg2: memref<128x128xbf16, #tpu.memory_space<vmem>>, %arg3: memref<1x128xf32, #tpu.memory_space<vmem>>, %arg4: memref<1x128xf32, #tpu.memory_space<vmem>>, %arg5: memref<1x128xf32, #tpu.memory_space<vmem>>, %arg6: memref<512x128xbf16, #tpu.memory_space<vmem>>, %arg7: memref<512x128xf32, #tpu.memory_space<vmem>>, %arg8: memref<1x128xf32, #tpu.memory_space<vmem>>, %arg9: memref<1x128xf32, #tpu.memory_space<vmem>>) attributes {dimension_semantics = [#tpu.dimension_semantics<arbitrary>], iteration_bounds = array<i64: 1>, scalar_prefetch = 0 : i64, scratch_operands = 3 : i64, tpu.core_type = #tpu.core_type<tc>, window_params = [{transform_indices = @transform_0, window_bounds = array<i64: 512, 128>}, {pipeline_mode = #tpu.pipeline_mode<synchronous>, transform_indices = @transform_1, window_bounds = array<i64: 128, 128>}, {pipeline_mode = #tpu.pipeline_mode<synchronous>, transform_indices = @transform_2, window_bounds = array<i64: 1, 128>}, {pipeline_mode = #tpu.pipeline_mode<synchronous>, transform_indices = @transform_3, window_bounds = array<i64: 1, 128>}, {pipeline_mode = #tpu.pipeline_mode<synchronous>, transform_indices = @transform_4, window_bounds = array<i64: 1, 128>}, {pipeline_mode = #tpu.pipeline_mode<synchronous>, transform_indices = @transform_5, window_bounds = array<i64: 512, 128>}]} {
    %c0_i32 = arith.constant 0 : i32
    %0 = arith.cmpi eq, %arg0, %c0_i32 : i32
    %1 = arith.extui %0 : i1 to i32
    %c0_i32_0 = arith.constant 0 : i32
    %2 = arith.cmpi ne, %1, %c0_i32_0 : i32
    scf.if %2 {
      %cst_19 = arith.constant 0.000000e+00 : f32
      %27 = vector.broadcast %cst_19 : f32 to vector<1x128xf32>
      %c0_20 = arith.constant 0 : index
      %c0_21 = arith.constant 0 : index
      %28 = vector.load %arg8[%c0_20, %c0_21] : memref<1x128xf32, #tpu.memory_space<vmem>>, vector<1x128xf32>
      tpu.vector_store %arg8[%c0_20, %c0_21], %27 {strides = array<i32>} : memref<1x128xf32, #tpu.memory_space<vmem>>, vector<1x128xf32>,
      %cst_22 = arith.constant 0.000000e+00 : f32
      %29 = vector.broadcast %cst_22 : f32 to vector<1x128xf32>
      %c0_23 = arith.constant 0 : index
      %c0_24 = arith.constant 0 : index
      %30 = vector.load %arg9[%c0_23, %c0_24] : memref<1x128xf32, #tpu.memory_space<vmem>>, vector<1x128xf32>
      tpu.vector_store %arg9[%c0_23, %c0_24], %29 {strides = array<i32>} : memref<1x128xf32, #tpu.memory_space<vmem>>, vector<1x128xf32>,
    } else {
    }
    %c0 = arith.constant 0 : index
    %c0_1 = arith.constant 0 : index
    %3 = vector.load %arg1[%c0, %c0_1] : memref<512x128xbf16, #tpu.memory_space<vmem>>, vector<512x128xbf16>
    %c0_2 = arith.constant 0 : index
    %c0_3 = arith.constant 0 : index
    %4 = vector.load %arg2[%c0_2, %c0_3] : memref<128x128xbf16, #tpu.memory_space<vmem>>, vector<128x128xbf16>
    %cst = arith.constant dense<0.000000e+00> : vector<512x128xf32>
    %5 = tpu.matmul %3, %4, %cst {dimension_numbers = #tpu.dot_dimension_numbers<[1], [0], [0], [1], [0, 0, 1, 1], [], []>} : vector<512x128xbf16>, vector<128x128xbf16>, vector<512x128xf32> -> vector<512x128xf32>
    %c0_4 = arith.constant 0 : index
    %c0_5 = arith.constant 0 : index
    %6 = vector.load %arg3[%c0_4, %c0_5] : memref<1x128xf32, #tpu.memory_space<vmem>>, vector<1x128xf32>
    %7 = vector.broadcast %6 : vector<1x128xf32> to vector<512x128xf32>
    %8 = arith.addf %5, %7 : vector<512x128xf32>
    %c512_i32 = arith.constant 512 : i32
    %9 = arith.muli %arg0, %c512_i32 : i32
    %10 = tpu.assume_multiple %9, 512 : i32
    %11 = arith.index_cast %10 : i32 to index
    %c0_6 = arith.constant 0 : index
    %12 = vector.load %arg7[%11, %c0_6] : memref<512x128xf32, #tpu.memory_space<vmem>>, vector<512x128xf32>
    tpu.vector_store %arg7[%11, %c0_6], %8 {strides = array<i32>} : memref<512x128xf32, #tpu.memory_space<vmem>>, vector<512x128xf32>,
    %c0_7 = arith.constant 0 : index
    %c0_8 = arith.constant 0 : index
    %13 = vector.load %arg8[%c0_7, %c0_8] : memref<1x128xf32, #tpu.memory_space<vmem>>, vector<1x128xf32>
    %cst_9 = arith.constant dense<0.000000e+00> : vector<128xf32>
    %14 = vector.multi_reduction <add>, %8, %cst_9 [0] : vector<512x128xf32> to vector<128xf32>
    %15 = vector.shape_cast %14 : vector<128xf32> to vector<1x128xf32>
    %16 = arith.addf %13, %15 : vector<1x128xf32>
    %c0_10 = arith.constant 0 : index
    %c0_11 = arith.constant 0 : index
    %17 = vector.load %arg8[%c0_10, %c0_11] : memref<1x128xf32, #tpu.memory_space<vmem>>, vector<1x128xf32>
    tpu.vector_store %arg8[%c0_10, %c0_11], %16 {strides = array<i32>} : memref<1x128xf32, #tpu.memory_space<vmem>>, vector<1x128xf32>,
    %c0_12 = arith.constant 0 : index
    %c0_13 = arith.constant 0 : index
    %18 = vector.load %arg9[%c0_12, %c0_13] : memref<1x128xf32, #tpu.memory_space<vmem>>, vector<1x128xf32>
    %19 = arith.mulf %8, %8 : vector<512x128xf32>
    %cst_14 = arith.constant dense<0.000000e+00> : vector<128xf32>
    %20 = vector.multi_reduction <add>, %19, %cst_14 [0] : vector<512x128xf32> to vector<128xf32>
    %21 = vector.shape_cast %20 : vector<128xf32> to vector<1x128xf32>
    %22 = arith.addf %18, %21 : vector<1x128xf32>
    %c0_15 = arith.constant 0 : index
    %c0_16 = arith.constant 0 : index
    %23 = vector.load %arg9[%c0_15, %c0_16] : memref<1x128xf32, #tpu.memory_space<vmem>>, vector<1x128xf32>
    tpu.vector_store %arg9[%c0_15, %c0_16], %22 {strides = array<i32>} : memref<1x128xf32, #tpu.memory_space<vmem>>, vector<1x128xf32>,
    %c0_i32_17 = arith.constant 0 : i32
    %24 = arith.cmpi eq, %arg0, %c0_i32_17 : i32
    %25 = arith.extui %24 : i1 to i32
    %c0_i32_18 = arith.constant 0 : i32
    %26 = arith.cmpi ne, %25, %c0_i32_18 : i32
    scf.if %26 {
      %c0_19 = arith.constant 0 : index
      %c0_20 = arith.constant 0 : index
      %27 = vector.load %arg8[%c0_19, %c0_20] : memref<1x128xf32, #tpu.memory_space<vmem>>, vector<1x128xf32>
      %cst_21 = arith.constant 0.001953125 : f32
      %28 = vector.broadcast %cst_21 : f32 to vector<1x128xf32>
      %29 = arith.mulf %27, %28 : vector<1x128xf32>
      %c0_22 = arith.constant 0 : index
      %c0_23 = arith.constant 0 : index
      %30 = vector.load %arg9[%c0_22, %c0_23] : memref<1x128xf32, #tpu.memory_space<vmem>>, vector<1x128xf32>
      %cst_24 = arith.constant 0.001953125 : f32
      %31 = vector.broadcast %cst_24 : f32 to vector<1x128xf32>
      %32 = arith.mulf %30, %31 : vector<1x128xf32>
      %33 = arith.mulf %29, %29 : vector<1x128xf32>
      %34 = arith.subf %32, %33 : vector<1x128xf32>
      %cst_25 = arith.constant 0.000000e+00 : f32
      %35 = vector.broadcast %cst_25 : f32 to vector<1x128xf32>
      %36 = arith.maximumf %34, %35 : vector<1x128xf32>
      %c0_26 = arith.constant 0 : index
      %c0_27 = arith.constant 0 : index
      %37 = vector.load %arg4[%c0_26, %c0_27] : memref<1x128xf32, #tpu.memory_space<vmem>>, vector<1x128xf32>
      %cst_28 = arith.constant 9.99999974E-6 : f32
      %38 = vector.broadcast %cst_28 : f32 to vector<1x128xf32>
      %39 = arith.addf %36, %38 : vector<1x128xf32>
      %40 = math.rsqrt %39 : vector<1x128xf32>
      %41 = arith.mulf %37, %40 : vector<1x128xf32>
      %c0_29 = arith.constant 0 : index
      %c0_30 = arith.constant 0 : index
      %42 = vector.load %arg5[%c0_29, %c0_30] : memref<1x128xf32, #tpu.memory_space<vmem>>, vector<1x128xf32>
      %43 = arith.mulf %29, %41 : vector<1x128xf32>
      %44 = arith.subf %42, %43 : vector<1x128xf32>
      %c0_31 = arith.constant 0 : index
      %c0_32 = arith.constant 0 : index
      %45 = vector.load %arg7[%c0_31, %c0_32] : memref<512x128xf32, #tpu.memory_space<vmem>>, vector<512x128xf32>
      %46 = vector.broadcast %41 : vector<1x128xf32> to vector<512x128xf32>
      %47 = arith.mulf %45, %46 : vector<512x128xf32>
      %48 = vector.broadcast %44 : vector<1x128xf32> to vector<512x128xf32>
      %49 = arith.addf %47, %48 : vector<512x128xf32>
      %cst_33 = arith.constant 0.000000e+00 : f32
      %50 = vector.broadcast %cst_33 : f32 to vector<512x128xf32>
      %51 = arith.cmpf oge, %49, %50 : vector<512x128xf32>
      %cst_34 = arith.constant 2.000000e-01 : f32
      %52 = vector.broadcast %cst_34 : f32 to vector<512x128xf32>
      %53 = arith.mulf %52, %49 : vector<512x128xf32>
      %54 = arith.select %51, %49, %53 : vector<512x128xi1>, vector<512x128xf32>
      %55 = arith.truncf %54 : vector<512x128xf32> to vector<512x128xbf16>
      %c0_35 = arith.constant 0 : index
      %c0_36 = arith.constant 0 : index
      %56 = vector.load %arg6[%c0_35, %c0_36] : memref<512x128xbf16, #tpu.memory_space<vmem>>, vector<512x128xbf16>
      tpu.vector_store %arg6[%c0_35, %c0_36], %55 {strides = array<i32>} : memref<512x128xbf16, #tpu.memory_space<vmem>>, vector<512x128xbf16>,
    } else {
    }
    return
  }
  func.func @transform_0(%arg0: i32) -> (i32, i32) {
    %c0_i32 = arith.constant 0 : i32
    %c0_i32_0 = arith.constant 0 : i32
    return %arg0, %c0_i32 : i32, i32
  }
  func.func @transform_1(%arg0: i32) -> (i32, i32) {
    %c0_i32 = arith.constant 0 : i32
    %c0_i32_0 = arith.constant 0 : i32
    %c0_i32_1 = arith.constant 0 : i32
    return %c0_i32, %c0_i32_0 : i32, i32
  }
  func.func @transform_2(%arg0: i32) -> (i32, i32) {
    %c0_i32 = arith.constant 0 : i32
    %c0_i32_0 = arith.constant 0 : i32
    %c0_i32_1 = arith.constant 0 : i32
    return %c0_i32, %c0_i32_0 : i32, i32
  }
  func.func @transform_3(%arg0: i32) -> (i32, i32) {
    %c0_i32 = arith.constant 0 : i32
    %c0_i32_0 = arith.constant 0 : i32
    %c0_i32_1 = arith.constant 0 : i32
    return %c0_i32, %c0_i32_0 : i32, i32
  }
  func.func @transform_4(%arg0: i32) -> (i32, i32) {
    %c0_i32 = arith.constant 0 : i32
    %c0_i32_0 = arith.constant 0 : i32
    %c0_i32_1 = arith.constant 0 : i32
    return %c0_i32, %c0_i32_0 : i32, i32
  }
  func.func @transform_5(%arg0: i32) -> (i32, i32) {
    %c0_i32 = arith.constant 0 : i32
    %c0_i32_0 = arith.constant 0 : i32
    %c0_i32_1 = arith.constant 0 : i32
    return %c0_i32, %c0_i32_0 : i32, i32
  }
}

module attributes {stable_mosaic.version = 11 : i64} {
  func.func @_conv_bn_act_kernel(%arg0: i32, %arg1: memref<128x256xbf16, #tpu.memory_space<vmem>>, %arg2: memref<256x128xbf16, #tpu.memory_space<vmem>>, %arg3: memref<1x128xf32, #tpu.memory_space<vmem>>, %arg4: memref<1x128xf32, #tpu.memory_space<vmem>>, %arg5: memref<1x128xf32, #tpu.memory_space<vmem>>, %arg6: memref<128x128xbf16, #tpu.memory_space<vmem>>, %arg7: memref<128x128xf32, #tpu.memory_space<vmem>>, %arg8: memref<1x128xf32, #tpu.memory_space<vmem>>, %arg9: memref<1x128xf32, #tpu.memory_space<vmem>>) attributes {dimension_semantics = [#tpu.dimension_semantics<arbitrary>], iteration_bounds = array<i64: 1>, scalar_prefetch = 0 : i64, scratch_operands = 3 : i64, tpu.core_type = #tpu.core_type<tc>, window_params = [{transform_indices = @transform_0, window_bounds = array<i64: 128, 256>}, {pipeline_mode = #tpu.pipeline_mode<synchronous>, transform_indices = @transform_1, window_bounds = array<i64: 256, 128>}, {pipeline_mode = #tpu.pipeline_mode<synchronous>, transform_indices = @transform_2, window_bounds = array<i64: 1, 128>}, {pipeline_mode = #tpu.pipeline_mode<synchronous>, transform_indices = @transform_3, window_bounds = array<i64: 1, 128>}, {pipeline_mode = #tpu.pipeline_mode<synchronous>, transform_indices = @transform_4, window_bounds = array<i64: 1, 128>}, {pipeline_mode = #tpu.pipeline_mode<synchronous>, transform_indices = @transform_5, window_bounds = array<i64: 128, 128>}]} {
    %c0_i32 = arith.constant 0 : i32
    %0 = arith.cmpi eq, %arg0, %c0_i32 : i32
    %1 = arith.extui %0 : i1 to i32
    %c0_i32_0 = arith.constant 0 : i32
    %2 = arith.cmpi ne, %1, %c0_i32_0 : i32
    scf.if %2 {
      %cst_19 = arith.constant 0.000000e+00 : f32
      %27 = vector.broadcast %cst_19 : f32 to vector<1x128xf32>
      %c0_20 = arith.constant 0 : index
      %c0_21 = arith.constant 0 : index
      %28 = vector.load %arg8[%c0_20, %c0_21] : memref<1x128xf32, #tpu.memory_space<vmem>>, vector<1x128xf32>
      tpu.vector_store %arg8[%c0_20, %c0_21], %27 {strides = array<i32>} : memref<1x128xf32, #tpu.memory_space<vmem>>, vector<1x128xf32>,
      %cst_22 = arith.constant 0.000000e+00 : f32
      %29 = vector.broadcast %cst_22 : f32 to vector<1x128xf32>
      %c0_23 = arith.constant 0 : index
      %c0_24 = arith.constant 0 : index
      %30 = vector.load %arg9[%c0_23, %c0_24] : memref<1x128xf32, #tpu.memory_space<vmem>>, vector<1x128xf32>
      tpu.vector_store %arg9[%c0_23, %c0_24], %29 {strides = array<i32>} : memref<1x128xf32, #tpu.memory_space<vmem>>, vector<1x128xf32>,
    } else {
    }
    %c0 = arith.constant 0 : index
    %c0_1 = arith.constant 0 : index
    %3 = vector.load %arg1[%c0, %c0_1] : memref<128x256xbf16, #tpu.memory_space<vmem>>, vector<128x256xbf16>
    %c0_2 = arith.constant 0 : index
    %c0_3 = arith.constant 0 : index
    %4 = vector.load %arg2[%c0_2, %c0_3] : memref<256x128xbf16, #tpu.memory_space<vmem>>, vector<256x128xbf16>
    %cst = arith.constant dense<0.000000e+00> : vector<128x128xf32>
    %5 = tpu.matmul %3, %4, %cst {dimension_numbers = #tpu.dot_dimension_numbers<[1], [0], [0], [1], [0, 0, 1, 1], [], []>} : vector<128x256xbf16>, vector<256x128xbf16>, vector<128x128xf32> -> vector<128x128xf32>
    %c0_4 = arith.constant 0 : index
    %c0_5 = arith.constant 0 : index
    %6 = vector.load %arg3[%c0_4, %c0_5] : memref<1x128xf32, #tpu.memory_space<vmem>>, vector<1x128xf32>
    %7 = vector.broadcast %6 : vector<1x128xf32> to vector<128x128xf32>
    %8 = arith.addf %5, %7 : vector<128x128xf32>
    %c128_i32 = arith.constant 128 : i32
    %9 = arith.muli %arg0, %c128_i32 : i32
    %10 = tpu.assume_multiple %9, 128 : i32
    %11 = arith.index_cast %10 : i32 to index
    %c0_6 = arith.constant 0 : index
    %12 = vector.load %arg7[%11, %c0_6] : memref<128x128xf32, #tpu.memory_space<vmem>>, vector<128x128xf32>
    tpu.vector_store %arg7[%11, %c0_6], %8 {strides = array<i32>} : memref<128x128xf32, #tpu.memory_space<vmem>>, vector<128x128xf32>,
    %c0_7 = arith.constant 0 : index
    %c0_8 = arith.constant 0 : index
    %13 = vector.load %arg8[%c0_7, %c0_8] : memref<1x128xf32, #tpu.memory_space<vmem>>, vector<1x128xf32>
    %cst_9 = arith.constant dense<0.000000e+00> : vector<128xf32>
    %14 = vector.multi_reduction <add>, %8, %cst_9 [0] : vector<128x128xf32> to vector<128xf32>
    %15 = vector.shape_cast %14 : vector<128xf32> to vector<1x128xf32>
    %16 = arith.addf %13, %15 : vector<1x128xf32>
    %c0_10 = arith.constant 0 : index
    %c0_11 = arith.constant 0 : index
    %17 = vector.load %arg8[%c0_10, %c0_11] : memref<1x128xf32, #tpu.memory_space<vmem>>, vector<1x128xf32>
    tpu.vector_store %arg8[%c0_10, %c0_11], %16 {strides = array<i32>} : memref<1x128xf32, #tpu.memory_space<vmem>>, vector<1x128xf32>,
    %c0_12 = arith.constant 0 : index
    %c0_13 = arith.constant 0 : index
    %18 = vector.load %arg9[%c0_12, %c0_13] : memref<1x128xf32, #tpu.memory_space<vmem>>, vector<1x128xf32>
    %19 = arith.mulf %8, %8 : vector<128x128xf32>
    %cst_14 = arith.constant dense<0.000000e+00> : vector<128xf32>
    %20 = vector.multi_reduction <add>, %19, %cst_14 [0] : vector<128x128xf32> to vector<128xf32>
    %21 = vector.shape_cast %20 : vector<128xf32> to vector<1x128xf32>
    %22 = arith.addf %18, %21 : vector<1x128xf32>
    %c0_15 = arith.constant 0 : index
    %c0_16 = arith.constant 0 : index
    %23 = vector.load %arg9[%c0_15, %c0_16] : memref<1x128xf32, #tpu.memory_space<vmem>>, vector<1x128xf32>
    tpu.vector_store %arg9[%c0_15, %c0_16], %22 {strides = array<i32>} : memref<1x128xf32, #tpu.memory_space<vmem>>, vector<1x128xf32>,
    %c0_i32_17 = arith.constant 0 : i32
    %24 = arith.cmpi eq, %arg0, %c0_i32_17 : i32
    %25 = arith.extui %24 : i1 to i32
    %c0_i32_18 = arith.constant 0 : i32
    %26 = arith.cmpi ne, %25, %c0_i32_18 : i32
    scf.if %26 {
      %c0_19 = arith.constant 0 : index
      %c0_20 = arith.constant 0 : index
      %27 = vector.load %arg8[%c0_19, %c0_20] : memref<1x128xf32, #tpu.memory_space<vmem>>, vector<1x128xf32>
      %cst_21 = arith.constant 7.812500e-03 : f32
      %28 = vector.broadcast %cst_21 : f32 to vector<1x128xf32>
      %29 = arith.mulf %27, %28 : vector<1x128xf32>
      %c0_22 = arith.constant 0 : index
      %c0_23 = arith.constant 0 : index
      %30 = vector.load %arg9[%c0_22, %c0_23] : memref<1x128xf32, #tpu.memory_space<vmem>>, vector<1x128xf32>
      %cst_24 = arith.constant 7.812500e-03 : f32
      %31 = vector.broadcast %cst_24 : f32 to vector<1x128xf32>
      %32 = arith.mulf %30, %31 : vector<1x128xf32>
      %33 = arith.mulf %29, %29 : vector<1x128xf32>
      %34 = arith.subf %32, %33 : vector<1x128xf32>
      %cst_25 = arith.constant 0.000000e+00 : f32
      %35 = vector.broadcast %cst_25 : f32 to vector<1x128xf32>
      %36 = arith.maximumf %34, %35 : vector<1x128xf32>
      %c0_26 = arith.constant 0 : index
      %c0_27 = arith.constant 0 : index
      %37 = vector.load %arg4[%c0_26, %c0_27] : memref<1x128xf32, #tpu.memory_space<vmem>>, vector<1x128xf32>
      %cst_28 = arith.constant 9.99999974E-6 : f32
      %38 = vector.broadcast %cst_28 : f32 to vector<1x128xf32>
      %39 = arith.addf %36, %38 : vector<1x128xf32>
      %40 = math.rsqrt %39 : vector<1x128xf32>
      %41 = arith.mulf %37, %40 : vector<1x128xf32>
      %c0_29 = arith.constant 0 : index
      %c0_30 = arith.constant 0 : index
      %42 = vector.load %arg5[%c0_29, %c0_30] : memref<1x128xf32, #tpu.memory_space<vmem>>, vector<1x128xf32>
      %43 = arith.mulf %29, %41 : vector<1x128xf32>
      %44 = arith.subf %42, %43 : vector<1x128xf32>
      %c0_31 = arith.constant 0 : index
      %c0_32 = arith.constant 0 : index
      %45 = vector.load %arg7[%c0_31, %c0_32] : memref<128x128xf32, #tpu.memory_space<vmem>>, vector<128x128xf32>
      %46 = vector.broadcast %41 : vector<1x128xf32> to vector<128x128xf32>
      %47 = arith.mulf %45, %46 : vector<128x128xf32>
      %48 = vector.broadcast %44 : vector<1x128xf32> to vector<128x128xf32>
      %49 = arith.addf %47, %48 : vector<128x128xf32>
      %cst_33 = arith.constant 0.000000e+00 : f32
      %50 = vector.broadcast %cst_33 : f32 to vector<128x128xf32>
      %51 = arith.cmpf oge, %49, %50 : vector<128x128xf32>
      %cst_34 = arith.constant 2.000000e-01 : f32
      %52 = vector.broadcast %cst_34 : f32 to vector<128x128xf32>
      %53 = arith.mulf %52, %49 : vector<128x128xf32>
      %54 = arith.select %51, %49, %53 : vector<128x128xi1>, vector<128x128xf32>
      %55 = arith.truncf %54 : vector<128x128xf32> to vector<128x128xbf16>
      %c0_35 = arith.constant 0 : index
      %c0_36 = arith.constant 0 : index
      %56 = vector.load %arg6[%c0_35, %c0_36] : memref<128x128xbf16, #tpu.memory_space<vmem>>, vector<128x128xbf16>
      tpu.vector_store %arg6[%c0_35, %c0_36], %55 {strides = array<i32>} : memref<128x128xbf16, #tpu.memory_space<vmem>>, vector<128x128xbf16>,
    } else {
    }
    return
  }
  func.func @transform_0(%arg0: i32) -> (i32, i32) {
    %c0_i32 = arith.constant 0 : i32
    %c0_i32_0 = arith.constant 0 : i32
    return %arg0, %c0_i32 : i32, i32
  }
  func.func @transform_1(%arg0: i32) -> (i32, i32) {
    %c0_i32 = arith.constant 0 : i32
    %c0_i32_0 = arith.constant 0 : i32
    %c0_i32_1 = arith.constant 0 : i32
    return %c0_i32, %c0_i32_0 : i32, i32
  }
  func.func @transform_2(%arg0: i32) -> (i32, i32) {
    %c0_i32 = arith.constant 0 : i32
    %c0_i32_0 = arith.constant 0 : i32
    %c0_i32_1 = arith.constant 0 : i32
    return %c0_i32, %c0_i32_0 : i32, i32
  }
  func.func @transform_3(%arg0: i32) -> (i32, i32) {
    %c0_i32 = arith.constant 0 : i32
    %c0_i32_0 = arith.constant 0 : i32
    %c0_i32_1 = arith.constant 0 : i32
    return %c0_i32, %c0_i32_0 : i32, i32
  }
  func.func @transform_4(%arg0: i32) -> (i32, i32) {
    %c0_i32 = arith.constant 0 : i32
    %c0_i32_0 = arith.constant 0 : i32
    %c0_i32_1 = arith.constant 0 : i32
    return %c0_i32, %c0_i32_0 : i32, i32
  }
  func.func @transform_5(%arg0: i32) -> (i32, i32) {
    %c0_i32 = arith.constant 0 : i32
    %c0_i32_0 = arith.constant 0 : i32
    %c0_i32_1 = arith.constant 0 : i32
    return %c0_i32, %c0_i32_0 : i32, i32
  }
}

module attributes {stable_mosaic.version = 11 : i64} {
  func.func @_conv4_bn_heads_kernel(%arg0: i32, %arg1: memref<32x512xbf16, #tpu.memory_space<vmem>>, %arg2: memref<512x128xbf16, #tpu.memory_space<vmem>>, %arg3: memref<1x128xf32, #tpu.memory_space<vmem>>, %arg4: memref<1x128xf32, #tpu.memory_space<vmem>>, %arg5: memref<1x128xf32, #tpu.memory_space<vmem>>, %arg6: memref<16x128x128xbf16, #tpu.memory_space<vmem>>, %arg7: memref<1x128xf32, #tpu.memory_space<vmem>>, %arg8: memref<2x128xf32, #tpu.memory_space<vmem>>) attributes {dimension_semantics = [#tpu.dimension_semantics<arbitrary>], iteration_bounds = array<i64: 1>, scalar_prefetch = 0 : i64, scratch_operands = 0 : i64, tpu.core_type = #tpu.core_type<tc>, window_params = [{pipeline_mode = #tpu.pipeline_mode<synchronous>, transform_indices = @transform_0, window_bounds = array<i64: 32, 512>}, {pipeline_mode = #tpu.pipeline_mode<synchronous>, transform_indices = @transform_1, window_bounds = array<i64: 512, 128>}, {pipeline_mode = #tpu.pipeline_mode<synchronous>, transform_indices = @transform_2, window_bounds = array<i64: 1, 128>}, {pipeline_mode = #tpu.pipeline_mode<synchronous>, transform_indices = @transform_3, window_bounds = array<i64: 1, 128>}, {pipeline_mode = #tpu.pipeline_mode<synchronous>, transform_indices = @transform_4, window_bounds = array<i64: 1, 128>}, {pipeline_mode = #tpu.pipeline_mode<synchronous>, transform_indices = @transform_5, window_bounds = array<i64: 16, 128, 128>}, {pipeline_mode = #tpu.pipeline_mode<synchronous>, transform_indices = @transform_6, window_bounds = array<i64: 1, 128>}, {pipeline_mode = #tpu.pipeline_mode<synchronous>, transform_indices = @transform_7, window_bounds = array<i64: 2, 128>}]} {
    %c0 = arith.constant 0 : index
    %c0_0 = arith.constant 0 : index
    %0 = vector.load %arg1[%c0, %c0_0] : memref<32x512xbf16, #tpu.memory_space<vmem>>, vector<32x512xbf16>
    %c0_1 = arith.constant 0 : index
    %c0_2 = arith.constant 0 : index
    %1 = vector.load %arg2[%c0_1, %c0_2] : memref<512x128xbf16, #tpu.memory_space<vmem>>, vector<512x128xbf16>
    %cst = arith.constant dense<0.000000e+00> : vector<32x128xf32>
    %2 = tpu.matmul %0, %1, %cst {dimension_numbers = #tpu.dot_dimension_numbers<[1], [0], [0], [1], [0, 0, 1, 1], [], []>} : vector<32x512xbf16>, vector<512x128xbf16>, vector<32x128xf32> -> vector<32x128xf32>
    %c0_3 = arith.constant 0 : index
    %c0_4 = arith.constant 0 : index
    %3 = vector.load %arg3[%c0_3, %c0_4] : memref<1x128xf32, #tpu.memory_space<vmem>>, vector<1x128xf32>
    %4 = vector.broadcast %3 : vector<1x128xf32> to vector<32x128xf32>
    %5 = arith.addf %2, %4 : vector<32x128xf32>
    %cst_5 = arith.constant dense<0.000000e+00> : vector<128xf32>
    %6 = vector.multi_reduction <add>, %5, %cst_5 [0] : vector<32x128xf32> to vector<128xf32>
    %7 = vector.shape_cast %6 : vector<128xf32> to vector<1x128xf32>
    %cst_6 = arith.constant 3.125000e-02 : f32
    %8 = vector.broadcast %cst_6 : f32 to vector<1x128xf32>
    %9 = arith.mulf %7, %8 : vector<1x128xf32>
    %10 = arith.mulf %5, %5 : vector<32x128xf32>
    %cst_7 = arith.constant dense<0.000000e+00> : vector<128xf32>
    %11 = vector.multi_reduction <add>, %10, %cst_7 [0] : vector<32x128xf32> to vector<128xf32>
    %12 = vector.shape_cast %11 : vector<128xf32> to vector<1x128xf32>
    %cst_8 = arith.constant 3.125000e-02 : f32
    %13 = vector.broadcast %cst_8 : f32 to vector<1x128xf32>
    %14 = arith.mulf %12, %13 : vector<1x128xf32>
    %15 = arith.mulf %9, %9 : vector<1x128xf32>
    %16 = arith.subf %14, %15 : vector<1x128xf32>
    %cst_9 = arith.constant 0.000000e+00 : f32
    %17 = vector.broadcast %cst_9 : f32 to vector<1x128xf32>
    %18 = arith.maximumf %16, %17 : vector<1x128xf32>
    %c0_10 = arith.constant 0 : index
    %c0_11 = arith.constant 0 : index
    %19 = vector.load %arg4[%c0_10, %c0_11] : memref<1x128xf32, #tpu.memory_space<vmem>>, vector<1x128xf32>
    %cst_12 = arith.constant 9.99999974E-6 : f32
    %20 = vector.broadcast %cst_12 : f32 to vector<1x128xf32>
    %21 = arith.addf %18, %20 : vector<1x128xf32>
    %22 = math.rsqrt %21 : vector<1x128xf32>
    %23 = arith.mulf %19, %22 : vector<1x128xf32>
    %c0_13 = arith.constant 0 : index
    %c0_14 = arith.constant 0 : index
    %24 = vector.load %arg5[%c0_13, %c0_14] : memref<1x128xf32, #tpu.memory_space<vmem>>, vector<1x128xf32>
    %25 = arith.mulf %9, %23 : vector<1x128xf32>
    %26 = arith.subf %24, %25 : vector<1x128xf32>
    %27 = vector.broadcast %23 : vector<1x128xf32> to vector<32x128xf32>
    %28 = arith.mulf %5, %27 : vector<32x128xf32>
    %29 = vector.broadcast %26 : vector<1x128xf32> to vector<32x128xf32>
    %30 = arith.addf %28, %29 : vector<32x128xf32>
    %cst_15 = arith.constant 0.000000e+00 : f32
    %31 = vector.broadcast %cst_15 : f32 to vector<32x128xf32>
    %32 = arith.cmpf oge, %30, %31 : vector<32x128xf32>
    %cst_16 = arith.constant 0.00999999977 : f32
    %33 = vector.broadcast %cst_16 : f32 to vector<32x128xf32>
    %34 = arith.mulf %33, %30 : vector<32x128xf32>
    %35 = arith.select %32, %30, %34 : vector<32x128xi1>, vector<32x128xf32>
    %cst_17 = arith.constant 0.000000e+00 : f32
    %36 = vector.broadcast %cst_17 : f32 to vector<2x128xf32>
    %37 = vector.extract_strided_slice %35 {offsets = [0, 0], sizes = [2, 128], strides = [1, 1]} : vector<32x128xf32> to vector<2x128xf32>
    %38 = arith.truncf %37 : vector<2x128xf32> to vector<2x128xbf16>
    %c0_18 = arith.constant 0 : index
    %c0_19 = arith.constant 0 : index
    %c0_20 = arith.constant 0 : index
    %39 = vector.load %arg6[%c0_18, %c0_19, %c0_20] : memref<16x128x128xbf16, #tpu.memory_space<vmem>>, vector<1x128x128xbf16>
    %40 = vector.shape_cast %39 : vector<1x128x128xbf16> to vector<128x128xbf16>
    %cst_21 = arith.constant dense<0.000000e+00> : vector<2x128xf32>
    %41 = tpu.matmul %38, %40, %cst_21 {dimension_numbers = #tpu.dot_dimension_numbers<[1], [0], [0], [1], [0, 0, 1, 1], [], []>} : vector<2x128xbf16>, vector<128x128xbf16>, vector<2x128xf32> -> vector<2x128xf32>
    %42 = arith.addf %36, %41 : vector<2x128xf32>
    %43 = vector.extract_strided_slice %35 {offsets = [2, 0], sizes = [2, 128], strides = [1, 1]} : vector<32x128xf32> to vector<2x128xf32>
    %44 = arith.truncf %43 : vector<2x128xf32> to vector<2x128xbf16>
    %c1 = arith.constant 1 : index
    %c0_22 = arith.constant 0 : index
    %c0_23 = arith.constant 0 : index
    %45 = vector.load %arg6[%c1, %c0_22, %c0_23] : memref<16x128x128xbf16, #tpu.memory_space<vmem>>, vector<1x128x128xbf16>
    %46 = vector.shape_cast %45 : vector<1x128x128xbf16> to vector<128x128xbf16>
    %cst_24 = arith.constant dense<0.000000e+00> : vector<2x128xf32>
    %47 = tpu.matmul %44, %46, %cst_24 {dimension_numbers = #tpu.dot_dimension_numbers<[1], [0], [0], [1], [0, 0, 1, 1], [], []>} : vector<2x128xbf16>, vector<128x128xbf16>, vector<2x128xf32> -> vector<2x128xf32>
    %48 = arith.addf %42, %47 : vector<2x128xf32>
    %49 = vector.extract_strided_slice %35 {offsets = [4, 0], sizes = [2, 128], strides = [1, 1]} : vector<32x128xf32> to vector<2x128xf32>
    %50 = arith.truncf %49 : vector<2x128xf32> to vector<2x128xbf16>
    %c2 = arith.constant 2 : index
    %c0_25 = arith.constant 0 : index
    %c0_26 = arith.constant 0 : index
    %51 = vector.load %arg6[%c2, %c0_25, %c0_26] : memref<16x128x128xbf16, #tpu.memory_space<vmem>>, vector<1x128x128xbf16>
    %52 = vector.shape_cast %51 : vector<1x128x128xbf16> to vector<128x128xbf16>
    %cst_27 = arith.constant dense<0.000000e+00> : vector<2x128xf32>
    %53 = tpu.matmul %50, %52, %cst_27 {dimension_numbers = #tpu.dot_dimension_numbers<[1], [0], [0], [1], [0, 0, 1, 1], [], []>} : vector<2x128xbf16>, vector<128x128xbf16>, vector<2x128xf32> -> vector<2x128xf32>
    %54 = arith.addf %48, %53 : vector<2x128xf32>
    %55 = vector.extract_strided_slice %35 {offsets = [6, 0], sizes = [2, 128], strides = [1, 1]} : vector<32x128xf32> to vector<2x128xf32>
    %56 = arith.truncf %55 : vector<2x128xf32> to vector<2x128xbf16>
    %c3 = arith.constant 3 : index
    %c0_28 = arith.constant 0 : index
    %c0_29 = arith.constant 0 : index
    %57 = vector.load %arg6[%c3, %c0_28, %c0_29] : memref<16x128x128xbf16, #tpu.memory_space<vmem>>, vector<1x128x128xbf16>
    %58 = vector.shape_cast %57 : vector<1x128x128xbf16> to vector<128x128xbf16>
    %cst_30 = arith.constant dense<0.000000e+00> : vector<2x128xf32>
    %59 = tpu.matmul %56, %58, %cst_30 {dimension_numbers = #tpu.dot_dimension_numbers<[1], [0], [0], [1], [0, 0, 1, 1], [], []>} : vector<2x128xbf16>, vector<128x128xbf16>, vector<2x128xf32> -> vector<2x128xf32>
    %60 = arith.addf %54, %59 : vector<2x128xf32>
    %61 = vector.extract_strided_slice %35 {offsets = [8, 0], sizes = [2, 128], strides = [1, 1]} : vector<32x128xf32> to vector<2x128xf32>
    %62 = arith.truncf %61 : vector<2x128xf32> to vector<2x128xbf16>
    %c4 = arith.constant 4 : index
    %c0_31 = arith.constant 0 : index
    %c0_32 = arith.constant 0 : index
    %63 = vector.load %arg6[%c4, %c0_31, %c0_32] : memref<16x128x128xbf16, #tpu.memory_space<vmem>>, vector<1x128x128xbf16>
    %64 = vector.shape_cast %63 : vector<1x128x128xbf16> to vector<128x128xbf16>
    %cst_33 = arith.constant dense<0.000000e+00> : vector<2x128xf32>
    %65 = tpu.matmul %62, %64, %cst_33 {dimension_numbers = #tpu.dot_dimension_numbers<[1], [0], [0], [1], [0, 0, 1, 1], [], []>} : vector<2x128xbf16>, vector<128x128xbf16>, vector<2x128xf32> -> vector<2x128xf32>
    %66 = arith.addf %60, %65 : vector<2x128xf32>
    %67 = vector.extract_strided_slice %35 {offsets = [10, 0], sizes = [2, 128], strides = [1, 1]} : vector<32x128xf32> to vector<2x128xf32>
    %68 = arith.truncf %67 : vector<2x128xf32> to vector<2x128xbf16>
    %c5 = arith.constant 5 : index
    %c0_34 = arith.constant 0 : index
    %c0_35 = arith.constant 0 : index
    %69 = vector.load %arg6[%c5, %c0_34, %c0_35] : memref<16x128x128xbf16, #tpu.memory_space<vmem>>, vector<1x128x128xbf16>
    %70 = vector.shape_cast %69 : vector<1x128x128xbf16> to vector<128x128xbf16>
    %cst_36 = arith.constant dense<0.000000e+00> : vector<2x128xf32>
    %71 = tpu.matmul %68, %70, %cst_36 {dimension_numbers = #tpu.dot_dimension_numbers<[1], [0], [0], [1], [0, 0, 1, 1], [], []>} : vector<2x128xbf16>, vector<128x128xbf16>, vector<2x128xf32> -> vector<2x128xf32>
    %72 = arith.addf %66, %71 : vector<2x128xf32>
    %73 = vector.extract_strided_slice %35 {offsets = [12, 0], sizes = [2, 128], strides = [1, 1]} : vector<32x128xf32> to vector<2x128xf32>
    %74 = arith.truncf %73 : vector<2x128xf32> to vector<2x128xbf16>
    %c6 = arith.constant 6 : index
    %c0_37 = arith.constant 0 : index
    %c0_38 = arith.constant 0 : index
    %75 = vector.load %arg6[%c6, %c0_37, %c0_38] : memref<16x128x128xbf16, #tpu.memory_space<vmem>>, vector<1x128x128xbf16>
    %76 = vector.shape_cast %75 : vector<1x128x128xbf16> to vector<128x128xbf16>
    %cst_39 = arith.constant dense<0.000000e+00> : vector<2x128xf32>
    %77 = tpu.matmul %74, %76, %cst_39 {dimension_numbers = #tpu.dot_dimension_numbers<[1], [0], [0], [1], [0, 0, 1, 1], [], []>} : vector<2x128xbf16>, vector<128x128xbf16>, vector<2x128xf32> -> vector<2x128xf32>
    %78 = arith.addf %72, %77 : vector<2x128xf32>
    %79 = vector.extract_strided_slice %35 {offsets = [14, 0], sizes = [2, 128], strides = [1, 1]} : vector<32x128xf32> to vector<2x128xf32>
    %80 = arith.truncf %79 : vector<2x128xf32> to vector<2x128xbf16>
    %c7 = arith.constant 7 : index
    %c0_40 = arith.constant 0 : index
    %c0_41 = arith.constant 0 : index
    %81 = vector.load %arg6[%c7, %c0_40, %c0_41] : memref<16x128x128xbf16, #tpu.memory_space<vmem>>, vector<1x128x128xbf16>
    %82 = vector.shape_cast %81 : vector<1x128x128xbf16> to vector<128x128xbf16>
    %cst_42 = arith.constant dense<0.000000e+00> : vector<2x128xf32>
    %83 = tpu.matmul %80, %82, %cst_42 {dimension_numbers = #tpu.dot_dimension_numbers<[1], [0], [0], [1], [0, 0, 1, 1], [], []>} : vector<2x128xbf16>, vector<128x128xbf16>, vector<2x128xf32> -> vector<2x128xf32>
    %84 = arith.addf %78, %83 : vector<2x128xf32>
    %85 = vector.extract_strided_slice %35 {offsets = [16, 0], sizes = [2, 128], strides = [1, 1]} : vector<32x128xf32> to vector<2x128xf32>
    %86 = arith.truncf %85 : vector<2x128xf32> to vector<2x128xbf16>
    %c8 = arith.constant 8 : index
    %c0_43 = arith.constant 0 : index
    %c0_44 = arith.constant 0 : index
    %87 = vector.load %arg6[%c8, %c0_43, %c0_44] : memref<16x128x128xbf16, #tpu.memory_space<vmem>>, vector<1x128x128xbf16>
    %88 = vector.shape_cast %87 : vector<1x128x128xbf16> to vector<128x128xbf16>
    %cst_45 = arith.constant dense<0.000000e+00> : vector<2x128xf32>
    %89 = tpu.matmul %86, %88, %cst_45 {dimension_numbers = #tpu.dot_dimension_numbers<[1], [0], [0], [1], [0, 0, 1, 1], [], []>} : vector<2x128xbf16>, vector<128x128xbf16>, vector<2x128xf32> -> vector<2x128xf32>
    %90 = arith.addf %84, %89 : vector<2x128xf32>
    %91 = vector.extract_strided_slice %35 {offsets = [18, 0], sizes = [2, 128], strides = [1, 1]} : vector<32x128xf32> to vector<2x128xf32>
    %92 = arith.truncf %91 : vector<2x128xf32> to vector<2x128xbf16>
    %c9 = arith.constant 9 : index
    %c0_46 = arith.constant 0 : index
    %c0_47 = arith.constant 0 : index
    %93 = vector.load %arg6[%c9, %c0_46, %c0_47] : memref<16x128x128xbf16, #tpu.memory_space<vmem>>, vector<1x128x128xbf16>
    %94 = vector.shape_cast %93 : vector<1x128x128xbf16> to vector<128x128xbf16>
    %cst_48 = arith.constant dense<0.000000e+00> : vector<2x128xf32>
    %95 = tpu.matmul %92, %94, %cst_48 {dimension_numbers = #tpu.dot_dimension_numbers<[1], [0], [0], [1], [0, 0, 1, 1], [], []>} : vector<2x128xbf16>, vector<128x128xbf16>, vector<2x128xf32> -> vector<2x128xf32>
    %96 = arith.addf %90, %95 : vector<2x128xf32>
    %97 = vector.extract_strided_slice %35 {offsets = [20, 0], sizes = [2, 128], strides = [1, 1]} : vector<32x128xf32> to vector<2x128xf32>
    %98 = arith.truncf %97 : vector<2x128xf32> to vector<2x128xbf16>
    %c10 = arith.constant 10 : index
    %c0_49 = arith.constant 0 : index
    %c0_50 = arith.constant 0 : index
    %99 = vector.load %arg6[%c10, %c0_49, %c0_50] : memref<16x128x128xbf16, #tpu.memory_space<vmem>>, vector<1x128x128xbf16>
    %100 = vector.shape_cast %99 : vector<1x128x128xbf16> to vector<128x128xbf16>
    %cst_51 = arith.constant dense<0.000000e+00> : vector<2x128xf32>
    %101 = tpu.matmul %98, %100, %cst_51 {dimension_numbers = #tpu.dot_dimension_numbers<[1], [0], [0], [1], [0, 0, 1, 1], [], []>} : vector<2x128xbf16>, vector<128x128xbf16>, vector<2x128xf32> -> vector<2x128xf32>
    %102 = arith.addf %96, %101 : vector<2x128xf32>
    %103 = vector.extract_strided_slice %35 {offsets = [22, 0], sizes = [2, 128], strides = [1, 1]} : vector<32x128xf32> to vector<2x128xf32>
    %104 = arith.truncf %103 : vector<2x128xf32> to vector<2x128xbf16>
    %c11 = arith.constant 11 : index
    %c0_52 = arith.constant 0 : index
    %c0_53 = arith.constant 0 : index
    %105 = vector.load %arg6[%c11, %c0_52, %c0_53] : memref<16x128x128xbf16, #tpu.memory_space<vmem>>, vector<1x128x128xbf16>
    %106 = vector.shape_cast %105 : vector<1x128x128xbf16> to vector<128x128xbf16>
    %cst_54 = arith.constant dense<0.000000e+00> : vector<2x128xf32>
    %107 = tpu.matmul %104, %106, %cst_54 {dimension_numbers = #tpu.dot_dimension_numbers<[1], [0], [0], [1], [0, 0, 1, 1], [], []>} : vector<2x128xbf16>, vector<128x128xbf16>, vector<2x128xf32> -> vector<2x128xf32>
    %108 = arith.addf %102, %107 : vector<2x128xf32>
    %109 = vector.extract_strided_slice %35 {offsets = [24, 0], sizes = [2, 128], strides = [1, 1]} : vector<32x128xf32> to vector<2x128xf32>
    %110 = arith.truncf %109 : vector<2x128xf32> to vector<2x128xbf16>
    %c12 = arith.constant 12 : index
    %c0_55 = arith.constant 0 : index
    %c0_56 = arith.constant 0 : index
    %111 = vector.load %arg6[%c12, %c0_55, %c0_56] : memref<16x128x128xbf16, #tpu.memory_space<vmem>>, vector<1x128x128xbf16>
    %112 = vector.shape_cast %111 : vector<1x128x128xbf16> to vector<128x128xbf16>
    %cst_57 = arith.constant dense<0.000000e+00> : vector<2x128xf32>
    %113 = tpu.matmul %110, %112, %cst_57 {dimension_numbers = #tpu.dot_dimension_numbers<[1], [0], [0], [1], [0, 0, 1, 1], [], []>} : vector<2x128xbf16>, vector<128x128xbf16>, vector<2x128xf32> -> vector<2x128xf32>
    %114 = arith.addf %108, %113 : vector<2x128xf32>
    %115 = vector.extract_strided_slice %35 {offsets = [26, 0], sizes = [2, 128], strides = [1, 1]} : vector<32x128xf32> to vector<2x128xf32>
    %116 = arith.truncf %115 : vector<2x128xf32> to vector<2x128xbf16>
    %c13 = arith.constant 13 : index
    %c0_58 = arith.constant 0 : index
    %c0_59 = arith.constant 0 : index
    %117 = vector.load %arg6[%c13, %c0_58, %c0_59] : memref<16x128x128xbf16, #tpu.memory_space<vmem>>, vector<1x128x128xbf16>
    %118 = vector.shape_cast %117 : vector<1x128x128xbf16> to vector<128x128xbf16>
    %cst_60 = arith.constant dense<0.000000e+00> : vector<2x128xf32>
    %119 = tpu.matmul %116, %118, %cst_60 {dimension_numbers = #tpu.dot_dimension_numbers<[1], [0], [0], [1], [0, 0, 1, 1], [], []>} : vector<2x128xbf16>, vector<128x128xbf16>, vector<2x128xf32> -> vector<2x128xf32>
    %120 = arith.addf %114, %119 : vector<2x128xf32>
    %121 = vector.extract_strided_slice %35 {offsets = [28, 0], sizes = [2, 128], strides = [1, 1]} : vector<32x128xf32> to vector<2x128xf32>
    %122 = arith.truncf %121 : vector<2x128xf32> to vector<2x128xbf16>
    %c14 = arith.constant 14 : index
    %c0_61 = arith.constant 0 : index
    %c0_62 = arith.constant 0 : index
    %123 = vector.load %arg6[%c14, %c0_61, %c0_62] : memref<16x128x128xbf16, #tpu.memory_space<vmem>>, vector<1x128x128xbf16>
    %124 = vector.shape_cast %123 : vector<1x128x128xbf16> to vector<128x128xbf16>
    %cst_63 = arith.constant dense<0.000000e+00> : vector<2x128xf32>
    %125 = tpu.matmul %122, %124, %cst_63 {dimension_numbers = #tpu.dot_dimension_numbers<[1], [0], [0], [1], [0, 0, 1, 1], [], []>} : vector<2x128xbf16>, vector<128x128xbf16>, vector<2x128xf32> -> vector<2x128xf32>
    %126 = arith.addf %120, %125 : vector<2x128xf32>
    %127 = vector.extract_strided_slice %35 {offsets = [30, 0], sizes = [2, 128], strides = [1, 1]} : vector<32x128xf32> to vector<2x128xf32>
    %128 = arith.truncf %127 : vector<2x128xf32> to vector<2x128xbf16>
    %c15 = arith.constant 15 : index
    %c0_64 = arith.constant 0 : index
    %c0_65 = arith.constant 0 : index
    %129 = vector.load %arg6[%c15, %c0_64, %c0_65] : memref<16x128x128xbf16, #tpu.memory_space<vmem>>, vector<1x128x128xbf16>
    %130 = vector.shape_cast %129 : vector<1x128x128xbf16> to vector<128x128xbf16>
    %cst_66 = arith.constant dense<0.000000e+00> : vector<2x128xf32>
    %131 = tpu.matmul %128, %130, %cst_66 {dimension_numbers = #tpu.dot_dimension_numbers<[1], [0], [0], [1], [0, 0, 1, 1], [], []>} : vector<2x128xbf16>, vector<128x128xbf16>, vector<2x128xf32> -> vector<2x128xf32>
    %132 = arith.addf %126, %131 : vector<2x128xf32>
    %c0_67 = arith.constant 0 : index
    %c0_68 = arith.constant 0 : index
    %133 = vector.load %arg7[%c0_67, %c0_68] : memref<1x128xf32, #tpu.memory_space<vmem>>, vector<1x128xf32>
    %134 = vector.broadcast %133 : vector<1x128xf32> to vector<2x128xf32>
    %135 = arith.addf %132, %134 : vector<2x128xf32>
    %136 = tpu.iota {dimensions = array<i32: 1>} : vector<2x128xi32>
    %c0_i32 = arith.constant 0 : i32
    %137 = vector.broadcast %c0_i32 : i32 to vector<2x128xi32>
    %138 = arith.cmpi eq, %136, %137 : vector<2x128xi32>
    %139 = arith.negf %135 : vector<2x128xf32>
    %140 = math.exp %139 : vector<2x128xf32>
    %cst_69 = arith.constant 1.000000e+00 : f32
    %141 = vector.broadcast %cst_69 : f32 to vector<2x128xf32>
    %142 = arith.addf %141, %140 : vector<2x128xf32>
    %143 = arith.divf %141, %142 : vector<2x128xf32>
    %144 = arith.select %138, %143, %135 : vector<2x128xi1>, vector<2x128xf32>
    %c0_70 = arith.constant 0 : index
    %c0_71 = arith.constant 0 : index
    %145 = vector.load %arg8[%c0_70, %c0_71] : memref<2x128xf32, #tpu.memory_space<vmem>>, vector<2x128xf32>
    tpu.vector_store %arg8[%c0_70, %c0_71], %144 {strides = array<i32>} : memref<2x128xf32, #tpu.memory_space<vmem>>, vector<2x128xf32>,
    return
  }
  func.func @transform_0(%arg0: i32) -> (i32, i32) {
    %c0_i32 = arith.constant 0 : i32
    %c0_i32_0 = arith.constant 0 : i32
    %c0_i32_1 = arith.constant 0 : i32
    return %c0_i32, %c0_i32_0 : i32, i32
  }
  func.func @transform_1(%arg0: i32) -> (i32, i32) {
    %c0_i32 = arith.constant 0 : i32
    %c0_i32_0 = arith.constant 0 : i32
    %c0_i32_1 = arith.constant 0 : i32
    return %c0_i32, %c0_i32_0 : i32, i32
  }
  func.func @transform_2(%arg0: i32) -> (i32, i32) {
    %c0_i32 = arith.constant 0 : i32
    %c0_i32_0 = arith.constant 0 : i32
    %c0_i32_1 = arith.constant 0 : i32
    return %c0_i32, %c0_i32_0 : i32, i32
  }
  func.func @transform_3(%arg0: i32) -> (i32, i32) {
    %c0_i32 = arith.constant 0 : i32
    %c0_i32_0 = arith.constant 0 : i32
    %c0_i32_1 = arith.constant 0 : i32
    return %c0_i32, %c0_i32_0 : i32, i32
  }
  func.func @transform_4(%arg0: i32) -> (i32, i32) {
    %c0_i32 = arith.constant 0 : i32
    %c0_i32_0 = arith.constant 0 : i32
    %c0_i32_1 = arith.constant 0 : i32
    return %c0_i32, %c0_i32_0 : i32, i32
  }
  func.func @transform_5(%arg0: i32) -> (i32, i32, i32) {
    %c0_i32 = arith.constant 0 : i32
    %c0_i32_0 = arith.constant 0 : i32
    %c0_i32_1 = arith.constant 0 : i32
    %c0_i32_2 = arith.constant 0 : i32
    return %c0_i32, %c0_i32_0, %c0_i32_1 : i32, i32, i32
  }
  func.func @transform_6(%arg0: i32) -> (i32, i32) {
    %c0_i32 = arith.constant 0 : i32
    %c0_i32_0 = arith.constant 0 : i32
    %c0_i32_1 = arith.constant 0 : i32
    return %c0_i32, %c0_i32_0 : i32, i32
  }
  func.func @transform_7(%arg0: i32) -> (i32, i32) {
    %c0_i32 = arith.constant 0 : i32
    %c0_i32_0 = arith.constant 0 : i32
    %c0_i32_1 = arith.constant 0 : i32
    return %c0_i32, %c0_i32_0 : i32, i32
  }
}

</mosaic_0001>

<llo_original>
// kernel: _lambda_.4
$region0: #{_lambda_.4}
  #allocation0 [shape = 'u32[]', space=smem, size = 0x4, offset = 0x4, fixed_abs, tag = 'smem constant byte address 0x4 - core index']
  #allocation1 [shape = 'u32[72,128]{1,0:T(1,128)}', space=vmem, size = 0x9000, scoped, tag = 'internal scratch']
  %s0 = inlined_call_operand.vmem [shape: bf16[2048,128], index: 0, kind: input, shape index: {}]
  %s1 = inlined_call_operand.vmem [shape: bf16[128,128], index: 1, kind: input, shape index: {}]
  %s2 = inlined_call_operand.vmem [shape: f32[1,128], index: 2, kind: input, shape index: {}]
  %s3 = inlined_call_operand.vmem [shape: bf16[2048,128], index: 3, kind: output, shape index: {}]
  %s4 = sld [smem:[#allocation0]]
  $region45: #{_lambda_.4} parent=0
    _
  %s6 = ssub.s32 1, %s4
  %s7 = scalar_select 0, %s6, %s4
  loop: start=0, step=1, limit=4
  $region2: #{_lambda_.4} parent=0 // loop_pre_header
    _
  $region3: #{_lambda_.4} parent=0 // loop_header
    %s9 = sphi 0, %s13
    %p10 = scmp.ge.s32.totalorder %s9, 4
    %s19 = sphi 0, %s21
    %s22 = sphi 0, %s19
    %s23 = sphi 0, %s22
    %s39 = sphi 0, %s23
    %s43 = sphi 0, %s43
    %s45 = sphi 0, %s43
    %s46 = sphi 0, %s45
    %s60 = sphi 0, %s46
    %s64 = sphi 0, %s64
    %s66 = sphi 0, %s64
    %s67 = sphi 0, %s66
    %s81 = sphi 0, %s67
    %s87 = sphi 0, %s89
    %s90 = sphi 0, %s87
    %s91 = sphi 0, %s90
    %s107 = sphi 0, %s91
  $region4: #{_lambda_.4} parent=0 // loop_header_branch
    %12 = sbr.rel (%p10) target = $region8
  $region5: #{_lambda_.4} parent=0 // loop_body
    %s14 = ssub.s32 %s9, 1
    %s15 = ssub.s32 %s9, 2
    %s16 = sadd.s32 %s9, 1
    %s17 = ssub.s32 %s9, %s16
    %p18 = scmp.eq.s32.totalorder %s17, 0
    %s20 = sadd.s32 %s19, 1
    %s21 = scalar_select %p18, %s19, %s20
    %p24 = pneg %p18
    %p25 = scmp.eq.s32.totalorder %s9, 1
    %p26 = por %p24, %p25
    %p27 = scmp.ne.s32.totalorder %s19, %s22
    %p28 = scmp.eq.s32.totalorder %s9, 0
    %p29 = por %p27, %p28
    %p30 = scmp.ne.s32.totalorder %s19, %s22
    %p31 = scmp.eq.s32.totalorder %s14, 1
    %p32 = por %p30, %p31
    %p33 = scmp.ne.s32.totalorder %s22, %s23
    %p34 = scmp.eq.s32.totalorder %s14, 0
    %p35 = por %p33, %p34
    %p36 = scmp.ne.s32.totalorder %s22, %s23
    %p37 = scmp.eq.s32.totalorder %s15, 1
    %p38 = por %p36, %p37
    %p40 = scmp.ne.s32.totalorder %s23, %s39
    %p41 = scmp.eq.s32.totalorder %s15, 0
    %p42 = por %p40, %p41
    %s44 = sadd.s32 %s43, 1
    %p47 = scmp.eq.s32.totalorder %s9, 1
    %p48 = scmp.ne.s32.totalorder %s43, %s45
    %p49 = scmp.eq.s32.totalorder %s9, 0
    %p50 = por %p48, %p49
    %p51 = scmp.ne.s32.totalorder %s43, %s45
    %p52 = scmp.eq.s32.totalorder %s14, 1
    %p53 = por %p51, %p52
    %p54 = scmp.ne.s32.totalorder %s45, %s46
    %p55 = scmp.eq.s32.totalorder %s14, 0
    %p56 = por %p54, %p55
    %p57 = scmp.ne.s32.totalorder %s45, %s46
    %p58 = scmp.eq.s32.totalorder %s15, 1
    %p59 = por %p57, %p58
    %p61 = scmp.ne.s32.totalorder %s46, %s60
    %p62 = scmp.eq.s32.totalorder %s15, 0
    %p63 = por %p61, %p62
    %s65 = sadd.s32 %s64, 1
    %p68 = scmp.eq.s32.totalorder %s9, 1
    %p69 = scmp.ne.s32.totalorder %s64, %s66
    %p70 = scmp.eq.s32.totalorder %s9, 0
    %p71 = por %p69, %p70
    %p72 = scmp.ne.s32.totalorder %s64, %s66
    %p73 = scmp.eq.s32.totalorder %s14, 1
    %p74 = por %p72, %p73
    %p75 = scmp.ne.s32.totalorder %s66, %s67
    %p76 = scmp.eq.s32.totalorder %s14, 0
    %p77 = por %p75, %p76
    %p78 = scmp.ne.s32.totalorder %s66, %s67
    %p79 = scmp.eq.s32.totalorder %s15, 1
    %p80 = por %p78, %p79
    %p82 = scmp.ne.s32.totalorder %s67, %s81
    %p83 = scmp.eq.s32.totalorder %s15, 0
    %p84 = por %p82, %p83
    %s85 = ssub.s32 %s9, %s16
    %p86 = scmp.eq.s32.totalorder %s85, 0
    %s88 = sadd.s32 %s87, 1
    %s89 = scalar_select %p86, %s87, %s88
    %p92 = pneg %p86
    %p93 = scmp.eq.s32.totalorder %s9, 1
    %p94 = por %p92, %p93
    %p95 = scmp.ne.s32.totalorder %s87, %s90
    %p96 = scmp.eq.s32.totalorder %s9, 0
    %p97 = por %p95, %p96
    %p98 = scmp.ne.s32.totalorder %s87, %s90
    %p99 = scmp.eq.s32.totalorder %s14, 1
    %p100 = por %p98, %p99
    %p101 = scmp.ne.s32.totalorder %s90, %s91
    %p102 = scmp.eq.s32.totalorder %s14, 0
    %p103 = por %p101, %p102
    %p104 = scmp.ne.s32.totalorder %s90, %s91
    %p105 = scmp.eq.s32.totalorder %s15, 1
    %p106 = por %p104, %p105
    %p108 = scmp.ne.s32.totalorder %s91, %s107
    %p109 = scmp.eq.s32.totalorder %s15, 0
    %p110 = por %p108, %p109
    %p111 = scmp.le.s32.totalorder 1, %s9
    %p112 = scmp.lt.s32.totalorder %s9, 3
    %p113 = pnand %p111, %p112
    %p114 = pneg %p113
    // Predicated region
    $region9: #{_lambda_.4} parent=5 // pred_check
      _
    $region10: #{_lambda_.4} parent=5 // pred_check_branch
      %116 = sbr.rel (%p113) target = $region12
    $region11: #{_lambda_.4} parent=5 // pred_region
      %s117 = ssub.s32 %s9, 1
      // Predicated region
      $region13: #{_lambda_.4} parent=11 // pred_check
        %p118 = pneg %p56
      $region14: #{_lambda_.4} parent=11 // pred_check_branch
        %120 = sbr.rel (%p118) target = $region16
      $region15: #{_lambda_.4} parent=11 // pred_region
        _
      $region16: #{_lambda_.4} parent=11 // pred_fallthru
        _
      // Predicated region
      $region17: #{_lambda_.4} parent=11 // pred_check
        %p121 = pneg %p77
      $region18: #{_lambda_.4} parent=11 // pred_check_branch
        %123 = sbr.rel (%p121) target = $region20
      $region19: #{_lambda_.4} parent=11 // pred_region
        _
      $region20: #{_lambda_.4} parent=11 // pred_fallthru
        _
    $region12: #{_lambda_.4} parent=5 // pred_fallthru
      _
    %p124 = scmp.lt.s32.totalorder %s9, 2
    // Predicated region
    $region21: #{_lambda_.4} parent=5 // pred_check
      %p125 = pneg %p124
    $region22: #{_lambda_.4} parent=5 // pred_check_branch
      %127 = sbr.rel (%p125) target = $region24
    $region23: #{_lambda_.4} parent=5 // pred_region
      // Predicated region
      $region25: #{_lambda_.4} parent=23 // pred_check
        %p128 = pneg %p29
      $region26: #{_lambda_.4} parent=23 // pred_check_branch
        %130 = sbr.rel (%p128) target = $region28
      $region27: #{_lambda_.4} parent=23 // pred_region
        %s131 = smul.u32 128, %s9
        %p132 = scmp.lt.s32.totalorder %s131, 255
        %s133 = scalar_select %p132, %s131, 255
        %s134 = smul.addr %s133, 4
        %s135 = scalar_lea.vmem %s0, %s134
        %s136 = smul.u32 128, %s9
      $region28: #{_lambda_.4} parent=23 // pred_fallthru
        _
    $region24: #{_lambda_.4} parent=5 // pred_fallthru
      _
    %p137 = scmp.le.s32.totalorder 1, %s9
    %p138 = scmp.lt.s32.totalorder %s9, 3
    %p139 = pnand %p137, %p138
    %p140 = pneg %p139
    // Predicated region
    $region29: #{_lambda_.4} parent=5 // pred_check
      _
    $region30: #{_lambda_.4} parent=5 // pred_check_branch
      %142 = sbr.rel (%p139) target = $region32
    $region31: #{_lambda_.4} parent=5 // pred_region
      %s143 = ssub.s32 %s9, 1
      %s144 = smul.u32 128, %s14
      %p145 = scmp.lt.s32.totalorder %s144, 255
      %s146 = scalar_select %p145, %s144, 255
      %s147 = smul.addr %s146, 4
      %s148 = scalar_lea.vmem %s0, %s147
      %p149 = pneg %p35
      %p150 = pneg %p32
      %p151 = pneg %p56
      %p152 = pneg %p53
      %p153 = pneg %p77
      %p154 = pneg %p74
      %p155 = pneg %p103
      %p156 = pneg %p100
      %s157 = smul.u32 128, %s14
      %p158 = scmp.lt.s32.totalorder %s157, 255
      %s159 = scalar_select %p158, %s157, 255
      %s160 = smul.addr %s159, 4
      %s161 = scalar_lea.vmem %s3, %s160
      %s162 = smul.u32 128, %s14
      %p163 = scmp.lt.s32.totalorder %s162, 255
      %s164 = scalar_select %p163, %s162, 255
      %s165 = smul.addr %s164, 4
      %s166 = scalar_lea.vmem %s0, %s165
      %s167 = smul.u32 128, %s14
      %s168 = smul.u32 128, %s14
      %p169 = scmp.lt.s32.totalorder %s168, 255
      %s170 = scalar_select %p169, %s168, 255
      %s171 = smul.addr %s170, 4
      %s172 = scalar_lea.vmem %s3, %s171
      %s173 = smul.u32 128, %s14
      %v174 = vld [vmem:[%s166] sm:$0xf]
      %v175 = vld [vmem:[%s166 + $0x4] sm:$0xf]
      %v176 = vld [vmem:[%s166 + $0x8] sm:$0xf]
      %v177 = vld [vmem:[%s166 + $0xc] sm:$0xf]
      %v178 = vld [vmem:[%s166 + $0x10] sm:$0xf]
      %v179 = vld [vmem:[%s166 + $0x14] sm:$0xf]
      %v180 = vld [vmem:[%s166 + $0x18] sm:$0xf]
      %v181 = vld [vmem:[%s166 + $0x1c] sm:$0xf]
      %v182 = vld [vmem:[%s166 + $0x20] sm:$0xf]
      %v183 = vld [vmem:[%s166 + $0x24] sm:$0xf]
      %v184 = vld [vmem:[%s166 + $0x28] sm:$0xf]
      %v185 = vld [vmem:[%s166 + $0x2c] sm:$0xf]
      %v186 = vld [vmem:[%s166 + $0x30] sm:$0xf]
      %v187 = vld [vmem:[%s166 + $0x34] sm:$0xf]
      %v188 = vld [vmem:[%s166 + $0x38] sm:$0xf]
      %v189 = vld [vmem:[%s166 + $0x3c] sm:$0xf]
      %v190 = vld [vmem:[%s166 + $0x40] sm:$0xf]
      %v191 = vld [vmem:[%s166 + $0x44] sm:$0xf]
      %v192 = vld [vmem:[%s166 + $0x48] sm:$0xf]
      %v193 = vld [vmem:[%s166 + $0x4c] sm:$0xf]
      %v194 = vld [vmem:[%s166 + $0x50] sm:$0xf]
      %v195 = vld [vmem:[%s166 + $0x54] sm:$0xf]
      %v196 = vld [vmem:[%s166 + $0x58] sm:$0xf]
      %v197 = vld [vmem:[%s166 + $0x5c] sm:$0xf]
      %v198 = vld [vmem:[%s166 + $0x60] sm:$0xf]
      %v199 = vld [vmem:[%s166 + $0x64] sm:$0xf]
      %v200 = vld [vmem:[%s166 + $0x68] sm:$0xf]
      %v201 = vld [vmem:[%s166 + $0x6c] sm:$0xf]
      %v202 = vld [vmem:[%s166 + $0x70] sm:$0xf]
      %v203 = vld [vmem:[%s166 + $0x74] sm:$0xf]
      %v204 = vld [vmem:[%s166 + $0x78] sm:$0xf]
      %v205 = vld [vmem:[%s166 + $0x7c] sm:$0xf]
      %v206 = vld [vmem:[%s166 + $0x80] sm:$0xf]
      %v207 = vld [vmem:[%s166 + $0x84] sm:$0xf]
      %v208 = vld [vmem:[%s166 + $0x88] sm:$0xf]
      %v209 = vld [vmem:[%s166 + $0x8c] sm:$0xf]
      %v210 = vld [vmem:[%s166 + $0x90] sm:$0xf]
      %v211 = vld [vmem:[%s166 + $0x94] sm:$0xf]
      %v212 = vld [vmem:[%s166 + $0x98] sm:$0xf]
      %v213 = vld [vmem:[%s166 + $0x9c] sm:$0xf]
      %v214 = vld [vmem:[%s166 + $0xa0] sm:$0xf]
      %v215 = vld [vmem:[%s166 + $0xa4] sm:$0xf]
      %v216 = vld [vmem:[%s166 + $0xa8] sm:$0xf]
      %v217 = vld [vmem:[%s166 + $0xac] sm:$0xf]
      %v218 = vld [vmem:[%s166 + $0xb0] sm:$0xf]
      %v219 = vld [vmem:[%s166 + $0xb4] sm:$0xf]
      %v220 = vld [vmem:[%s166 + $0xb8] sm:$0xf]
      %v221 = vld [vmem:[%s166 + $0xbc] sm:$0xf]
      %v222 = vld [vmem:[%s166 + $0xc0] sm:$0xf]
      %v223 = vld [vmem:[%s166 + $0xc4] sm:$0xf]
      %v224 = vld [vmem:[%s166 + $0xc8] sm:$0xf]
      %v225 = vld [vmem:[%s166 + $0xcc] sm:$0xf]
      %v226 = vld [vmem:[%s166 + $0xd0] sm:$0xf]
      %v227 = vld [vmem:[%s166 + $0xd4] sm:$0xf]
      %v228 = vld [vmem:[%s166 + $0xd8] sm:$0xf]
      %v229 = vld [vmem:[%s166 + $0xdc] sm:$0xf]
      %v230 = vld [vmem:[%s166 + $0xe0] sm:$0xf]
      %v231 = vld [vmem:[%s166 + $0xe4] sm:$0xf]
      %v232 = vld [vmem:[%s166 + $0xe8] sm:$0xf]
      %v233 = vld [vmem:[%s166 + $0xec] sm:$0xf]
      %v234 = vld [vmem:[%s166 + $0xf0] sm:$0xf]
      %v235 = vld [vmem:[%s166 + $0xf4] sm:$0xf]
      %v236 = vld [vmem:[%s166 + $0xf8] sm:$0xf]
      %v237 = vld [vmem:[%s166 + $0xfc] sm:$0xf]
      %v238 = vld [vmem:[%s166 + $0x100] sm:$0xf]
      %v239 = vld [vmem:[%s166 + $0x104] sm:$0xf]
      %v240 = vld [vmem:[%s166 + $0x108] sm:$0xf]
      %v241 = vld [vmem:[%s166 + $0x10c] sm:$0xf]
      %v242 = vld [vmem:[%s166 + $0x110] sm:$0xf]
      %v243 = vld [vmem:[%s166 + $0x114] sm:$0xf]
      %v244 = vld [vmem:[%s166 + $0x118] sm:$0xf]
      %v245 = vld [vmem:[%s166 + $0x11c] sm:$0xf]
      %v246 = vld [vmem:[%s166 + $0x120] sm:$0xf]
      %v247 = vld [vmem:[%s166 + $0x124] sm:$0xf]
      %v248 = vld [vmem:[%s166 + $0x128] sm:$0xf]
      %v249 = vld [vmem:[%s166 + $0x12c] sm:$0xf]
      %v250 = vld [vmem:[%s166 + $0x130] sm:$0xf]
      %v251 = vld [vmem:[%s166 + $0x134] sm:$0xf]
      %v252 = vld [vmem:[%s166 + $0x138] sm:$0xf]
      %v253 = vld [vmem:[%s166 + $0x13c] sm:$0xf]
      %v254 = vld [vmem:[%s166 + $0x140] sm:$0xf]
      %v255 = vld [vmem:[%s166 + $0x144] sm:$0xf]
      %v256 = vld [vmem:[%s166 + $0x148] sm:$0xf]
      %v257 = vld [vmem:[%s166 + $0x14c] sm:$0xf]
      %v258 = vld [vmem:[%s166 + $0x150] sm:$0xf]
      %v259 = vld [vmem:[%s166 + $0x154] sm:$0xf]
      %v260 = vld [vmem:[%s166 + $0x158] sm:$0xf]
      %v261 = vld [vmem:[%s166 + $0x15c] sm:$0xf]
      %v262 = vld [vmem:[%s166 + $0x160] sm:$0xf]
      %v263 = vld [vmem:[%s166 + $0x164] sm:$0xf]
      %v264 = vld [vmem:[%s166 + $0x168] sm:$0xf]
      %v265 = vld [vmem:[%s166 + $0x16c] sm:$0xf]
      %v266 = vld [vmem:[%s166 + $0x170] sm:$0xf]
      %v267 = vld [vmem:[%s166 + $0x174] sm:$0xf]
      %v268 = vld [vmem:[%s166 + $0x178] sm:$0xf]
      %v269 = vld [vmem:[%s166 + $0x17c] sm:$0xf]
      %v270 = vld [vmem:[%s166 + $0x180] sm:$0xf]
      %v271 = vld [vmem:[%s166 + $0x184] sm:$0xf]
      %v272 = vld [vmem:[%s166 + $0x188] sm:$0xf]
      %v273 = vld [vmem:[%s166 + $0x18c] sm:$0xf]
      %v274 = vld [vmem:[%s166 + $0x190] sm:$0xf]
      %v275 = vld [vmem:[%s166 + $0x194] sm:$0xf]
      %v276 = vld [vmem:[%s166 + $0x198] sm:$0xf]
      %v277 = vld [vmem:[%s166 + $0x19c] sm:$0xf]
      %v278 = vld [vmem:[%s166 + $0x1a0] sm:$0xf]
      %v279 = vld [vmem:[%s166 + $0x1a4] sm:$0xf]
      %v280 = vld [vmem:[%s166 + $0x1a8] sm:$0xf]
      %v281 = vld [vmem:[%s166 + $0x1ac] sm:$0xf]
      %v282 = vld [vmem:[%s166 + $0x1b0] sm:$0xf]
      %v283 = vld [vmem:[%s166 + $0x1b4] sm:$0xf]
      %v284 = vld [vmem:[%s166 + $0x1b8] sm:$0xf]
      %v285 = vld [vmem:[%s166 + $0x1bc] sm:$0xf]
      %v286 = vld [vmem:[%s166 + $0x1c0] sm:$0xf]
      %v287 = vld [vmem:[%s166 + $0x1c4] sm:$0xf]
      %v288 = vld [vmem:[%s166 + $0x1c8] sm:$0xf]
      %v289 = vld [vmem:[%s166 + $0x1cc] sm:$0xf]
      %v290 = vld [vmem:[%s166 + $0x1d0] sm:$0xf]
      %v291 = vld [vmem:[%s166 + $0x1d4] sm:$0xf]
      %v292 = vld [vmem:[%s166 + $0x1d8] sm:$0xf]
      %v293 = vld [vmem:[%s166 + $0x1dc] sm:$0xf]
      %v294 = vld [vmem:[%s166 + $0x1e0] sm:$0xf]
      %v295 = vld [vmem:[%s166 + $0x1e4] sm:$0xf]
      %v296 = vld [vmem:[%s166 + $0x1e8] sm:$0xf]
      %v297 = vld [vmem:[%s166 + $0x1ec] sm:$0xf]
      %v298 = vld [vmem:[%s166 + $0x1f0] sm:$0xf]
      %v299 = vld [vmem:[%s166 + $0x1f4] sm:$0xf]
      %v300 = vld [vmem:[%s166 + $0x1f8] sm:$0xf]
      %v301 = vld [vmem:[%s166 + $0x1fc] sm:$0xf]
      %v302 = vld [vmem:[%s1] sm:$0xf]
      %v303 = vld [vmem:[%s1 + $0x4] sm:$0xf]
      %v304 = vld [vmem:[%s1 + $0x8] sm:$0xf]
      %v305 = vld [vmem:[%s1 + $0xc] sm:$0xf]
      %v306 = vld [vmem:[%s1 + $0x10] sm:$0xf]
      %v307 = vld [vmem:[%s1 + $0x14] sm:$0xf]
      %v308 = vld [vmem:[%s1 + $0x18] sm:$0xf]
      %v309 = vld [vmem:[%s1 + $0x1c] sm:$0xf]
      %v310 = vld [vmem:[%s1 + $0x20] sm:$0xf]
      %v311 = vld [vmem:[%s1 + $0x24] sm:$0xf]
      %v312 = vld [vmem:[%s1 + $0x28] sm:$0xf]
      %v313 = vld [vmem:[%s1 + $0x2c] sm:$0xf]
      %v314 = vld [vmem:[%s1 + $0x30] sm:$0xf]
      %v315 = vld [vmem:[%s1 + $0x34] sm:$0xf]
      %v316 = vld [vmem:[%s1 + $0x38] sm:$0xf]
      %v317 = vld [vmem:[%s1 + $0x3c] sm:$0xf]
      %v318 = vld [vmem:[%s2] sm:$0x1]
      %v320 = vperm.slane %v318, 0
      %v450 = vunpack.c.l.b16 %v174
      %v451 = vunpack.c.l.b16 %v175
      %v452 = vunpack.c.l.b16 %v176
      %v453 = vunpack.c.l.b16 %v177
      %v454 = vunpack.c.l.b16 %v178
      %v455 = vunpack.c.l.b16 %v179
      %v456 = vunpack.c.l.b16 %v180
      %v457 = vunpack.c.l.b16 %v181
      %v458 = vunpack.c.l.b16 %v182
      %v459 = vunpack.c.l.b16 %v183
      %v460 = vunpack.c.l.b16 %v184
      %v461 = vunpack.c.l.b16 %v185
      %v462 = vunpack.c.l.b16 %v186
      %v463 = vunpack.c.l.b16 %v187
      %v464 = vunpack.c.l.b16 %v188
      %v465 = vunpack.c.l.b16 %v189
      %v466 = vunpack.c.l.b16 %v190
      %v467 = vunpack.c.l.b16 %v191
      %v468 = vunpack.c.l.b16 %v192
      %v469 = vunpack.c.l.b16 %v193
      %v470 = vunpack.c.l.b16 %v194
      %v471 = vunpack.c.l.b16 %v195
      %v472 = vunpack.c.l.b16 %v196
      %v473 = vunpack.c.l.b16 %v197
      %v474 = vunpack.c.l.b16 %v198
      %v475 = vunpack.c.l.b16 %v199
      %v476 = vunpack.c.l.b16 %v200
      %v477 = vunpack.c.l.b16 %v201
      %v478 = vunpack.c.l.b16 %v202
      %v479 = vunpack.c.l.b16 %v203
      %v480 = vunpack.c.l.b16 %v204
      %v481 = vunpack.c.l.b16 %v205
      %v482 = vunpack.c.l.b16 %v206
      %v483 = vunpack.c.l.b16 %v207
      %v484 = vunpack.c.l.b16 %v208
      %v485 = vunpack.c.l.b16 %v209
      %v486 = vunpack.c.l.b16 %v210
      %v487 = vunpack.c.l.b16 %v211
      %v488 = vunpack.c.l.b16 %v212
      %v489 = vunpack.c.l.b16 %v213
      %v490 = vunpack.c.l.b16 %v214
      %v491 = vunpack.c.l.b16 %v215
      %v492 = vunpack.c.l.b16 %v216
      %v493 = vunpack.c.l.b16 %v217
      %v494 = vunpack.c.l.b16 %v218
      %v495 = vunpack.c.l.b16 %v219
      %v496 = vunpack.c.l.b16 %v220
      %v497 = vunpack.c.l.b16 %v221
      %v498 = vunpack.c.l.b16 %v222
      %v499 = vunpack.c.l.b16 %v223
      %v500 = vunpack.c.l.b16 %v224
      %v501 = vunpack.c.l.b16 %v225
      %v502 = vunpack.c.l.b16 %v226
      %v503 = vunpack.c.l.b16 %v227
      %v504 = vunpack.c.l.b16 %v228
      %v505 = vunpack.c.l.b16 %v229
      %v506 = vunpack.c.l.b16 %v230
      %v507 = vunpack.c.l.b16 %v231
      %v508 = vunpack.c.l.b16 %v232
      %v509 = vunpack.c.l.b16 %v233
      %v510 = vunpack.c.l.b16 %v234
      %v511 = vunpack.c.l.b16 %v235
      %v512 = vunpack.c.l.b16 %v236
      %v513 = vunpack.c.l.b16 %v237
      %v514 = vunpack.c.l.b16 %v238
      %v515 = vunpack.c.l.b16 %v239
      %v516 = vunpack.c.l.b16 %v240
      %v517 = vunpack.c.l.b16 %v241
      %v518 = vunpack.c.l.b16 %v242
      %v519 = vunpack.c.l.b16 %v243
      %v520 = vunpack.c.l.b16 %v244
      %v521 = vunpack.c.l.b16 %v245
      %v522 = vunpack.c.l.b16 %v246
      %v523 = vunpack.c.l.b16 %v247
      %v524 = vunpack.c.l.b16 %v248
      %v525 = vunpack.c.l.b16 %v249
      %v526 = vunpack.c.l.b16 %v250
      %v527 = vunpack.c.l.b16 %v251
      %v528 = vunpack.c.l.b16 %v252
      %v529 = vunpack.c.l.b16 %v253
      %v530 = vunpack.c.l.b16 %v254
      %v531 = vunpack.c.l.b16 %v255
      %v532 = vunpack.c.l.b16 %v256
      %v533 = vunpack.c.l.b16 %v257
      %v534 = vunpack.c.l.b16 %v258
      %v535 = vunpack.c.l.b16 %v259
      %v536 = vunpack.c.l.b16 %v260
      %v537 = vunpack.c.l.b16 %v261
      %v538 = vunpack.c.l.b16 %v262
      %v539 = vunpack.c.l.b16 %v263
      %v540 = vunpack.c.l.b16 %v264
      %v541 = vunpack.c.l.b16 %v265
      %v542 = vunpack.c.l.b16 %v266
      %v543 = vunpack.c.l.b16 %v267
      %v544 = vunpack.c.l.b16 %v268
      %v545 = vunpack.c.l.b16 %v269
      %v546 = vunpack.c.l.b16 %v270
      %v547 = vunpack.c.l.b16 %v271
      %v548 = vunpack.c.l.b16 %v272
      %v549 = vunpack.c.l.b16 %v273
      %v550 = vunpack.c.l.b16 %v274
      %v551 = vunpack.c.l.b16 %v275
      %v552 = vunpack.c.l.b16 %v276
      %v553 = vunpack.c.l.b16 %v277
      %v554 = vunpack.c.l.b16 %v278
      %v555 = vunpack.c.l.b16 %v279
      %v556 = vunpack.c.l.b16 %v280
      %v557 = vunpack.c.l.b16 %v281
      %v558 = vunpack.c.l.b16 %v282
      %v559 = vunpack.c.l.b16 %v283
      %v560 = vunpack.c.l.b16 %v284
      %v561 = vunpack.c.l.b16 %v285
      %v562 = vunpack.c.l.b16 %v286
      %v563 = vunpack.c.l.b16 %v287
      %v564 = vunpack.c.l.b16 %v288
      %v565 = vunpack.c.l.b16 %v289
      %v566 = vunpack.c.l.b16 %v290
      %v567 = vunpack.c.l.b16 %v291
      %v568 = vunpack.c.l.b16 %v292
      %v569 = vunpack.c.l.b16 %v293
      %v570 = vunpack.c.l.b16 %v294
      %v571 = vunpack.c.l.b16 %v295
      %v572 = vunpack.c.l.b16 %v296
      %v573 = vunpack.c.l.b16 %v297
      %v574 = vunpack.c.l.b16 %v298
      %v575 = vunpack.c.l.b16 %v299
      %v576 = vunpack.c.l.b16 %v300
      %v577 = vunpack.c.l.b16 %v301
      %v578 = vpack.c.b16 %v451, %v450
      %v579 = vpack.c.b16 %v453, %v452
      %v580 = vpack.c.b16 %v455, %v454
      %v581 = vpack.c.b16 %v457, %v456
      %v582 = vpack.c.b16 %v459, %v458
      %v583 = vpack.c.b16 %v461, %v460
      %v584 = vpack.c.b16 %v463, %v462
      %v585 = vpack.c.b16 %v465, %v464
      %v586 = vpack.c.b16 %v467, %v466
      %v587 = vpack.c.b16 %v469, %v468
      %v588 = vpack.c.b16 %v471, %v470
      %v589 = vpack.c.b16 %v473, %v472
      %v590 = vpack.c.b16 %v475, %v474
      %v591 = vpack.c.b16 %v477, %v476
      %v592 = vpack.c.b16 %v479, %v478
      %v593 = vpack.c.b16 %v481, %v480
      %v594 = vpack.c.b16 %v483, %v482
      %v595 = vpack.c.b16 %v485, %v484
      %v596 = vpack.c.b16 %v487, %v486
      %v597 = vpack.c.b16 %v489, %v488
      %v598 = vpack.c.b16 %v491, %v490
      %v599 = vpack.c.b16 %v493, %v492
      %v600 = vpack.c.b16 %v495, %v494
      %v601 = vpack.c.b16 %v497, %v496
      %v602 = vpack.c.b16 %v499, %v498
      %v603 = vpack.c.b16 %v501, %v500
      %v604 = vpack.c.b16 %v503, %v502
      %v605 = vpack.c.b16 %v505, %v504
      %v606 = vpack.c.b16 %v507, %v506
      %v607 = vpack.c.b16 %v509, %v508
      %v608 = vpack.c.b16 %v511, %v510
      %v609 = vpack.c.b16 %v513, %v512
      %v610 = vpack.c.b16 %v515, %v514
      %v611 = vpack.c.b16 %v517, %v516
      %v612 = vpack.c.b16 %v519, %v518
      %v613 = vpack.c.b16 %v521, %v520
      %v614 = vpack.c.b16 %v523, %v522
      %v615 = vpack.c.b16 %v525, %v524
      %v616 = vpack.c.b16 %v527, %v526
      %v617 = vpack.c.b16 %v529, %v528
      %v618 = vpack.c.b16 %v531, %v530
      %v619 = vpack.c.b16 %v533, %v532
      %v620 = vpack.c.b16 %v535, %v534
      %v621 = vpack.c.b16 %v537, %v536
      %v622 = vpack.c.b16 %v539, %v538
      %v623 = vpack.c.b16 %v541, %v540
      %v624 = vpack.c.b16 %v543, %v542
      %v625 = vpack.c.b16 %v545, %v544
      %v626 = vpack.c.b16 %v547, %v546
      %v627 = vpack.c.b16 %v549, %v548
      %v628 = vpack.c.b16 %v551, %v550
      %v629 = vpack.c.b16 %v553, %v552
      %v630 = vpack.c.b16 %v555, %v554
      %v631 = vpack.c.b16 %v557, %v556
      %v632 = vpack.c.b16 %v559, %v558
      %v633 = vpack.c.b16 %v561, %v560
      %v634 = vpack.c.b16 %v563, %v562
      %v635 = vpack.c.b16 %v565, %v564
      %v636 = vpack.c.b16 %v567, %v566
      %v637 = vpack.c.b16 %v569, %v568
      %v638 = vpack.c.b16 %v571, %v570
      %v639 = vpack.c.b16 %v573, %v572
      %v640 = vpack.c.b16 %v575, %v574
      %v641 = vpack.c.b16 %v577, %v576
      %v722 = vunpack.c.l.b16 %v302
      %v723 = vunpack.c.l.b16 %v303
      %v724 = vunpack.c.l.b16 %v304
      %v725 = vunpack.c.l.b16 %v305
      %v726 = vunpack.c.l.b16 %v306
      %v727 = vunpack.c.l.b16 %v307
      %v728 = vunpack.c.l.b16 %v308
      %v729 = vunpack.c.l.b16 %v309
      %v730 = vunpack.c.l.b16 %v310
      %v731 = vunpack.c.l.b16 %v311
      %v732 = vunpack.c.l.b16 %v312
      %v733 = vunpack.c.l.b16 %v313
      %v734 = vunpack.c.l.b16 %v314
      %v735 = vunpack.c.l.b16 %v315
      %v736 = vunpack.c.l.b16 %v316
      %v737 = vunpack.c.l.b16 %v317
      %v738 = vpack.c.b16 %v723, %v722
      %v739 = vpack.c.b16 %v725, %v724
      %v740 = vpack.c.b16 %v727, %v726
      %v741 = vpack.c.b16 %v729, %v728
      %v742 = vpack.c.b16 %v731, %v730
      %v743 = vpack.c.b16 %v733, %v732
      %v744 = vpack.c.b16 %v735, %v734
      %v745 = vpack.c.b16 %v737, %v736
      %754 = vmatpush.bf16.msra.mxu0 %v745
      %755 = vmatpush.bf16.msra.mxu0 %v744
      %756 = vmatpush.bf16.msra.mxu0 %v743
      %757 = vmatpush.bf16.msra.mxu0 %v742
      %758 = vmatpush.bf16.msra.mxu0 %v741
      %759 = vmatpush.bf16.msra.mxu0 %v740
      %760 = vmatpush.bf16.msra.mxu0 %v739
      %761 = vmatpush.bf16.msra.mxu0 %v738
      %762 = vmatmul.bf16.gmra.mxu0 %v578
      %v763 = vpop.f32.mrf.mxu0
      %v764 = vadd.f32 %v320, %v763
      %v765 = vpop.f32.mrf.mxu0
      %v766 = vadd.f32 %v320, %v765
      %767 = vmatmul.bf16.gmra.mxu0 %v579
      %v768 = vpop.f32.mrf.mxu0
      %v769 = vadd.f32 %v320, %v768
      %v770 = vpop.f32.mrf.mxu0
      %v771 = vadd.f32 %v320, %v770
      %772 = vmatmul.bf16.gmra.mxu0 %v580
      %v773 = vpop.f32.mrf.mxu0
      %v774 = vadd.f32 %v320, %v773
      %v775 = vpop.f32.mrf.mxu0
      %v776 = vadd.f32 %v320, %v775
      %777 = vmatmul.bf16.gmra.mxu0 %v581
      %v778 = vpop.f32.mrf.mxu0
      %v779 = vadd.f32 %v320, %v778
      %v780 = vpop.f32.mrf.mxu0
      %v781 = vadd.f32 %v320, %v780
      %782 = vmatmul.bf16.gmra.mxu0 %v582
      %v783 = vpop.f32.mrf.mxu0
      %v784 = vadd.f32 %v320, %v783
      %v785 = vpop.f32.mrf.mxu0
      %v786 = vadd.f32 %v320, %v785
      %787 = vmatmul.bf16.gmra.mxu0 %v583
      %v788 = vpop.f32.mrf.mxu0
      %v789 = vadd.f32 %v320, %v788
      %v790 = vpop.f32.mrf.mxu0
      %v791 = vadd.f32 %v320, %v790
      %792 = vmatmul.bf16.gmra.mxu0 %v584
      %v793 = vpop.f32.mrf.mxu0
      %v794 = vadd.f32 %v320, %v793
      %v795 = vpop.f32.mrf.mxu0
      %v796 = vadd.f32 %v320, %v795
      %797 = vmatmul.bf16.gmra.mxu0 %v585
      %v798 = vpop.f32.mrf.mxu0
      %v799 = vadd.f32 %v320, %v798
      %v800 = vpop.f32.mrf.mxu0
      %v801 = vadd.f32 %v320, %v800
      %802 = vmatmul.bf16.gmra.mxu0 %v586
      %v803 = vpop.f32.mrf.mxu0
      %v804 = vadd.f32 %v320, %v803
      %v805 = vpop.f32.mrf.mxu0
      %v806 = vadd.f32 %v320, %v805
      %807 = vmatmul.bf16.gmra.mxu0 %v587
      %v808 = vpop.f32.mrf.mxu0
      %v809 = vadd.f32 %v320, %v808
      %v810 = vpop.f32.mrf.mxu0
      %v811 = vadd.f32 %v320, %v810
      %812 = vmatmul.bf16.gmra.mxu0 %v588
      %v813 = vpop.f32.mrf.mxu0
      %v814 = vadd.f32 %v320, %v813
      %v815 = vpop.f32.mrf.mxu0
      %v816 = vadd.f32 %v320, %v815
      %817 = vmatmul.bf16.gmra.mxu0 %v589
      %v818 = vpop.f32.mrf.mxu0
      %v819 = vadd.f32 %v320, %v818
      %v820 = vpop.f32.mrf.mxu0
      %v821 = vadd.f32 %v320, %v820
      %822 = vmatmul.bf16.gmra.mxu0 %v590
      %v823 = vpop.f32.mrf.mxu0
      %v824 = vadd.f32 %v320, %v823
      %v825 = vpop.f32.mrf.mxu0
      %v826 = vadd.f32 %v320, %v825
      %827 = vmatmul.bf16.gmra.mxu0 %v591
      %v828 = vpop.f32.mrf.mxu0
      %v829 = vadd.f32 %v320, %v828
      %v830 = vpop.f32.mrf.mxu0
      %v831 = vadd.f32 %v320, %v830
      %832 = vmatmul.bf16.gmra.mxu0 %v592
      %v833 = vpop.f32.mrf.mxu0
      %v834 = vadd.f32 %v320, %v833
      %v835 = vpop.f32.mrf.mxu0
      %v836 = vadd.f32 %v320, %v835
      %837 = vmatmul.bf16.gmra.mxu0 %v593
      %v838 = vpop.f32.mrf.mxu0
      %v839 = vadd.f32 %v320, %v838
      %v840 = vpop.f32.mrf.mxu0
      %v841 = vadd.f32 %v320, %v840
      %842 = vmatmul.bf16.gmra.mxu0 %v594
      %v843 = vpop.f32.mrf.mxu0
      %v844 = vadd.f32 %v320, %v843
      %v845 = vpop.f32.mrf.mxu0
      %v846 = vadd.f32 %v320, %v845
      %847 = vmatmul.bf16.gmra.mxu0 %v595
      %v848 = vpop.f32.mrf.mxu0
      %v849 = vadd.f32 %v320, %v848
      %v850 = vpop.f32.mrf.mxu0
      %v851 = vadd.f32 %v320, %v850
      %852 = vmatmul.bf16.gmra.mxu0 %v596
      %v853 = vpop.f32.mrf.mxu0
      %v854 = vadd.f32 %v320, %v853
      %v855 = vpop.f32.mrf.mxu0
      %v856 = vadd.f32 %v320, %v855
      %857 = vmatmul.bf16.gmra.mxu0 %v597
      %v858 = vpop.f32.mrf.mxu0
      %v859 = vadd.f32 %v320, %v858
      %v860 = vpop.f32.mrf.mxu0
      %v861 = vadd.f32 %v320, %v860
      %862 = vmatmul.bf16.gmra.mxu0 %v598
      %v863 = vpop.f32.mrf.mxu0
      %v864 = vadd.f32 %v320, %v863
      %v865 = vpop.f32.mrf.mxu0
      %v866 = vadd.f32 %v320, %v865
      %867 = vmatmul.bf16.gmra.mxu0 %v599
      %v868 = vpop.f32.mrf.mxu0
      %v869 = vadd.f32 %v320, %v868
      %v870 = vpop.f32.mrf.mxu0
      %v871 = vadd.f32 %v320, %v870
      %872 = vmatmul.bf16.gmra.mxu0 %v600
      %v873 = vpop.f32.mrf.mxu0
      %v874 = vadd.f32 %v320, %v873
      %v875 = vpop.f32.mrf.mxu0
      %v876 = vadd.f32 %v320, %v875
      %877 = vmatmul.bf16.gmra.mxu0 %v601
      %v878 = vpop.f32.mrf.mxu0
      %v879 = vadd.f32 %v320, %v878
      %v880 = vpop.f32.mrf.mxu0
      %v881 = vadd.f32 %v320, %v880
      %882 = vmatmul.bf16.gmra.mxu0 %v602
      %v883 = vpop.f32.mrf.mxu0
      %v884 = vadd.f32 %v320, %v883
      %v885 = vpop.f32.mrf.mxu0
      %v886 = vadd.f32 %v320, %v885
      %887 = vmatmul.bf16.gmra.mxu0 %v603
      %v888 = vpop.f32.mrf.mxu0
      %v889 = vadd.f32 %v320, %v888
      %v890 = vpop.f32.mrf.mxu0
      %v891 = vadd.f32 %v320, %v890
      %892 = vmatmul.bf16.gmra.mxu0 %v604
      %v893 = vpop.f32.mrf.mxu0
      %v894 = vadd.f32 %v320, %v893
      %v895 = vpop.f32.mrf.mxu0
      %v896 = vadd.f32 %v320, %v895
      %897 = vmatmul.bf16.gmra.mxu0 %v605
      %v898 = vpop.f32.mrf.mxu0
      %v899 = vadd.f32 %v320, %v898
      %v900 = vpop.f32.mrf.mxu0
      %v901 = vadd.f32 %v320, %v900
      %902 = vmatmul.bf16.gmra.mxu0 %v606
      %v903 = vpop.f32.mrf.mxu0
      %v904 = vadd.f32 %v320, %v903
      %v905 = vpop.f32.mrf.mxu0
      %v906 = vadd.f32 %v320, %v905
      %907 = vmatmul.bf16.gmra.mxu0 %v607
      %v908 = vpop.f32.mrf.mxu0
      %v909 = vadd.f32 %v320, %v908
      %v910 = vpop.f32.mrf.mxu0
      %v911 = vadd.f32 %v320, %v910
      %912 = vmatmul.bf16.gmra.mxu0 %v608
      %v913 = vpop.f32.mrf.mxu0
      %v914 = vadd.f32 %v320, %v913
      %v915 = vpop.f32.mrf.mxu0
      %v916 = vadd.f32 %v320, %v915
      %917 = vmatmul.bf16.gmra.mxu0 %v609
      %v918 = vpop.f32.mrf.mxu0
      %v919 = vadd.f32 %v320, %v918
      %v920 = vpop.f32.mrf.mxu0
      %v921 = vadd.f32 %v320, %v920
      %922 = vmatmul.bf16.gmra.mxu0 %v610
      %v923 = vpop.f32.mrf.mxu0
      %v924 = vadd.f32 %v320, %v923
      %v925 = vpop.f32.mrf.mxu0
      %v926 = vadd.f32 %v320, %v925
      %927 = vmatmul.bf16.gmra.mxu0 %v611
      %v928 = vpop.f32.mrf.mxu0
      %v929 = vadd.f32 %v320, %v928
      %v930 = vpop.f32.mrf.mxu0
      %v931 = vadd.f32 %v320, %v930
      %932 = vmatmul.bf16.gmra.mxu0 %v612
      %v933 = vpop.f32.mrf.mxu0
      %v934 = vadd.f32 %v320, %v933
      %v935 = vpop.f32.mrf.mxu0
      %v936 = vadd.f32 %v320, %v935
      %937 = vmatmul.bf16.gmra.mxu0 %v613
      %v938 = vpop.f32.mrf.mxu0
      %v939 = vadd.f32 %v320, %v938
      %v940 = vpop.f32.mrf.mxu0
      %v941 = vadd.f32 %v320, %v940
      %942 = vmatmul.bf16.gmra.mxu0 %v614
      %v943 = vpop.f32.mrf.mxu0
      %v944 = vadd.f32 %v320, %v943
      %v945 = vpop.f32.mrf.mxu0
      %v946 = vadd.f32 %v320, %v945
      %947 = vmatmul.bf16.gmra.mxu0 %v615
      %v948 = vpop.f32.mrf.mxu0
      %v949 = vadd.f32 %v320, %v948
      %v950 = vpop.f32.mrf.mxu0
      %v951 = vadd.f32 %v320, %v950
      %952 = vmatmul.bf16.gmra.mxu0 %v616
      %v953 = vpop.f32.mrf.mxu0
      %v954 = vadd.f32 %v320, %v953
      %v955 = vpop.f32.mrf.mxu0
      %v956 = vadd.f32 %v320, %v955
      %957 = vmatmul.bf16.gmra.mxu0 %v617
      %v958 = vpop.f32.mrf.mxu0
      %v959 = vadd.f32 %v320, %v958
      %v960 = vpop.f32.mrf.mxu0
      %v961 = vadd.f32 %v320, %v960
      %962 = vmatmul.bf16.gmra.mxu0 %v618
      %v963 = vpop.f32.mrf.mxu0
      %v964 = vadd.f32 %v320, %v963
      %v965 = vpop.f32.mrf.mxu0
      %v966 = vadd.f32 %v320, %v965
      %967 = vmatmul.bf16.gmra.mxu0 %v619
      %v968 = vpop.f32.mrf.mxu0
      %v969 = vadd.f32 %v320, %v968
      %v970 = vpop.f32.mrf.mxu0
      %v971 = vadd.f32 %v320, %v970
      %972 = vmatmul.bf16.gmra.mxu0 %v620
      %v973 = vpop.f32.mrf.mxu0
      %v974 = vadd.f32 %v320, %v973
      %v975 = vpop.f32.mrf.mxu0
      %v976 = vadd.f32 %v320, %v975
      %977 = vmatmul.bf16.gmra.mxu0 %v621
      %v978 = vpop.f32.mrf.mxu0
      %v979 = vadd.f32 %v320, %v978
      %v980 = vpop.f32.mrf.mxu0
      %v981 = vadd.f32 %v320, %v980
      %982 = vmatmul.bf16.gmra.mxu0 %v622
      %v983 = vpop.f32.mrf.mxu0
      %v984 = vadd.f32 %v320, %v983
      %v985 = vpop.f32.mrf.mxu0
      %v986 = vadd.f32 %v320, %v985
      %987 = vmatmul.bf16.gmra.mxu0 %v623
      %v988 = vpop.f32.mrf.mxu0
      %v989 = vadd.f32 %v320, %v988
      %v990 = vpop.f32.mrf.mxu0
      %v991 = vadd.f32 %v320, %v990
      %992 = vmatmul.bf16.gmra.mxu0 %v624
      %v993 = vpop.f32.mrf.mxu0
      %v994 = vadd.f32 %v320, %v993
      %v995 = vpop.f32.mrf.mxu0
      %v996 = vadd.f32 %v320, %v995
      %997 = vmatmul.bf16.gmra.mxu0 %v625
      %v998 = vpop.f32.mrf.mxu0
      %v999 = vadd.f32 %v320, %v998
      %v1000 = vpop.f32.mrf.mxu0
      %v1001 = vadd.f32 %v320, %v1000
      %1002 = vmatmul.bf16.gmra.mxu0 %v626
      %v1003 = vpop.f32.mrf.mxu0
      %v1004 = vadd.f32 %v320, %v1003
      %v1005 = vpop.f32.mrf.mxu0
      %v1006 = vadd.f32 %v320, %v1005
      %1007 = vmatmul.bf16.gmra.mxu0 %v627
      %v1008 = vpop.f32.mrf.mxu0
      %v1009 = vadd.f32 %v320, %v1008
      %v1010 = vpop.f32.mrf.mxu0
      %v1011 = vadd.f32 %v320, %v1010
      %1012 = vmatmul.bf16.gmra.mxu0 %v628
      %v1013 = vpop.f32.mrf.mxu0
      %v1014 = vadd.f32 %v320, %v1013
      %v1015 = vpop.f32.mrf.mxu0
      %v1016 = vadd.f32 %v320, %v1015
      %1017 = vmatmul.bf16.gmra.mxu0 %v629
      %v1018 = vpop.f32.mrf.mxu0
      %v1019 = vadd.f32 %v320, %v1018
      %v1020 = vpop.f32.mrf.mxu0
      %v1021 = vadd.f32 %v320, %v1020
      %1022 = vmatmul.bf16.gmra.mxu0 %v630
      %v1023 = vpop.f32.mrf.mxu0
      %v1024 = vadd.f32 %v320, %v1023
      %v1025 = vpop.f32.mrf.mxu0
      %v1026 = vadd.f32 %v320, %v1025
      %1027 = vmatmul.bf16.gmra.mxu0 %v631
      %v1028 = vpop.f32.mrf.mxu0
      %v1029 = vadd.f32 %v320, %v1028
      %v1030 = vpop.f32.mrf.mxu0
      %v1031 = vadd.f32 %v320, %v1030
      %1032 = vmatmul.bf16.gmra.mxu0 %v632
      %v1033 = vpop.f32.mrf.mxu0
      %v1034 = vadd.f32 %v320, %v1033
      %v1035 = vpop.f32.mrf.mxu0
      %v1036 = vadd.f32 %v320, %v1035
      %1037 = vmatmul.bf16.gmra.mxu0 %v633
      %v1038 = vpop.f32.mrf.mxu0
      %v1039 = vadd.f32 %v320, %v1038
      %v1040 = vpop.f32.mrf.mxu0
      %v1041 = vadd.f32 %v320, %v1040
      %1042 = vmatmul.bf16.gmra.mxu0 %v634
      %v1043 = vpop.f32.mrf.mxu0
      %v1044 = vadd.f32 %v320, %v1043
      %v1045 = vpop.f32.mrf.mxu0
      %v1046 = vadd.f32 %v320, %v1045
      %1047 = vmatmul.bf16.gmra.mxu0 %v635
      %v1048 = vpop.f32.mrf.mxu0
      %v1049 = vadd.f32 %v320, %v1048
      %v1050 = vpop.f32.mrf.mxu0
      %v1051 = vadd.f32 %v320, %v1050
      %1052 = vmatmul.bf16.gmra.mxu0 %v636
      %v1053 = vpop.f32.mrf.mxu0
      %v1054 = vadd.f32 %v320, %v1053
      %v1055 = vpop.f32.mrf.mxu0
      %v1056 = vadd.f32 %v320, %v1055
      %1057 = vmatmul.bf16.gmra.mxu0 %v637
      %v1058 = vpop.f32.mrf.mxu0
      %v1059 = vadd.f32 %v320, %v1058
      %v1060 = vpop.f32.mrf.mxu0
      %v1061 = vadd.f32 %v320, %v1060
      %1062 = vmatmul.bf16.gmra.mxu0 %v638
      %v1063 = vpop.f32.mrf.mxu0
      %v1064 = vadd.f32 %v320, %v1063
      %v1065 = vpop.f32.mrf.mxu0
      %v1066 = vadd.f32 %v320, %v1065
      %1067 = vmatmul.bf16.gmra.mxu0 %v639
      %v1068 = vpop.f32.mrf.mxu0
      %v1069 = vadd.f32 %v320, %v1068
      %v1070 = vpop.f32.mrf.mxu0
      %v1071 = vadd.f32 %v320, %v1070
      %1072 = vmatmul.bf16.gmra.mxu0 %v640
      %v1073 = vpop.f32.mrf.mxu0
      %v1074 = vadd.f32 %v320, %v1073
      %v1075 = vpop.f32.mrf.mxu0
      %v1076 = vadd.f32 %v320, %v1075
      %1077 = vmatmul.bf16.gmra.mxu0 %v641
      %v1078 = vpop.f32.mrf.mxu0
      %v1079 = vadd.f32 %v320, %v1078
      %v1080 = vpop.f32.mrf.mxu0
      %v1081 = vadd.f32 %v320, %v1080
      %1082 = vdwg.mxu0
      %vm1083 = vcmp.ge.f32.partialorder %v764, 0.0
      %vm1084 = vcmp.ge.f32.partialorder %v766, 0.0
      %vm1085 = vcmp.ge.f32.partialorder %v769, 0.0
      %vm1086 = vcmp.ge.f32.partialorder %v771, 0.0
      %vm1087 = vcmp.ge.f32.partialorder %v774, 0.0
      %vm1088 = vcmp.ge.f32.partialorder %v776, 0.0
      %vm1089 = vcmp.ge.f32.partialorder %v779, 0.0
      %vm1090 = vcmp.ge.f32.partialorder %v781, 0.0
      %vm1091 = vcmp.ge.f32.partialorder %v784, 0.0
      %vm1092 = vcmp.ge.f32.partialorder %v786, 0.0
      %vm1093 = vcmp.ge.f32.partialorder %v789, 0.0
      %vm1094 = vcmp.ge.f32.partialorder %v791, 0.0
      %vm1095 = vcmp.ge.f32.partialorder %v794, 0.0
      %vm1096 = vcmp.ge.f32.partialorder %v796, 0.0
      %vm1097 = vcmp.ge.f32.partialorder %v799, 0.0
      %vm1098 = vcmp.ge.f32.partialorder %v801, 0.0
      %vm1099 = vcmp.ge.f32.partialorder %v804, 0.0
      %vm1100 = vcmp.ge.f32.partialorder %v806, 0.0
      %vm1101 = vcmp.ge.f32.partialorder %v809, 0.0
      %vm1102 = vcmp.ge.f32.partialorder %v811, 0.0
      %vm1103 = vcmp.ge.f32.partialorder %v814, 0.0
      %vm1104 = vcmp.ge.f32.partialorder %v816, 0.0
      %vm1105 = vcmp.ge.f32.partialorder %v819, 0.0
      %vm1106 = vcmp.ge.f32.partialorder %v821, 0.0
      %vm1107 = vcmp.ge.f32.partialorder %v824, 0.0
      %vm1108 = vcmp.ge.f32.partialorder %v826, 0.0
      %vm1109 = vcmp.ge.f32.partialorder %v829, 0.0
      %vm1110 = vcmp.ge.f32.partialorder %v831, 0.0
      %vm1111 = vcmp.ge.f32.partialorder %v834, 0.0
      %vm1112 = vcmp.ge.f32.partialorder %v836, 0.0
      %vm1113 = vcmp.ge.f32.partialorder %v839, 0.0
      %vm1114 = vcmp.ge.f32.partialorder %v841, 0.0
      %vm1115 = vcmp.ge.f32.partialorder %v844, 0.0
      %vm1116 = vcmp.ge.f32.partialorder %v846, 0.0
      %vm1117 = vcmp.ge.f32.partialorder %v849, 0.0
      %vm1118 = vcmp.ge.f32.partialorder %v851, 0.0
      %vm1119 = vcmp.ge.f32.partialorder %v854, 0.0
      %vm1120 = vcmp.ge.f32.partialorder %v856, 0.0
      %vm1121 = vcmp.ge.f32.partialorder %v859, 0.0
      %vm1122 = vcmp.ge.f32.partialorder %v861, 0.0
      %vm1123 = vcmp.ge.f32.partialorder %v864, 0.0
      %vm1124 = vcmp.ge.f32.partialorder %v866, 0.0
      %vm1125 = vcmp.ge.f32.partialorder %v869, 0.0
      %vm1126 = vcmp.ge.f32.partialorder %v871, 0.0
      %vm1127 = vcmp.ge.f32.partialorder %v874, 0.0
      %vm1128 = vcmp.ge.f32.partialorder %v876, 0.0
      %vm1129 = vcmp.ge.f32.partialorder %v879, 0.0
      %vm1130 = vcmp.ge.f32.partialorder %v881, 0.0
      %vm1131 = vcmp.ge.f32.partialorder %v884, 0.0
      %vm1132 = vcmp.ge.f32.partialorder %v886, 0.0
      %vm1133 = vcmp.ge.f32.partialorder %v889, 0.0
      %vm1134 = vcmp.ge.f32.partialorder %v891, 0.0
      %vm1135 = vcmp.ge.f32.partialorder %v894, 0.0
      %vm1136 = vcmp.ge.f32.partialorder %v896, 0.0
      %vm1137 = vcmp.ge.f32.partialorder %v899, 0.0
      %vm1138 = vcmp.ge.f32.partialorder %v901, 0.0
      %vm1139 = vcmp.ge.f32.partialorder %v904, 0.0
      %vm1140 = vcmp.ge.f32.partialorder %v906, 0.0
      %vm1141 = vcmp.ge.f32.partialorder %v909, 0.0
      %vm1142 = vcmp.ge.f32.partialorder %v911, 0.0
      %vm1143 = vcmp.ge.f32.partialorder %v914, 0.0
      %vm1144 = vcmp.ge.f32.partialorder %v916, 0.0
      %vm1145 = vcmp.ge.f32.partialorder %v919, 0.0
      %vm1146 = vcmp.ge.f32.partialorder %v921, 0.0
      %vm1147 = vcmp.ge.f32.partialorder %v924, 0.0
      %vm1148 = vcmp.ge.f32.partialorder %v926, 0.0
      %vm1149 = vcmp.ge.f32.partialorder %v929, 0.0
      %vm1150 = vcmp.ge.f32.partialorder %v931, 0.0
      %vm1151 = vcmp.ge.f32.partialorder %v934, 0.0
      %vm1152 = vcmp.ge.f32.partialorder %v936, 0.0
      %vm1153 = vcmp.ge.f32.partialorder %v939, 0.0
      %vm1154 = vcmp.ge.f32.partialorder %v941, 0.0
      %vm1155 = vcmp.ge.f32.partialorder %v944, 0.0
      %vm1156 = vcmp.ge.f32.partialorder %v946, 0.0
      %vm1157 = vcmp.ge.f32.partialorder %v949, 0.0
      %vm1158 = vcmp.ge.f32.partialorder %v951, 0.0
      %vm1159 = vcmp.ge.f32.partialorder %v954, 0.0
      %vm1160 = vcmp.ge.f32.partialorder %v956, 0.0
      %vm1161 = vcmp.ge.f32.partialorder %v959, 0.0
      %vm1162 = vcmp.ge.f32.partialorder %v961, 0.0
      %vm1163 = vcmp.ge.f32.partialorder %v964, 0.0
      %vm1164 = vcmp.ge.f32.partialorder %v966, 0.0
      %vm1165 = vcmp.ge.f32.partialorder %v969, 0.0
      %vm1166 = vcmp.ge.f32.partialorder %v971, 0.0
      %vm1167 = vcmp.ge.f32.partialorder %v974, 0.0
      %vm1168 = vcmp.ge.f32.partialorder %v976, 0.0
      %vm1169 = vcmp.ge.f32.partialorder %v979, 0.0
      %vm1170 = vcmp.ge.f32.partialorder %v981, 0.0
      %vm1171 = vcmp.ge.f32.partialorder %v984, 0.0
      %vm1172 = vcmp.ge.f32.partialorder %v986, 0.0
      %vm1173 = vcmp.ge.f32.partialorder %v989, 0.0
      %vm1174 = vcmp.ge.f32.partialorder %v991, 0.0
      %vm1175 = vcmp.ge.f32.partialorder %v994, 0.0
      %vm1176 = vcmp.ge.f32.partialorder %v996, 0.0
      %vm1177 = vcmp.ge.f32.partialorder %v999, 0.0
      %vm1178 = vcmp.ge.f32.partialorder %v1001, 0.0
      %vm1179 = vcmp.ge.f32.partialorder %v1004, 0.0
      %vm1180 = vcmp.ge.f32.partialorder %v1006, 0.0
      %vm1181 = vcmp.ge.f32.partialorder %v1009, 0.0
      %vm1182 = vcmp.ge.f32.partialorder %v1011, 0.0
      %vm1183 = vcmp.ge.f32.partialorder %v1014, 0.0
      %vm1184 = vcmp.ge.f32.partialorder %v1016, 0.0
      %vm1185 = vcmp.ge.f32.partialorder %v1019, 0.0
      %vm1186 = vcmp.ge.f32.partialorder %v1021, 0.0
      %vm1187 = vcmp.ge.f32.partialorder %v1024, 0.0
      %vm1188 = vcmp.ge.f32.partialorder %v1026, 0.0
      %vm1189 = vcmp.ge.f32.partialorder %v1029, 0.0
      %vm1190 = vcmp.ge.f32.partialorder %v1031, 0.0
      %vm1191 = vcmp.ge.f32.partialorder %v1034, 0.0
      %vm1192 = vcmp.ge.f32.partialorder %v1036, 0.0
      %vm1193 = vcmp.ge.f32.partialorder %v1039, 0.0
      %vm1194 = vcmp.ge.f32.partialorder %v1041, 0.0
      %vm1195 = vcmp.ge.f32.partialorder %v1044, 0.0
      %vm1196 = vcmp.ge.f32.partialorder %v1046, 0.0
      %vm1197 = vcmp.ge.f32.partialorder %v1049, 0.0
      %vm1198 = vcmp.ge.f32.partialorder %v1051, 0.0
      %vm1199 = vcmp.ge.f32.partialorder %v1054, 0.0
      %vm1200 = vcmp.ge.f32.partialorder %v1056, 0.0
      %vm1201 = vcmp.ge.f32.partialorder %v1059, 0.0
      %vm1202 = vcmp.ge.f32.partialorder %v1061, 0.0
      %vm1203 = vcmp.ge.f32.partialorder %v1064, 0.0
      %vm1204 = vcmp.ge.f32.partialorder %v1066, 0.0
      %vm1205 = vcmp.ge.f32.partialorder %v1069, 0.0
      %vm1206 = vcmp.ge.f32.partialorder %v1071, 0.0
      %vm1207 = vcmp.ge.f32.partialorder %v1074, 0.0
      %vm1208 = vcmp.ge.f32.partialorder %v1076, 0.0
      %vm1209 = vcmp.ge.f32.partialorder %v1079, 0.0
      %vm1210 = vcmp.ge.f32.partialorder %v1081, 0.0
      %v1211 = vmul.f32 %v764, 0.2
      %v1212 = vmul.f32 %v766, 0.2
      %v1213 = vmul.f32 %v769, 0.2
      %v1214 = vmul.f32 %v771, 0.2
      %v1215 = vmul.f32 %v774, 0.2
      %v1216 = vmul.f32 %v776, 0.2
      %v1217 = vmul.f32 %v779, 0.2
      %v1218 = vmul.f32 %v781, 0.2
      %v1219 = vmul.f32 %v784, 0.2
      %v1220 = vmul.f32 %v786, 0.2
      %v1221 = vmul.f32 %v789, 0.2
      %v1222 = vmul.f32 %v791, 0.2
      %v1223 = vmul.f32 %v794, 0.2
      %v1224 = vmul.f32 %v796, 0.2
      %v1225 = vmul.f32 %v799, 0.2
      %v1226 = vmul.f32 %v801, 0.2
      %v1227 = vmul.f32 %v804, 0.2
      %v1228 = vmul.f32 %v806, 0.2
      %v1229 = vmul.f32 %v809, 0.2
      %v1230 = vmul.f32 %v811, 0.2
      %v1231 = vmul.f32 %v814, 0.2
      %v1232 = vmul.f32 %v816, 0.2
      %v1233 = vmul.f32 %v819, 0.2
      %v1234 = vmul.f32 %v821, 0.2
      %v1235 = vmul.f32 %v824, 0.2
      %v1236 = vmul.f32 %v826, 0.2
      %v1237 = vmul.f32 %v829, 0.2
      %v1238 = vmul.f32 %v831, 0.2
      %v1239 = vmul.f32 %v834, 0.2
      %v1240 = vmul.f32 %v836, 0.2
      %v1241 = vmul.f32 %v839, 0.2
      %v1242 = vmul.f32 %v841, 0.2
      %v1243 = vmul.f32 %v844, 0.2
      %v1244 = vmul.f32 %v846, 0.2
      %v1245 = vmul.f32 %v849, 0.2
      %v1246 = vmul.f32 %v851, 0.2
      %v1247 = vmul.f32 %v854, 0.2
      %v1248 = vmul.f32 %v856, 0.2
      %v1249 = vmul.f32 %v859, 0.2
      %v1250 = vmul.f32 %v861, 0.2
      %v1251 = vmul.f32 %v864, 0.2
      %v1252 = vmul.f32 %v866, 0.2
      %v1253 = vmul.f32 %v869, 0.2
      %v1254 = vmul.f32 %v871, 0.2
      %v1255 = vmul.f32 %v874, 0.2
      %v1256 = vmul.f32 %v876, 0.2
      %v1257 = vmul.f32 %v879, 0.2
      %v1258 = vmul.f32 %v881, 0.2
      %v1259 = vmul.f32 %v884, 0.2
      %v1260 = vmul.f32 %v886, 0.2
      %v1261 = vmul.f32 %v889, 0.2
      %v1262 = vmul.f32 %v891, 0.2
      %v1263 = vmul.f32 %v894, 0.2
      %v1264 = vmul.f32 %v896, 0.2
      %v1265 = vmul.f32 %v899, 0.2
      %v1266 = vmul.f32 %v901, 0.2
      %v1267 = vmul.f32 %v904, 0.2
      %v1268 = vmul.f32 %v906, 0.2
      %v1269 = vmul.f32 %v909, 0.2
      %v1270 = vmul.f32 %v911, 0.2
      %v1271 = vmul.f32 %v914, 0.2
      %v1272 = vmul.f32 %v916, 0.2
      %v1273 = vmul.f32 %v919, 0.2
      %v1274 = vmul.f32 %v921, 0.2
      %v1275 = vmul.f32 %v924, 0.2
      %v1276 = vmul.f32 %v926, 0.2
      %v1277 = vmul.f32 %v929, 0.2
      %v1278 = vmul.f32 %v931, 0.2
      %v1279 = vmul.f32 %v934, 0.2
      %v1280 = vmul.f32 %v936, 0.2
      %v1281 = vmul.f32 %v939, 0.2
      %v1282 = vmul.f32 %v941, 0.2
      %v1283 = vmul.f32 %v944, 0.2
      %v1284 = vmul.f32 %v946, 0.2
      %v1285 = vmul.f32 %v949, 0.2
      %v1286 = vmul.f32 %v951, 0.2
      %v1287 = vmul.f32 %v954, 0.2
      %v1288 = vmul.f32 %v956, 0.2
      %v1289 = vmul.f32 %v959, 0.2
      %v1290 = vmul.f32 %v961, 0.2
      %v1291 = vmul.f32 %v964, 0.2
      %v1292 = vmul.f32 %v966, 0.2
      %v1293 = vmul.f32 %v969, 0.2
      %v1294 = vmul.f32 %v971, 0.2
      %v1295 = vmul.f32 %v974, 0.2
      %v1296 = vmul.f32 %v976, 0.2
      %v1297 = vmul.f32 %v979, 0.2
      %v1298 = vmul.f32 %v981, 0.2
      %v1299 = vmul.f32 %v984, 0.2
      %v1300 = vmul.f32 %v986, 0.2
      %v1301 = vmul.f32 %v989, 0.2
      %v1302 = vmul.f32 %v991, 0.2
      %v1303 = vmul.f32 %v994, 0.2
      %v1304 = vmul.f32 %v996, 0.2
      %v1305 = vmul.f32 %v999, 0.2
      %v1306 = vmul.f32 %v1001, 0.2
      %v1307 = vmul.f32 %v1004, 0.2
      %v1308 = vmul.f32 %v1006, 0.2
      %v1309 = vmul.f32 %v1009, 0.2
      %v1310 = vmul.f32 %v1011, 0.2
      %v1311 = vmul.f32 %v1014, 0.2
      %v1312 = vmul.f32 %v1016, 0.2
      %v1313 = vmul.f32 %v1019, 0.2
      %v1314 = vmul.f32 %v1021, 0.2
      %v1315 = vmul.f32 %v1024, 0.2
      %v1316 = vmul.f32 %v1026, 0.2
      %v1317 = vmul.f32 %v1029, 0.2
      %v1318 = vmul.f32 %v1031, 0.2
      %v1319 = vmul.f32 %v1034, 0.2
      %v1320 = vmul.f32 %v1036, 0.2
      %v1321 = vmul.f32 %v1039, 0.2
      %v1322 = vmul.f32 %v1041, 0.2
      %v1323 = vmul.f32 %v1044, 0.2
      %v1324 = vmul.f32 %v1046, 0.2
      %v1325 = vmul.f32 %v1049, 0.2
      %v1326 = vmul.f32 %v1051, 0.2
      %v1327 = vmul.f32 %v1054, 0.2
      %v1328 = vmul.f32 %v1056, 0.2
      %v1329 = vmul.f32 %v1059, 0.2
      %v1330 = vmul.f32 %v1061, 0.2
      %v1331 = vmul.f32 %v1064, 0.2
      %v1332 = vmul.f32 %v1066, 0.2
      %v1333 = vmul.f32 %v1069, 0.2
      %v1334 = vmul.f32 %v1071, 0.2
      %v1335 = vmul.f32 %v1074, 0.2
      %v1336 = vmul.f32 %v1076, 0.2
      %v1337 = vmul.f32 %v1079, 0.2
      %v1338 = vmul.f32 %v1081, 0.2
      %v1339 = vsel %vm1083, %v764, %v1211
      %v1340 = vsel %vm1084, %v766, %v1212
      %v1341 = vsel %vm1085, %v769, %v1213
      %v1342 = vsel %vm1086, %v771, %v1214
      %v1343 = vsel %vm1087, %v774, %v1215
      %v1344 = vsel %vm1088, %v776, %v1216
      %v1345 = vsel %vm1089, %v779, %v1217
      %v1346 = vsel %vm1090, %v781, %v1218
      %v1347 = vsel %vm1091, %v784, %v1219
      %v1348 = vsel %vm1092, %v786, %v1220
      %v1349 = vsel %vm1093, %v789, %v1221
      %v1350 = vsel %vm1094, %v791, %v1222
      %v1351 = vsel %vm1095, %v794, %v1223
      %v1352 = vsel %vm1096, %v796, %v1224
      %v1353 = vsel %vm1097, %v799, %v1225
      %v1354 = vsel %vm1098, %v801, %v1226
      %v1355 = vsel %vm1099, %v804, %v1227
      %v1356 = vsel %vm1100, %v806, %v1228
      %v1357 = vsel %vm1101, %v809, %v1229
      %v1358 = vsel %vm1102, %v811, %v1230
      %v1359 = vsel %vm1103, %v814, %v1231
      %v1360 = vsel %vm1104, %v816, %v1232
      %v1361 = vsel %vm1105, %v819, %v1233
      %v1362 = vsel %vm1106, %v821, %v1234
      %v1363 = vsel %vm1107, %v824, %v1235
      %v1364 = vsel %vm1108, %v826, %v1236
      %v1365 = vsel %vm1109, %v829, %v1237
      %v1366 = vsel %vm1110, %v831, %v1238
      %v1367 = vsel %vm1111, %v834, %v1239
      %v1368 = vsel %vm1112, %v836, %v1240
      %v1369 = vsel %vm1113, %v839, %v1241
      %v1370 = vsel %vm1114, %v841, %v1242
      %v1371 = vsel %vm1115, %v844, %v1243
      %v1372 = vsel %vm1116, %v846, %v1244
      %v1373 = vsel %vm1117, %v849, %v1245
      %v1374 = vsel %vm1118, %v851, %v1246
      %v1375 = vsel %vm1119, %v854, %v1247
      %v1376 = vsel %vm1120, %v856, %v1248
      %v1377 = vsel %vm1121, %v859, %v1249
      %v1378 = vsel %vm1122, %v861, %v1250
      %v1379 = vsel %vm1123, %v864, %v1251
      %v1380 = vsel %vm1124, %v866, %v1252
      %v1381 = vsel %vm1125, %v869, %v1253
      %v1382 = vsel %vm1126, %v871, %v1254
      %v1383 = vsel %vm1127, %v874, %v1255
      %v1384 = vsel %vm1128, %v876, %v1256
      %v1385 = vsel %vm1129, %v879, %v1257
      %v1386 = vsel %vm1130, %v881, %v1258
      %v1387 = vsel %vm1131, %v884, %v1259
      %v1388 = vsel %vm1132, %v886, %v1260
      %v1389 = vsel %vm1133, %v889, %v1261
      %v1390 = vsel %vm1134, %v891, %v1262
      %v1391 = vsel %vm1135, %v894, %v1263
      %v1392 = vsel %vm1136, %v896, %v1264
      %v1393 = vsel %vm1137, %v899, %v1265
      %v1394 = vsel %vm1138, %v901, %v1266
      %v1395 = vsel %vm1139, %v904, %v1267
      %v1396 = vsel %vm1140, %v906, %v1268
      %v1397 = vsel %vm1141, %v909, %v1269
      %v1398 = vsel %vm1142, %v911, %v1270
      %v1399 = vsel %vm1143, %v914, %v1271
      %v1400 = vsel %vm1144, %v916, %v1272
      %v1401 = vsel %vm1145, %v919, %v1273
      %v1402 = vsel %vm1146, %v921, %v1274
      %v1403 = vsel %vm1147, %v924, %v1275
      %v1404 = vsel %vm1148, %v926, %v1276
      %v1405 = vsel %vm1149, %v929, %v1277
      %v1406 = vsel %vm1150, %v931, %v1278
      %v1407 = vsel %vm1151, %v934, %v1279
      %v1408 = vsel %vm1152, %v936, %v1280
      %v1409 = vsel %vm1153, %v939, %v1281
      %v1410 = vsel %vm1154, %v941, %v1282
      %v1411 = vsel %vm1155, %v944, %v1283
      %v1412 = vsel %vm1156, %v946, %v1284
      %v1413 = vsel %vm1157, %v949, %v1285
      %v1414 = vsel %vm1158, %v951, %v1286
      %v1415 = vsel %vm1159, %v954, %v1287
      %v1416 = vsel %vm1160, %v956, %v1288
      %v1417 = vsel %vm1161, %v959, %v1289
      %v1418 = vsel %vm1162, %v961, %v1290
      %v1419 = vsel %vm1163, %v964, %v1291
      %v1420 = vsel %vm1164, %v966, %v1292
      %v1421 = vsel %vm1165, %v969, %v1293
      %v1422 = vsel %vm1166, %v971, %v1294
      %v1423 = vsel %vm1167, %v974, %v1295
      %v1424 = vsel %vm1168, %v976, %v1296
      %v1425 = vsel %vm1169, %v979, %v1297
      %v1426 = vsel %vm1170, %v981, %v1298
      %v1427 = vsel %vm1171, %v984, %v1299
      %v1428 = vsel %vm1172, %v986, %v1300
      %v1429 = vsel %vm1173, %v989, %v1301
      %v1430 = vsel %vm1174, %v991, %v1302
      %v1431 = vsel %vm1175, %v994, %v1303
      %v1432 = vsel %vm1176, %v996, %v1304
      %v1433 = vsel %vm1177, %v999, %v1305
      %v1434 = vsel %vm1178, %v1001, %v1306
      %v1435 = vsel %vm1179, %v1004, %v1307
      %v1436 = vsel %vm1180, %v1006, %v1308
      %v1437 = vsel %vm1181, %v1009, %v1309
      %v1438 = vsel %vm1182, %v1011, %v1310
      %v1439 = vsel %vm1183, %v1014, %v1311
      %v1440 = vsel %vm1184, %v1016, %v1312
      %v1441 = vsel %vm1185, %v1019, %v1313
      %v1442 = vsel %vm1186, %v1021, %v1314
      %v1443 = vsel %vm1187, %v1024, %v1315
      %v1444 = vsel %vm1188, %v1026, %v1316
      %v1445 = vsel %vm1189, %v1029, %v1317
      %v1446 = vsel %vm1190, %v1031, %v1318
      %v1447 = vsel %vm1191, %v1034, %v1319
      %v1448 = vsel %vm1192, %v1036, %v1320
      %v1449 = vsel %vm1193, %v1039, %v1321
      %v1450 = vsel %vm1194, %v1041, %v1322
      %v1451 = vsel %vm1195, %v1044, %v1323
      %v1452 = vsel %vm1196, %v1046, %v1324
      %v1453 = vsel %vm1197, %v1049, %v1325
      %v1454 = vsel %vm1198, %v1051, %v1326
      %v1455 = vsel %vm1199, %v1054, %v1327
      %v1456 = vsel %vm1200, %v1056, %v1328
      %v1457 = vsel %vm1201, %v1059, %v1329
      %v1458 = vsel %vm1202, %v1061, %v1330
      %v1459 = vsel %vm1203, %v1064, %v1331
      %v1460 = vsel %vm1204, %v1066, %v1332
      %v1461 = vsel %vm1205, %v1069, %v1333
      %v1462 = vsel %vm1206, %v1071, %v1334
      %v1463 = vsel %vm1207, %v1074, %v1335
      %v1464 = vsel %vm1208, %v1076, %v1336
      %v1465 = vsel %vm1209, %v1079, %v1337
      %v1466 = vsel %vm1210, %v1081, %v1338
      %v1467 = vpack.c.bf16 %v1339, %v1339
      %v1468 = vpack.c.bf16 %v1340, %v1340
      %v1469 = vpack.c.bf16 %v1341, %v1341
      %v1470 = vpack.c.bf16 %v1342, %v1342
      %v1471 = vpack.c.bf16 %v1343, %v1343
      %v1472 = vpack.c.bf16 %v1344, %v1344
      %v1473 = vpack.c.bf16 %v1345, %v1345
      %v1474 = vpack.c.bf16 %v1346, %v1346
      %v1475 = vpack.c.bf16 %v1347, %v1347
      %v1476 = vpack.c.bf16 %v1348, %v1348
      %v1477 = vpack.c.bf16 %v1349, %v1349
      %v1478 = vpack.c.bf16 %v1350, %v1350
      %v1479 = vpack.c.bf16 %v1351, %v1351
      %v1480 = vpack.c.bf16 %v1352, %v1352
      %v1481 = vpack.c.bf16 %v1353, %v1353
      %v1482 = vpack.c.bf16 %v1354, %v1354
      %v1483 = vpack.c.bf16 %v1355, %v1355
      %v1484 = vpack.c.bf16 %v1356, %v1356
      %v1485 = vpack.c.bf16 %v1357, %v1357
      %v1486 = vpack.c.bf16 %v1358, %v1358
      %v1487 = vpack.c.bf16 %v1359, %v1359
      %v1488 = vpack.c.bf16 %v1360, %v1360
      %v1489 = vpack.c.bf16 %v1361, %v1361
      %v1490 = vpack.c.bf16 %v1362, %v1362
      %v1491 = vpack.c.bf16 %v1363, %v1363
      %v1492 = vpack.c.bf16 %v1364, %v1364
      %v1493 = vpack.c.bf16 %v1365, %v1365
      %v1494 = vpack.c.bf16 %v1366, %v1366
      %v1495 = vpack.c.bf16 %v1367, %v1367
      %v1496 = vpack.c.bf16 %v1368, %v1368
      %v1497 = vpack.c.bf16 %v1369, %v1369
      %v1498 = vpack.c.bf16 %v1370, %v1370
      %v1499 = vpack.c.bf16 %v1371, %v1371
      %v1500 = vpack.c.bf16 %v1372, %v1372
      %v1501 = vpack.c.bf16 %v1373, %v1373
      %v1502 = vpack.c.bf16 %v1374, %v1374
      %v1503 = vpack.c.bf16 %v1375, %v1375
      %v1504 = vpack.c.bf16 %v1376, %v1376
      %v1505 = vpack.c.bf16 %v1377, %v1377
      %v1506 = vpack.c.bf16 %v1378, %v1378
      %v1507 = vpack.c.bf16 %v1379, %v1379
      %v1508 = vpack.c.bf16 %v1380, %v1380
      %v1509 = vpack.c.bf16 %v1381, %v1381
      %v1510 = vpack.c.bf16 %v1382, %v1382
      %v1511 = vpack.c.bf16 %v1383, %v1383
      %v1512 = vpack.c.bf16 %v1384, %v1384
      %v1513 = vpack.c.bf16 %v1385, %v1385
      %v1514 = vpack.c.bf16 %v1386, %v1386
      %v1515 = vpack.c.bf16 %v1387, %v1387
      %v1516 = vpack.c.bf16 %v1388, %v1388
      %v1517 = vpack.c.bf16 %v1389, %v1389
      %v1518 = vpack.c.bf16 %v1390, %v1390
      %v1519 = vpack.c.bf16 %v1391, %v1391
      %v1520 = vpack.c.bf16 %v1392, %v1392
      %v1521 = vpack.c.bf16 %v1393, %v1393
      %v1522 = vpack.c.bf16 %v1394, %v1394
      %v1523 = vpack.c.bf16 %v1395, %v1395
      %v1524 = vpack.c.bf16 %v1396, %v1396
      %v1525 = vpack.c.bf16 %v1397, %v1397
      %v1526 = vpack.c.bf16 %v1398, %v1398
      %v1527 = vpack.c.bf16 %v1399, %v1399
      %v1528 = vpack.c.bf16 %v1400, %v1400
      %v1529 = vpack.c.bf16 %v1401, %v1401
      %v1530 = vpack.c.bf16 %v1402, %v1402
      %v1531 = vpack.c.bf16 %v1403, %v1403
      %v1532 = vpack.c.bf16 %v1404, %v1404
      %v1533 = vpack.c.bf16 %v1405, %v1405
      %v1534 = vpack.c.bf16 %v1406, %v1406
      %v1535 = vpack.c.bf16 %v1407, %v1407
      %v1536 = vpack.c.bf16 %v1408, %v1408
      %v1537 = vpack.c.bf16 %v1409, %v1409
      %v1538 = vpack.c.bf16 %v1410, %v1410
      %v1539 = vpack.c.bf16 %v1411, %v1411
      %v1540 = vpack.c.bf16 %v1412, %v1412
      %v1541 = vpack.c.bf16 %v1413, %v1413
      %v1542 = vpack.c.bf16 %v1414, %v1414
      %v1543 = vpack.c.bf16 %v1415, %v1415
      %v1544 = vpack.c.bf16 %v1416, %v1416
      %v1545 = vpack.c.bf16 %v1417, %v1417
      %v1546 = vpack.c.bf16 %v1418, %v1418
      %v1547 = vpack.c.bf16 %v1419, %v1419
      %v1548 = vpack.c.bf16 %v1420, %v1420
      %v1549 = vpack.c.bf16 %v1421, %v1421
      %v1550 = vpack.c.bf16 %v1422, %v1422
      %v1551 = vpack.c.bf16 %v1423, %v1423
      %v1552 = vpack.c.bf16 %v1424, %v1424
      %v1553 = vpack.c.bf16 %v1425, %v1425
      %v1554 = vpack.c.bf16 %v1426, %v1426
      %v1555 = vpack.c.bf16 %v1427, %v1427
      %v1556 = vpack.c.bf16 %v1428, %v1428
      %v1557 = vpack.c.bf16 %v1429, %v1429
      %v1558 = vpack.c.bf16 %v1430, %v1430
      %v1559 = vpack.c.bf16 %v1431, %v1431
      %v1560 = vpack.c.bf16 %v1432, %v1432
      %v1561 = vpack.c.bf16 %v1433, %v1433
      %v1562 = vpack.c.bf16 %v1434, %v1434
      %v1563 = vpack.c.bf16 %v1435, %v1435
      %v1564 = vpack.c.bf16 %v1436, %v1436
      %v1565 = vpack.c.bf16 %v1437, %v1437
      %v1566 = vpack.c.bf16 %v1438, %v1438
      %v1567 = vpack.c.bf16 %v1439, %v1439
      %v1568 = vpack.c.bf16 %v1440, %v1440
      %v1569 = vpack.c.bf16 %v1441, %v1441
      %v1570 = vpack.c.bf16 %v1442, %v1442
      %v1571 = vpack.c.bf16 %v1443, %v1443
      %v1572 = vpack.c.bf16 %v1444, %v1444
      %v1573 = vpack.c.bf16 %v1445, %v1445
      %v1574 = vpack.c.bf16 %v1446, %v1446
      %v1575 = vpack.c.bf16 %v1447, %v1447
      %v1576 = vpack.c.bf16 %v1448, %v1448
      %v1577 = vpack.c.bf16 %v1449, %v1449
      %v1578 = vpack.c.bf16 %v1450, %v1450
      %v1579 = vpack.c.bf16 %v1451, %v1451
      %v1580 = vpack.c.bf16 %v1452, %v1452
      %v1581 = vpack.c.bf16 %v1453, %v1453
      %v1582 = vpack.c.bf16 %v1454, %v1454
      %v1583 = vpack.c.bf16 %v1455, %v1455
      %v1584 = vpack.c.bf16 %v1456, %v1456
      %v1585 = vpack.c.bf16 %v1457, %v1457
      %v1586 = vpack.c.bf16 %v1458, %v1458
      %v1587 = vpack.c.bf16 %v1459, %v1459
      %v1588 = vpack.c.bf16 %v1460, %v1460
      %v1589 = vpack.c.bf16 %v1461, %v1461
      %v1590 = vpack.c.bf16 %v1462, %v1462
      %v1591 = vpack.c.bf16 %v1463, %v1463
      %v1592 = vpack.c.bf16 %v1464, %v1464
      %v1593 = vpack.c.bf16 %v1465, %v1465
      %v1594 = vpack.c.bf16 %v1466, %v1466
      %1595 = vst [vmem:[%s172] sm:$0xf] %v1467
      %1596 = vst [vmem:[%s172 + $0x4] sm:$0xf] %v1468
      %1597 = vst [vmem:[%s172 + $0x8] sm:$0xf] %v1469
      %1598 = vst [vmem:[%s172 + $0xc] sm:$0xf] %v1470
      %1599 = vst [vmem:[%s172 + $0x10] sm:$0xf] %v1471
      %1600 = vst [vmem:[%s172 + $0x14] sm:$0xf] %v1472
      %1601 = vst [vmem:[%s172 + $0x18] sm:$0xf] %v1473
      %1602 = vst [vmem:[%s172 + $0x1c] sm:$0xf] %v1474
      %1603 = vst [vmem:[%s172 + $0x20] sm:$0xf] %v1475
      %1604 = vst [vmem:[%s172 + $0x24] sm:$0xf] %v1476
      %1605 = vst [vmem:[%s172 + $0x28] sm:$0xf] %v1477
      %1606 = vst [vmem:[%s172 + $0x2c] sm:$0xf] %v1478
      %1607 = vst [vmem:[%s172 + $0x30] sm:$0xf] %v1479
      %1608 = vst [vmem:[%s172 + $0x34] sm:$0xf] %v1480
      %1609 = vst [vmem:[%s172 + $0x38] sm:$0xf] %v1481
      %1610 = vst [vmem:[%s172 + $0x3c] sm:$0xf] %v1482
      %1611 = vst [vmem:[%s172 + $0x40] sm:$0xf] %v1483
      %1612 = vst [vmem:[%s172 + $0x44] sm:$0xf] %v1484
      %1613 = vst [vmem:[%s172 + $0x48] sm:$0xf] %v1485
      %1614 = vst [vmem:[%s172 + $0x4c] sm:$0xf] %v1486
      %1615 = vst [vmem:[%s172 + $0x50] sm:$0xf] %v1487
      %1616 = vst [vmem:[%s172 + $0x54] sm:$0xf] %v1488
      %1617 = vst [vmem:[%s172 + $0x58] sm:$0xf] %v1489
      %1618 = vst [vmem:[%s172 + $0x5c] sm:$0xf] %v1490
      %1619 = vst [vmem:[%s172 + $0x60] sm:$0xf] %v1491
      %1620 = vst [vmem:[%s172 + $0x64] sm:$0xf] %v1492
      %1621 = vst [vmem:[%s172 + $0x68] sm:$0xf] %v1493
      %1622 = vst [vmem:[%s172 + $0x6c] sm:$0xf] %v1494
      %1623 = vst [vmem:[%s172 + $0x70] sm:$0xf] %v1495
      %1624 = vst [vmem:[%s172 + $0x74] sm:$0xf] %v1496
      %1625 = vst [vmem:[%s172 + $0x78] sm:$0xf] %v1497
      %1626 = vst [vmem:[%s172 + $0x7c] sm:$0xf] %v1498
      %1627 = vst [vmem:[%s172 + $0x80] sm:$0xf] %v1499
      %1628 = vst [vmem:[%s172 + $0x84] sm:$0xf] %v1500
      %1629 = vst [vmem:[%s172 + $0x88] sm:$0xf] %v1501
      %1630 = vst [vmem:[%s172 + $0x8c] sm:$0xf] %v1502
      %1631 = vst [vmem:[%s172 + $0x90] sm:$0xf] %v1503
      %1632 = vst [vmem:[%s172 + $0x94] sm:$0xf] %v1504
      %1633 = vst [vmem:[%s172 + $0x98] sm:$0xf] %v1505
      %1634 = vst [vmem:[%s172 + $0x9c] sm:$0xf] %v1506
      %1635 = vst [vmem:[%s172 + $0xa0] sm:$0xf] %v1507
      %1636 = vst [vmem:[%s172 + $0xa4] sm:$0xf] %v1508
      %1637 = vst [vmem:[%s172 + $0xa8] sm:$0xf] %v1509
      %1638 = vst [vmem:[%s172 + $0xac] sm:$0xf] %v1510
      %1639 = vst [vmem:[%s172 + $0xb0] sm:$0xf] %v1511
      %1640 = vst [vmem:[%s172 + $0xb4] sm:$0xf] %v1512
      %1641 = vst [vmem:[%s172 + $0xb8] sm:$0xf] %v1513
      %1642 = vst [vmem:[%s172 + $0xbc] sm:$0xf] %v1514
      %1643 = vst [vmem:[%s172 + $0xc0] sm:$0xf] %v1515
      %1644 = vst [vmem:[%s172 + $0xc4] sm:$0xf] %v1516
      %1645 = vst [vmem:[%s172 + $0xc8] sm:$0xf] %v1517
      %1646 = vst [vmem:[%s172 + $0xcc] sm:$0xf] %v1518
      %1647 = vst [vmem:[%s172 + $0xd0] sm:$0xf] %v1519
      %1648 = vst [vmem:[%s172 + $0xd4] sm:$0xf] %v1520
      %1649 = vst [vmem:[%s172 + $0xd8] sm:$0xf] %v1521
      %1650 = vst [vmem:[%s172 + $0xdc] sm:$0xf] %v1522
      %1651 = vst [vmem:[%s172 + $0xe0] sm:$0xf] %v1523
      %1652 = vst [vmem:[%s172 + $0xe4] sm:$0xf] %v1524
      %1653 = vst [vmem:[%s172 + $0xe8] sm:$0xf] %v1525
      %1654 = vst [vmem:[%s172 + $0xec] sm:$0xf] %v1526
      %1655 = vst [vmem:[%s172 + $0xf0] sm:$0xf] %v1527
      %1656 = vst [vmem:[%s172 + $0xf4] sm:$0xf] %v1528
      %1657 = vst [vmem:[%s172 + $0xf8] sm:$0xf] %v1529
      %1658 = vst [vmem:[%s172 + $0xfc] sm:$0xf] %v1530
      %1659 = vst [vmem:[%s172 + $0x100] sm:$0xf] %v1531
      %1660 = vst [vmem:[%s172 + $0x104] sm:$0xf] %v1532
      %1661 = vst [vmem:[%s172 + $0x108] sm:$0xf] %v1533
      %1662 = vst [vmem:[%s172 + $0x10c] sm:$0xf] %v1534
      %1663 = vst [vmem:[%s172 + $0x110] sm:$0xf] %v1535
      %1664 = vst [vmem:[%s172 + $0x114] sm:$0xf] %v1536
      %1665 = vst [vmem:[%s172 + $0x118] sm:$0xf] %v1537
      %1666 = vst [vmem:[%s172 + $0x11c] sm:$0xf] %v1538
      %1667 = vst [vmem:[%s172 + $0x120] sm:$0xf] %v1539
      %1668 = vst [vmem:[%s172 + $0x124] sm:$0xf] %v1540
      %1669 = vst [vmem:[%s172 + $0x128] sm:$0xf] %v1541
      %1670 = vst [vmem:[%s172 + $0x12c] sm:$0xf] %v1542
      %1671 = vst [vmem:[%s172 + $0x130] sm:$0xf] %v1543
      %1672 = vst [vmem:[%s172 + $0x134] sm:$0xf] %v1544
      %1673 = vst [vmem:[%s172 + $0x138] sm:$0xf] %v1545
      %1674 = vst [vmem:[%s172 + $0x13c] sm:$0xf] %v1546
      %1675 = vst [vmem:[%s172 + $0x140] sm:$0xf] %v1547
      %1676 = vst [vmem:[%s172 + $0x144] sm:$0xf] %v1548
      %1677 = vst [vmem:[%s172 + $0x148] sm:$0xf] %v1549
      %1678 = vst [vmem:[%s172 + $0x14c] sm:$0xf] %v1550
      %1679 = vst [vmem:[%s172 + $0x150] sm:$0xf] %v1551
      %1680 = vst [vmem:[%s172 + $0x154] sm:$0xf] %v1552
      %1681 = vst [vmem:[%s172 + $0x158] sm:$0xf] %v1553
      %1682 = vst [vmem:[%s172 + $0x15c] sm:$0xf] %v1554
      %1683 = vst [vmem:[%s172 + $0x160] sm:$0xf] %v1555
      %1684 = vst [vmem:[%s172 + $0x164] sm:$0xf] %v1556
      %1685 = vst [vmem:[%s172 + $0x168] sm:$0xf] %v1557
      %1686 = vst [vmem:[%s172 + $0x16c] sm:$0xf] %v1558
      %1687 = vst [vmem:[%s172 + $0x170] sm:$0xf] %v1559
      %1688 = vst [vmem:[%s172 + $0x174] sm:$0xf] %v1560
      %1689 = vst [vmem:[%s172 + $0x178] sm:$0xf] %v1561
      %1690 = vst [vmem:[%s172 + $0x17c] sm:$0xf] %v1562
      %1691 = vst [vmem:[%s172 + $0x180] sm:$0xf] %v1563
      %1692 = vst [vmem:[%s172 + $0x184] sm:$0xf] %v1564
      %1693 = vst [vmem:[%s172 + $0x188] sm:$0xf] %v1565
      %1694 = vst [vmem:[%s172 + $0x18c] sm:$0xf] %v1566
      %1695 = vst [vmem:[%s172 + $0x190] sm:$0xf] %v1567
      %1696 = vst [vmem:[%s172 + $0x194] sm:$0xf] %v1568
      %1697 = vst [vmem:[%s172 + $0x198] sm:$0xf] %v1569
      %1698 = vst [vmem:[%s172 + $0x19c] sm:$0xf] %v1570
      %1699 = vst [vmem:[%s172 + $0x1a0] sm:$0xf] %v1571
      %1700 = vst [vmem:[%s172 + $0x1a4] sm:$0xf] %v1572
      %1701 = vst [vmem:[%s172 + $0x1a8] sm:$0xf] %v1573
      %1702 = vst [vmem:[%s172 + $0x1ac] sm:$0xf] %v1574
      %1703 = vst [vmem:[%s172 + $0x1b0] sm:$0xf] %v1575
      %1704 = vst [vmem:[%s172 + $0x1b4] sm:$0xf] %v1576
      %1705 = vst [vmem:[%s172 + $0x1b8] sm:$0xf] %v1577
      %1706 = vst [vmem:[%s172 + $0x1bc] sm:$0xf] %v1578
      %1707 = vst [vmem:[%s172 + $0x1c0] sm:$0xf] %v1579
      %1708 = vst [vmem:[%s172 + $0x1c4] sm:$0xf] %v1580
      %1709 = vst [vmem:[%s172 + $0x1c8] sm:$0xf] %v1581
      %1710 = vst [vmem:[%s172 + $0x1cc] sm:$0xf] %v1582
      %1711 = vst [vmem:[%s172 + $0x1d0] sm:$0xf] %v1583
      %1712 = vst [vmem:[%s172 + $0x1d4] sm:$0xf] %v1584
      %1713 = vst [vmem:[%s172 + $0x1d8] sm:$0xf] %v1585
      %1714 = vst [vmem:[%s172 + $0x1dc] sm:$0xf] %v1586
      %1715 = vst [vmem:[%s172 + $0x1e0] sm:$0xf] %v1587
      %1716 = vst [vmem:[%s172 + $0x1e4] sm:$0xf] %v1588
      %1717 = vst [vmem:[%s172 + $0x1e8] sm:$0xf] %v1589
      %1718 = vst [vmem:[%s172 + $0x1ec] sm:$0xf] %v1590
      %1719 = vst [vmem:[%s172 + $0x1f0] sm:$0xf] %v1591
      %1720 = vst [vmem:[%s172 + $0x1f4] sm:$0xf] %v1592
      %1721 = vst [vmem:[%s172 + $0x1f8] sm:$0xf] %v1593
      %1722 = vst [vmem:[%s172 + $0x1fc] sm:$0xf] %v1594
      %s1723 = smul.u32 128, %s14
      %p1724 = scmp.lt.s32.totalorder %s1723, 255
      %s1725 = scalar_select %p1724, %s1723, 255
      %s1726 = smul.addr %s1725, 4
      %s1727 = scalar_lea.vmem %s3, %s1726
      // Predicated region
      $region33: #{_lambda_.4} parent=31 // pred_check
        %p1728 = pneg %p100
      $region34: #{_lambda_.4} parent=31 // pred_check_branch
        %1730 = sbr.rel (%p1728) target = $region36
      $region35: #{_lambda_.4} parent=31 // pred_region
        %s1731 = smul.u32 128, %s14
      $region36: #{_lambda_.4} parent=31 // pred_fallthru
        _
    $region32: #{_lambda_.4} parent=5 // pred_fallthru
      _
    %p1732 = scmp.le.s32.totalorder 2, %s9
    // Predicated region
    $region37: #{_lambda_.4} parent=5 // pred_check
      %p1733 = pneg %p1732
    $region38: #{_lambda_.4} parent=5 // pred_check_branch
      %1735 = sbr.rel (%p1733) target = $region40
    $region39: #{_lambda_.4} parent=5 // pred_region
      %s1736 = ssub.s32 %s9, 2
      // Predicated region
      $region41: #{_lambda_.4} parent=39 // pred_check
        %p1737 = pneg %p106
      $region42: #{_lambda_.4} parent=39 // pred_check_branch
        %1739 = sbr.rel (%p1737) target = $region44
      $region43: #{_lambda_.4} parent=39 // pred_region
        %s1740 = smul.u32 128, %s15
        %p1741 = scmp.lt.s32.totalorder %s1740, 255
        %s1742 = scalar_select %p1741, %s1740, 255
        %s1743 = smul.addr %s1742, 4
        %s1744 = scalar_lea.vmem %s3, %s1743
      $region44: #{_lambda_.4} parent=39 // pred_fallthru
        _
    $region40: #{_lambda_.4} parent=5 // pred_fallthru
      _
  $region6: #{_lambda_.4} parent=0 // loop_footer
    %s13 = sadd.s32 1, %s9
  $region7: #{_lambda_.4} parent=0 // loop_footer_branch
    %8 = sbr.rel target = $region3
  $region8: #{_lambda_.4} parent=0 // loop_exit
    _

// kernel: _lambda_.5
$region0: #{_lambda_.5}
  #allocation0 [shape = 'u32[]', space=smem, size = 0x4, offset = 0x4, fixed_abs, tag = 'smem constant byte address 0x4 - core index']
  #allocation1 [shape = 'u32[72,128]{1,0:T(1,128)}', space=vmem, size = 0x9000, scoped, tag = 'internal scratch']
  #allocation2 [shape = 'f32[512,128]{1,0:T(8,128)}', space=vmem, size = 0x40000, scoped, tag = 'scratch operand']
  #allocation3 [shape = 'f32[1,128]{1,0:T(1,128)}', space=vmem, size = 0x200, scoped, tag = 'scratch operand']
  #allocation4 [shape = 'f32[1,128]{1,0:T(1,128)}', space=vmem, size = 0x200, scoped, tag = 'scratch operand']
  %s0 = inlined_call_operand.vmem [shape: bf16[512,128], index: 0, kind: input, shape index: {}]
  %s1 = inlined_call_operand.vmem [shape: bf16[128,128], index: 1, kind: input, shape index: {}]
  %s2 = inlined_call_operand.vmem [shape: f32[1,128], index: 2, kind: input, shape index: {}]
  %s3 = inlined_call_operand.vmem [shape: f32[1,128], index: 3, kind: input, shape index: {}]
  %s4 = inlined_call_operand.vmem [shape: f32[1,128], index: 4, kind: input, shape index: {}]
  %s5 = inlined_call_operand.vmem [shape: bf16[512,128], index: 5, kind: output, shape index: {}]
  %s6 = sld [smem:[#allocation0]]
  $region38: #{_lambda_.5} parent=0
    _
  %s8 = ssub.s32 1, %s6
  %s9 = scalar_select 0, %s8, %s6
  // Predicated region
  $region2: #{_lambda_.5} parent=0 // pred_check
    _
  $region3: #{_lambda_.5} parent=0 // pred_check_branch
    %11 = sbr.rel (0) target = $region5
  $region4: #{_lambda_.5} parent=0 // pred_region
    _
  $region5: #{_lambda_.5} parent=0 // pred_fallthru
    _
  // Predicated region
  $region6: #{_lambda_.5} parent=0 // pred_check
    _
  $region7: #{_lambda_.5} parent=0 // pred_check_branch
    %13 = sbr.rel (0) target = $region9
  $region8: #{_lambda_.5} parent=0 // pred_region
    _
  $region9: #{_lambda_.5} parent=0 // pred_fallthru
    _
  // Predicated region
  $region10: #{_lambda_.5} parent=0 // pred_check
    _
  $region11: #{_lambda_.5} parent=0 // pred_check_branch
    %15 = sbr.rel (0) target = $region13
  $region12: #{_lambda_.5} parent=0 // pred_region
    _
  $region13: #{_lambda_.5} parent=0 // pred_fallthru
    _
  // Predicated region
  $region14: #{_lambda_.5} parent=0 // pred_check
    _
  $region15: #{_lambda_.5} parent=0 // pred_check_branch
    %17 = sbr.rel (0) target = $region17
  $region16: #{_lambda_.5} parent=0 // pred_region
    _
  $region17: #{_lambda_.5} parent=0 // pred_fallthru
    _
  // Predicated region
  $region18: #{_lambda_.5} parent=0 // pred_check
    _
  $region19: #{_lambda_.5} parent=0 // pred_check_branch
    %19 = sbr.rel (0) target = $region21
  $region20: #{_lambda_.5} parent=0 // pred_region
    _
  $region21: #{_lambda_.5} parent=0 // pred_fallthru
    _
  %p20 = scmp.eq.s32.totalorder 0, 0
  // Predicated region
  $region22: #{_lambda_.5} parent=0 // pred_check
    %p21 = pneg %p20
  $region23: #{_lambda_.5} parent=0 // pred_check_branch
    %23 = sbr.rel (%p21) target = $region25
  $region24: #{_lambda_.5} parent=0 // pred_region
    %24 = vst [vmem:[#allocation3] sm:$0x1] 0.0
    %25 = vst [vmem:[#allocation4] sm:$0x1] 0.0
  $region25: #{_lambda_.5} parent=0 // pred_fallthru
    _
  %v26 = vld [vmem:[%s0] sm:$0xf]
  %v27 = vld [vmem:[%s0 + $0x4] sm:$0xf]
  %v28 = vld [vmem:[%s0 + $0x8] sm:$0xf]
  %v29 = vld [vmem:[%s0 + $0xc] sm:$0xf]
  %v30 = vld [vmem:[%s0 + $0x10] sm:$0xf]
  %v31 = vld [vmem:[%s0 + $0x14] sm:$0xf]
  %v32 = vld [vmem:[%s0 + $0x18] sm:$0xf]
  %v33 = vld [vmem:[%s0 + $0x1c] sm:$0xf]
  %v34 = vld [vmem:[%s0 + $0x20] sm:$0xf]
  %v35 = vld [vmem:[%s0 + $0x24] sm:$0xf]
  %v36 = vld [vmem:[%s0 + $0x28] sm:$0xf]
  %v37 = vld [vmem:[%s0 + $0x2c] sm:$0xf]
  %v38 = vld [vmem:[%s0 + $0x30] sm:$0xf]
  %v39 = vld [vmem:[%s0 + $0x34] sm:$0xf]
  %v40 = vld [vmem:[%s0 + $0x38] sm:$0xf]
  %v41 = vld [vmem:[%s0 + $0x3c] sm:$0xf]
  %v42 = vld [vmem:[%s0 + $0x40] sm:$0xf]
  %v43 = vld [vmem:[%s0 + $0x44] sm:$0xf]
  %v44 = vld [vmem:[%s0 + $0x48] sm:$0xf]
  %v45 = vld [vmem:[%s0 + $0x4c] sm:$0xf]
  %v46 = vld [vmem:[%s0 + $0x50] sm:$0xf]
  %v47 = vld [vmem:[%s0 + $0x54] sm:$0xf]
  %v48 = vld [vmem:[%s0 + $0x58] sm:$0xf]
  %v49 = vld [vmem:[%s0 + $0x5c] sm:$0xf]
  %v50 = vld [vmem:[%s0 + $0x60] sm:$0xf]
  %v51 = vld [vmem:[%s0 + $0x64] sm:$0xf]
  %v52 = vld [vmem:[%s0 + $0x68] sm:$0xf]
  %v53 = vld [vmem:[%s0 + $0x6c] sm:$0xf]
  %v54 = vld [vmem:[%s0 + $0x70] sm:$0xf]
  %v55 = vld [vmem:[%s0 + $0x74] sm:$0xf]
  %v56 = vld [vmem:[%s0 + $0x78] sm:$0xf]
  %v57 = vld [vmem:[%s0 + $0x7c] sm:$0xf]
  %v58 = vld [vmem:[%s0 + $0x80] sm:$0xf]
  %v59 = vld [vmem:[%s0 + $0x84] sm:$0xf]
  %v60 = vld [vmem:[%s0 + $0x88] sm:$0xf]
  %v61 = vld [vmem:[%s0 + $0x8c] sm:$0xf]
  %v62 = vld [vmem:[%s0 + $0x90] sm:$0xf]
  %v63 = vld [vmem:[%s0 + $0x94] sm:$0xf]
  %v64 = vld [vmem:[%s0 + $0x98] sm:$0xf]
  %v65 = vld [vmem:[%s0 + $0x9c] sm:$0xf]
  %v66 = vld [vmem:[%s0 + $0xa0] sm:$0xf]
  %v67 = vld [vmem:[%s0 + $0xa4] sm:$0xf]
  %v68 = vld [vmem:[%s0 + $0xa8] sm:$0xf]
  %v69 = vld [vmem:[%s0 + $0xac] sm:$0xf]
  %v70 = vld [vmem:[%s0 + $0xb0] sm:$0xf]
  %v71 = vld [vmem:[%s0 + $0xb4] sm:$0xf]
  %v72 = vld [vmem:[%s0 + $0xb8] sm:$0xf]
  %v73 = vld [vmem:[%s0 + $0xbc] sm:$0xf]
  %v74 = vld [vmem:[%s0 + $0xc0] sm:$0xf]
  %v75 = vld [vmem:[%s0 + $0xc4] sm:$0xf]
  %v76 = vld [vmem:[%s0 + $0xc8] sm:$0xf]
  %v77 = vld [vmem:[%s0 + $0xcc] sm:$0xf]
  %v78 = vld [vmem:[%s0 + $0xd0] sm:$0xf]
  %v79 = vld [vmem:[%s0 + $0xd4] sm:$0xf]
  %v80 = vld [vmem:[%s0 + $0xd8] sm:$0xf]
  %v81 = vld [vmem:[%s0 + $0xdc] sm:$0xf]
  %v82 = vld [vmem:[%s0 + $0xe0] sm:$0xf]
  %v83 = vld [vmem:[%s0 + $0xe4] sm:$0xf]
  %v84 = vld [vmem:[%s0 + $0xe8] sm:$0xf]
  %v85 = vld [vmem:[%s0 + $0xec] sm:$0xf]
  %v86 = vld [vmem:[%s0 + $0xf0] sm:$0xf]
  %v87 = vld [vmem:[%s0 + $0xf4] sm:$0xf]
  %v88 = vld [vmem:[%s0 + $0xf8] sm:$0xf]
  %v89 = vld [vmem:[%s0 + $0xfc] sm:$0xf]
  %v90 = vld [vmem:[%s1] sm:$0xf]
  %v91 = vld [vmem:[%s1 + $0x4] sm:$0xf]
  %v92 = vld [vmem:[%s1 + $0x8] sm:$0xf]
  %v93 = vld [vmem:[%s1 + $0xc] sm:$0xf]
  %v94 = vld [vmem:[%s1 + $0x10] sm:$0xf]
  %v95 = vld [vmem:[%s1 + $0x14] sm:$0xf]
  %v96 = vld [vmem:[%s1 + $0x18] sm:$0xf]
  %v97 = vld [vmem:[%s1 + $0x1c] sm:$0xf]
  %v98 = vld [vmem:[%s1 + $0x20] sm:$0xf]
  %v99 = vld [vmem:[%s1 + $0x24] sm:$0xf]
  %v100 = vld [vmem:[%s1 + $0x28] sm:$0xf]
  %v101 = vld [vmem:[%s1 + $0x2c] sm:$0xf]
  %v102 = vld [vmem:[%s1 + $0x30] sm:$0xf]
  %v103 = vld [vmem:[%s1 + $0x34] sm:$0xf]
  %v104 = vld [vmem:[%s1 + $0x38] sm:$0xf]
  %v105 = vld [vmem:[%s1 + $0x3c] sm:$0xf]
  %v106 = vld [vmem:[%s2] sm:$0x1]
  %v108 = vperm.slane %v106, 0
  %v174 = vunpack.c.l.b16 %v26
  %v175 = vunpack.c.l.b16 %v27
  %v176 = vunpack.c.l.b16 %v28
  %v177 = vunpack.c.l.b16 %v29
  %v178 = vunpack.c.l.b16 %v30
  %v179 = vunpack.c.l.b16 %v31
  %v180 = vunpack.c.l.b16 %v32
  %v181 = vunpack.c.l.b16 %v33
  %v182 = vunpack.c.l.b16 %v34
  %v183 = vunpack.c.l.b16 %v35
  %v184 = vunpack.c.l.b16 %v36
  %v185 = vunpack.c.l.b16 %v37
  %v186 = vunpack.c.l.b16 %v38
  %v187 = vunpack.c.l.b16 %v39
  %v188 = vunpack.c.l.b16 %v40
  %v189 = vunpack.c.l.b16 %v41
  %v190 = vunpack.c.l.b16 %v42
  %v191 = vunpack.c.l.b16 %v43
  %v192 = vunpack.c.l.b16 %v44
  %v193 = vunpack.c.l.b16 %v45
  %v194 = vunpack.c.l.b16 %v46
  %v195 = vunpack.c.l.b16 %v47
  %v196 = vunpack.c.l.b16 %v48
  %v197 = vunpack.c.l.b16 %v49
  %v198 = vunpack.c.l.b16 %v50
  %v199 = vunpack.c.l.b16 %v51
  %v200 = vunpack.c.l.b16 %v52
  %v201 = vunpack.c.l.b16 %v53
  %v202 = vunpack.c.l.b16 %v54
  %v203 = vunpack.c.l.b16 %v55
  %v204 = vunpack.c.l.b16 %v56
  %v205 = vunpack.c.l.b16 %v57
  %v206 = vunpack.c.l.b16 %v58
  %v207 = vunpack.c.l.b16 %v59
  %v208 = vunpack.c.l.b16 %v60
  %v209 = vunpack.c.l.b16 %v61
  %v210 = vunpack.c.l.b16 %v62
  %v211 = vunpack.c.l.b16 %v63
  %v212 = vunpack.c.l.b16 %v64
  %v213 = vunpack.c.l.b16 %v65
  %v214 = vunpack.c.l.b16 %v66
  %v215 = vunpack.c.l.b16 %v67
  %v216 = vunpack.c.l.b16 %v68
  %v217 = vunpack.c.l.b16 %v69
  %v218 = vunpack.c.l.b16 %v70
  %v219 = vunpack.c.l.b16 %v71
  %v220 = vunpack.c.l.b16 %v72
  %v221 = vunpack.c.l.b16 %v73
  %v222 = vunpack.c.l.b16 %v74
  %v223 = vunpack.c.l.b16 %v75
  %v224 = vunpack.c.l.b16 %v76
  %v225 = vunpack.c.l.b16 %v77
  %v226 = vunpack.c.l.b16 %v78
  %v227 = vunpack.c.l.b16 %v79
  %v228 = vunpack.c.l.b16 %v80
  %v229 = vunpack.c.l.b16 %v81
  %v230 = vunpack.c.l.b16 %v82
  %v231 = vunpack.c.l.b16 %v83
  %v232 = vunpack.c.l.b16 %v84
  %v233 = vunpack.c.l.b16 %v85
  %v234 = vunpack.c.l.b16 %v86
  %v235 = vunpack.c.l.b16 %v87
  %v236 = vunpack.c.l.b16 %v88
  %v237 = vunpack.c.l.b16 %v89
  %v238 = vpack.c.b16 %v175, %v174
  %v239 = vpack.c.b16 %v177, %v176
  %v240 = vpack.c.b16 %v179, %v178
  %v241 = vpack.c.b16 %v181, %v180
  %v242 = vpack.c.b16 %v183, %v182
  %v243 = vpack.c.b16 %v185, %v184
  %v244 = vpack.c.b16 %v187, %v186
  %v245 = vpack.c.b16 %v189, %v188
  %v246 = vpack.c.b16 %v191, %v190
  %v247 = vpack.c.b16 %v193, %v192
  %v248 = vpack.c.b16 %v195, %v194
  %v249 = vpack.c.b16 %v197, %v196
  %v250 = vpack.c.b16 %v199, %v198
  %v251 = vpack.c.b16 %v201, %v200
  %v252 = vpack.c.b16 %v203, %v202
  %v253 = vpack.c.b16 %v205, %v204
  %v254 = vpack.c.b16 %v207, %v206
  %v255 = vpack.c.b16 %v209, %v208
  %v256 = vpack.c.b16 %v211, %v210
  %v257 = vpack.c.b16 %v213, %v212
  %v258 = vpack.c.b16 %v215, %v214
  %v259 = vpack.c.b16 %v217, %v216
  %v260 = vpack.c.b16 %v219, %v218
  %v261 = vpack.c.b16 %v221, %v220
  %v262 = vpack.c.b16 %v223, %v222
  %v263 = vpack.c.b16 %v225, %v224
  %v264 = vpack.c.b16 %v227, %v226
  %v265 = vpack.c.b16 %v229, %v228
  %v266 = vpack.c.b16 %v231, %v230
  %v267 = vpack.c.b16 %v233, %v232
  %v268 = vpack.c.b16 %v235, %v234
  %v269 = vpack.c.b16 %v237, %v236
  %v318 = vunpack.c.l.b16 %v90
  %v319 = vunpack.c.l.b16 %v91
  %v320 = vunpack.c.l.b16 %v92
  %v321 = vunpack.c.l.b16 %v93
  %v322 = vunpack.c.l.b16 %v94
  %v323 = vunpack.c.l.b16 %v95
  %v324 = vunpack.c.l.b16 %v96
  %v325 = vunpack.c.l.b16 %v97
  %v326 = vunpack.c.l.b16 %v98
  %v327 = vunpack.c.l.b16 %v99
  %v328 = vunpack.c.l.b16 %v100
  %v329 = vunpack.c.l.b16 %v101
  %v330 = vunpack.c.l.b16 %v102
  %v331 = vunpack.c.l.b16 %v103
  %v332 = vunpack.c.l.b16 %v104
  %v333 = vunpack.c.l.b16 %v105
  %v334 = vpack.c.b16 %v319, %v318
  %v335 = vpack.c.b16 %v321, %v320
  %v336 = vpack.c.b16 %v323, %v322
  %v337 = vpack.c.b16 %v325, %v324
  %v338 = vpack.c.b16 %v327, %v326
  %v339 = vpack.c.b16 %v329, %v328
  %v340 = vpack.c.b16 %v331, %v330
  %v341 = vpack.c.b16 %v333, %v332
  %350 = vmatpush.bf16.msra.mxu0 %v341
  %351 = vmatpush.bf16.msra.mxu0 %v340
  %352 = vmatpush.bf16.msra.mxu0 %v339
  %353 = vmatpush.bf16.msra.mxu0 %v338
  %354 = vmatpush.bf16.msra.mxu0 %v337
  %355 = vmatpush.bf16.msra.mxu0 %v336
  %356 = vmatpush.bf16.msra.mxu0 %v335
  %357 = vmatpush.bf16.msra.mxu0 %v334
  %358 = vmatmul.bf16.gmra.mxu0 %v238
  %v359 = vpop.f32.mrf.mxu0
  %v360 = vadd.f32 %v108, %v359
  %v361 = vpop.f32.mrf.mxu0
  %v362 = vadd.f32 %v108, %v361
  %363 = vmatmul.bf16.gmra.mxu0 %v239
  %v364 = vpop.f32.mrf.mxu0
  %v365 = vadd.f32 %v108, %v364
  %v366 = vpop.f32.mrf.mxu0
  %v367 = vadd.f32 %v108, %v366
  %368 = vmatmul.bf16.gmra.mxu0 %v240
  %v369 = vpop.f32.mrf.mxu0
  %v370 = vadd.f32 %v108, %v369
  %v371 = vpop.f32.mrf.mxu0
  %v372 = vadd.f32 %v108, %v371
  %373 = vmatmul.bf16.gmra.mxu0 %v241
  %v374 = vpop.f32.mrf.mxu0
  %v375 = vadd.f32 %v108, %v374
  %v376 = vpop.f32.mrf.mxu0
  %v377 = vadd.f32 %v108, %v376
  %378 = vmatmul.bf16.gmra.mxu0 %v242
  %v379 = vpop.f32.mrf.mxu0
  %v380 = vadd.f32 %v108, %v379
  %v381 = vpop.f32.mrf.mxu0
  %v382 = vadd.f32 %v108, %v381
  %383 = vmatmul.bf16.gmra.mxu0 %v243
  %v384 = vpop.f32.mrf.mxu0
  %v385 = vadd.f32 %v108, %v384
  %v386 = vpop.f32.mrf.mxu0
  %v387 = vadd.f32 %v108, %v386
  %388 = vmatmul.bf16.gmra.mxu0 %v244
  %v389 = vpop.f32.mrf.mxu0
  %v390 = vadd.f32 %v108, %v389
  %v391 = vpop.f32.mrf.mxu0
  %v392 = vadd.f32 %v108, %v391
  %393 = vmatmul.bf16.gmra.mxu0 %v245
  %v394 = vpop.f32.mrf.mxu0
  %v395 = vadd.f32 %v108, %v394
  %v396 = vpop.f32.mrf.mxu0
  %v397 = vadd.f32 %v108, %v396
  %398 = vmatmul.bf16.gmra.mxu0 %v246
  %v399 = vpop.f32.mrf.mxu0
  %v400 = vadd.f32 %v108, %v399
  %v401 = vpop.f32.mrf.mxu0
  %v402 = vadd.f32 %v108, %v401
  %403 = vmatmul.bf16.gmra.mxu0 %v247
  %v404 = vpop.f32.mrf.mxu0
  %v405 = vadd.f32 %v108, %v404
  %v406 = vpop.f32.mrf.mxu0
  %v407 = vadd.f32 %v108, %v406
  %408 = vmatmul.bf16.gmra.mxu0 %v248
  %v409 = vpop.f32.mrf.mxu0
  %v410 = vadd.f32 %v108, %v409
  %v411 = vpop.f32.mrf.mxu0
  %v412 = vadd.f32 %v108, %v411
  %413 = vmatmul.bf16.gmra.mxu0 %v249
  %v414 = vpop.f32.mrf.mxu0
  %v415 = vadd.f32 %v108, %v414
  %v416 = vpop.f32.mrf.mxu0
  %v417 = vadd.f32 %v108, %v416
  %418 = vmatmul.bf16.gmra.mxu0 %v250
  %v419 = vpop.f32.mrf.mxu0
  %v420 = vadd.f32 %v108, %v419
  %v421 = vpop.f32.mrf.mxu0
  %v422 = vadd.f32 %v108, %v421
  %423 = vmatmul.bf16.gmra.mxu0 %v251
  %v424 = vpop.f32.mrf.mxu0
  %v425 = vadd.f32 %v108, %v424
  %v426 = vpop.f32.mrf.mxu0
  %v427 = vadd.f32 %v108, %v426
  %428 = vmatmul.bf16.gmra.mxu0 %v252
  %v429 = vpop.f32.mrf.mxu0
  %v430 = vadd.f32 %v108, %v429
  %v431 = vpop.f32.mrf.mxu0
  %v432 = vadd.f32 %v108, %v431
  %433 = vmatmul.bf16.gmra.mxu0 %v253
  %v434 = vpop.f32.mrf.mxu0
  %v435 = vadd.f32 %v108, %v434
  %v436 = vpop.f32.mrf.mxu0
  %v437 = vadd.f32 %v108, %v436
  %438 = vmatmul.bf16.gmra.mxu0 %v254
  %v439 = vpop.f32.mrf.mxu0
  %v440 = vadd.f32 %v108, %v439
  %v441 = vpop.f32.mrf.mxu0
  %v442 = vadd.f32 %v108, %v441
  %443 = vmatmul.bf16.gmra.mxu0 %v255
  %v444 = vpop.f32.mrf.mxu0
  %v445 = vadd.f32 %v108, %v444
  %v446 = vpop.f32.mrf.mxu0
  %v447 = vadd.f32 %v108, %v446
  %448 = vmatmul.bf16.gmra.mxu0 %v256
  %v449 = vpop.f32.mrf.mxu0
  %v450 = vadd.f32 %v108, %v449
  %v451 = vpop.f32.mrf.mxu0
  %v452 = vadd.f32 %v108, %v451
  %453 = vmatmul.bf16.gmra.mxu0 %v257
  %v454 = vpop.f32.mrf.mxu0
  %v455 = vadd.f32 %v108, %v454
  %v456 = vpop.f32.mrf.mxu0
  %v457 = vadd.f32 %v108, %v456
  %458 = vmatmul.bf16.gmra.mxu0 %v258
  %v459 = vpop.f32.mrf.mxu0
  %v460 = vadd.f32 %v108, %v459
  %v461 = vpop.f32.mrf.mxu0
  %v462 = vadd.f32 %v108, %v461
  %463 = vmatmul.bf16.gmra.mxu0 %v259
  %v464 = vpop.f32.mrf.mxu0
  %v465 = vadd.f32 %v108, %v464
  %v466 = vpop.f32.mrf.mxu0
  %v467 = vadd.f32 %v108, %v466
  %468 = vmatmul.bf16.gmra.mxu0 %v260
  %v469 = vpop.f32.mrf.mxu0
  %v470 = vadd.f32 %v108, %v469
  %v471 = vpop.f32.mrf.mxu0
  %v472 = vadd.f32 %v108, %v471
  %473 = vmatmul.bf16.gmra.mxu0 %v261
  %v474 = vpop.f32.mrf.mxu0
  %v475 = vadd.f32 %v108, %v474
  %v476 = vpop.f32.mrf.mxu0
  %v477 = vadd.f32 %v108, %v476
  %478 = vmatmul.bf16.gmra.mxu0 %v262
  %v479 = vpop.f32.mrf.mxu0
  %v480 = vadd.f32 %v108, %v479
  %v481 = vpop.f32.mrf.mxu0
  %v482 = vadd.f32 %v108, %v481
  %483 = vmatmul.bf16.gmra.mxu0 %v263
  %v484 = vpop.f32.mrf.mxu0
  %v485 = vadd.f32 %v108, %v484
  %v486 = vpop.f32.mrf.mxu0
  %v487 = vadd.f32 %v108, %v486
  %488 = vmatmul.bf16.gmra.mxu0 %v264
  %v489 = vpop.f32.mrf.mxu0
  %v490 = vadd.f32 %v108, %v489
  %v491 = vpop.f32.mrf.mxu0
  %v492 = vadd.f32 %v108, %v491
  %493 = vmatmul.bf16.gmra.mxu0 %v265
  %v494 = vpop.f32.mrf.mxu0
  %v495 = vadd.f32 %v108, %v494
  %v496 = vpop.f32.mrf.mxu0
  %v497 = vadd.f32 %v108, %v496
  %498 = vmatmul.bf16.gmra.mxu0 %v266
  %v499 = vpop.f32.mrf.mxu0
  %v500 = vadd.f32 %v108, %v499
  %v501 = vpop.f32.mrf.mxu0
  %v502 = vadd.f32 %v108, %v501
  %503 = vmatmul.bf16.gmra.mxu0 %v267
  %v504 = vpop.f32.mrf.mxu0
  %v505 = vadd.f32 %v108, %v504
  %v506 = vpop.f32.mrf.mxu0
  %v507 = vadd.f32 %v108, %v506
  %508 = vmatmul.bf16.gmra.mxu0 %v268
  %v509 = vpop.f32.mrf.mxu0
  %v510 = vadd.f32 %v108, %v509
  %v511 = vpop.f32.mrf.mxu0
  %v512 = vadd.f32 %v108, %v511
  %513 = vmatmul.bf16.gmra.mxu0 %v269
  %v514 = vpop.f32.mrf.mxu0
  %v515 = vadd.f32 %v108, %v514
  %v516 = vpop.f32.mrf.mxu0
  %v517 = vadd.f32 %v108, %v516
  %518 = vdwg.mxu0
  %s519 = smul.u32 0, 512
  %s520 = scalar_lea.vmem [#allocation2], %s519
  %521 = vst [vmem:[%s520] sm:$0xff] %v360
  %522 = vst [vmem:[%s520 + $0x8] sm:$0xff] %v362
  %523 = vst [vmem:[%s520 + $0x10] sm:$0xff] %v365
  %524 = vst [vmem:[%s520 + $0x18] sm:$0xff] %v367
  %525 = vst [vmem:[%s520 + $0x20] sm:$0xff] %v370
  %526 = vst [vmem:[%s520 + $0x28] sm:$0xff] %v372
  %527 = vst [vmem:[%s520 + $0x30] sm:$0xff] %v375
  %528 = vst [vmem:[%s520 + $0x38] sm:$0xff] %v377
  %529 = vst [vmem:[%s520 + $0x40] sm:$0xff] %v380
  %530 = vst [vmem:[%s520 + $0x48] sm:$0xff] %v382
  %531 = vst [vmem:[%s520 + $0x50] sm:$0xff] %v385
  %532 = vst [vmem:[%s520 + $0x58] sm:$0xff] %v387
  %533 = vst [vmem:[%s520 + $0x60] sm:$0xff] %v390
  %534 = vst [vmem:[%s520 + $0x68] sm:$0xff] %v392
  %535 = vst [vmem:[%s520 + $0x70] sm:$0xff] %v395
  %536 = vst [vmem:[%s520 + $0x78] sm:$0xff] %v397
  %537 = vst [vmem:[%s520 + $0x80] sm:$0xff] %v400
  %538 = vst [vmem:[%s520 + $0x88] sm:$0xff] %v402
  %539 = vst [vmem:[%s520 + $0x90] sm:$0xff] %v405
  %540 = vst [vmem:[%s520 + $0x98] sm:$0xff] %v407
  %541 = vst [vmem:[%s520 + $0xa0] sm:$0xff] %v410
  %542 = vst [vmem:[%s520 + $0xa8] sm:$0xff] %v412
  %543 = vst [vmem:[%s520 + $0xb0] sm:$0xff] %v415
  %544 = vst [vmem:[%s520 + $0xb8] sm:$0xff] %v417
  %545 = vst [vmem:[%s520 + $0xc0] sm:$0xff] %v420
  %546 = vst [vmem:[%s520 + $0xc8] sm:$0xff] %v422
  %547 = vst [vmem:[%s520 + $0xd0] sm:$0xff] %v425
  %548 = vst [vmem:[%s520 + $0xd8] sm:$0xff] %v427
  %549 = vst [vmem:[%s520 + $0xe0] sm:$0xff] %v430
  %550 = vst [vmem:[%s520 + $0xe8] sm:$0xff] %v432
  %551 = vst [vmem:[%s520 + $0xf0] sm:$0xff] %v435
  %552 = vst [vmem:[%s520 + $0xf8] sm:$0xff] %v437
  %553 = vst [vmem:[%s520 + $0x100] sm:$0xff] %v440
  %554 = vst [vmem:[%s520 + $0x108] sm:$0xff] %v442
  %555 = vst [vmem:[%s520 + $0x110] sm:$0xff] %v445
  %556 = vst [vmem:[%s520 + $0x118] sm:$0xff] %v447
  %557 = vst [vmem:[%s520 + $0x120] sm:$0xff] %v450
  %558 = vst [vmem:[%s520 + $0x128] sm:$0xff] %v452
  %559 = vst [vmem:[%s520 + $0x130] sm:$0xff] %v455
  %560 = vst [vmem:[%s520 + $0x138] sm:$0xff] %v457
  %561 = vst [vmem:[%s520 + $0x140] sm:$0xff] %v460
  %562 = vst [vmem:[%s520 + $0x148] sm:$0xff] %v462
  %563 = vst [vmem:[%s520 + $0x150] sm:$0xff] %v465
  %564 = vst [vmem:[%s520 + $0x158] sm:$0xff] %v467
  %565 = vst [vmem:[%s520 + $0x160] sm:$0xff] %v470
  %566 = vst [vmem:[%s520 + $0x168] sm:$0xff] %v472
  %567 = vst [vmem:[%s520 + $0x170] sm:$0xff] %v475
  %568 = vst [vmem:[%s520 + $0x178] sm:$0xff] %v477
  %569 = vst [vmem:[%s520 + $0x180] sm:$0xff] %v480
  %570 = vst [vmem:[%s520 + $0x188] sm:$0xff] %v482
  %571 = vst [vmem:[%s520 + $0x190] sm:$0xff] %v485
  %572 = vst [vmem:[%s520 + $0x198] sm:$0xff] %v487
  %573 = vst [vmem:[%s520 + $0x1a0] sm:$0xff] %v490
  %574 = vst [vmem:[%s520 + $0x1a8] sm:$0xff] %v492
  %575 = vst [vmem:[%s520 + $0x1b0] sm:$0xff] %v495
  %576 = vst [vmem:[%s520 + $0x1b8] sm:$0xff] %v497
  %577 = vst [vmem:[%s520 + $0x1c0] sm:$0xff] %v500
  %578 = vst [vmem:[%s520 + $0x1c8] sm:$0xff] %v502
  %579 = vst [vmem:[%s520 + $0x1d0] sm:$0xff] %v505
  %580 = vst [vmem:[%s520 + $0x1d8] sm:$0xff] %v507
  %581 = vst [vmem:[%s520 + $0x1e0] sm:$0xff] %v510
  %582 = vst [vmem:[%s520 + $0x1e8] sm:$0xff] %v512
  %583 = vst [vmem:[%s520 + $0x1f0] sm:$0xff] %v515
  %584 = vst [vmem:[%s520 + $0x1f8] sm:$0xff] %v517
  %v585 = vld [vmem:[#allocation3] sm:$0x1]
  %v586 = vadd.f32 %v360, %v362
  %v587 = vadd.f32 %v586, %v365
  %v588 = vadd.f32 %v587, %v367
  %v589 = vadd.f32 %v588, %v370
  %v590 = vadd.f32 %v589, %v372
  %v591 = vadd.f32 %v590, %v375
  %v592 = vadd.f32 %v591, %v377
  %v593 = vadd.f32 %v592, %v380
  %v594 = vadd.f32 %v593, %v382
  %v595 = vadd.f32 %v594, %v385
  %v596 = vadd.f32 %v595, %v387
  %v597 = vadd.f32 %v596, %v390
  %v598 = vadd.f32 %v597, %v392
  %v599 = vadd.f32 %v598, %v395
  %v600 = vadd.f32 %v599, %v397
  %v601 = vadd.f32 %v600, %v400
  %v602 = vadd.f32 %v601, %v402
  %v603 = vadd.f32 %v602, %v405
  %v604 = vadd.f32 %v603, %v407
  %v605 = vadd.f32 %v604, %v410
  %v606 = vadd.f32 %v605, %v412
  %v607 = vadd.f32 %v606, %v415
  %v608 = vadd.f32 %v607, %v417
  %v609 = vadd.f32 %v608, %v420
  %v610 = vadd.f32 %v609, %v422
  %v611 = vadd.f32 %v610, %v425
  %v612 = vadd.f32 %v611, %v427
  %v613 = vadd.f32 %v612, %v430
  %v614 = vadd.f32 %v613, %v432
  %v615 = vadd.f32 %v614, %v435
  %v616 = vadd.f32 %v615, %v437
  %v617 = vadd.f32 %v616, %v440
  %v618 = vadd.f32 %v617, %v442
  %v619 = vadd.f32 %v618, %v445
  %v620 = vadd.f32 %v619, %v447
  %v621 = vadd.f32 %v620, %v450
  %v622 = vadd.f32 %v621, %v452
  %v623 = vadd.f32 %v622, %v455
  %v624 = vadd.f32 %v623, %v457
  %v625 = vadd.f32 %v624, %v460
  %v626 = vadd.f32 %v625, %v462
  %v627 = vadd.f32 %v626, %v465
  %v628 = vadd.f32 %v627, %v467
  %v629 = vadd.f32 %v628, %v470
  %v630 = vadd.f32 %v629, %v472
  %v631 = vadd.f32 %v630, %v475
  %v632 = vadd.f32 %v631, %v477
  %v633 = vadd.f32 %v632, %v480
  %v634 = vadd.f32 %v633, %v482
  %v635 = vadd.f32 %v634, %v485
  %v636 = vadd.f32 %v635, %v487
  %v637 = vadd.f32 %v636, %v490
  %v638 = vadd.f32 %v637, %v492
  %v639 = vadd.f32 %v638, %v495
  %v640 = vadd.f32 %v639, %v497
  %v641 = vadd.f32 %v640, %v500
  %v642 = vadd.f32 %v641, %v502
  %v643 = vadd.f32 %v642, %v505
  %v644 = vadd.f32 %v643, %v507
  %v645 = vadd.f32 %v644, %v510
  %v646 = vadd.f32 %v645, %v512
  %v647 = vadd.f32 %v646, %v515
  %v648 = vadd.f32 %v647, %v517
  %v649 = vrot.slane %v648, 4
  %v650 = vadd.f32 %v648, %v649
  %v651 = vrot.slane %v650, 2
  %v652 = vadd.f32 %v650, %v651
  %v653 = vrot.slane %v652, 1
  %v654 = vadd.f32 %v652, %v653
  %v655 = vadd.f32 %v585, %v654
  %656 = vst [vmem:[#allocation3] sm:$0x1] %v655
  %v657 = vld [vmem:[#allocation4] sm:$0x1]
  %v658 = vmul.f32 %v360, %v360
  %v659 = vmul.f32 %v362, %v362
  %v660 = vmul.f32 %v365, %v365
  %v661 = vmul.f32 %v367, %v367
  %v662 = vmul.f32 %v370, %v370
  %v663 = vmul.f32 %v372, %v372
  %v664 = vmul.f32 %v375, %v375
  %v665 = vmul.f32 %v377, %v377
  %v666 = vmul.f32 %v380, %v380
  %v667 = vmul.f32 %v382, %v382
  %v668 = vmul.f32 %v385, %v385
  %v669 = vmul.f32 %v387, %v387
  %v670 = vmul.f32 %v390, %v390
  %v671 = vmul.f32 %v392, %v392
  %v672 = vmul.f32 %v395, %v395
  %v673 = vmul.f32 %v397, %v397
  %v674 = vmul.f32 %v400, %v400
  %v675 = vmul.f32 %v402, %v402
  %v676 = vmul.f32 %v405, %v405
  %v677 = vmul.f32 %v407, %v407
  %v678 = vmul.f32 %v410, %v410
  %v679 = vmul.f32 %v412, %v412
  %v680 = vmul.f32 %v415, %v415
  %v681 = vmul.f32 %v417, %v417
  %v682 = vmul.f32 %v420, %v420
  %v683 = vmul.f32 %v422, %v422
  %v684 = vmul.f32 %v425, %v425
  %v685 = vmul.f32 %v427, %v427
  %v686 = vmul.f32 %v430, %v430
  %v687 = vmul.f32 %v432, %v432
  %v688 = vmul.f32 %v435, %v435
  %v689 = vmul.f32 %v437, %v437
  %v690 = vmul.f32 %v440, %v440
  %v691 = vmul.f32 %v442, %v442
  %v692 = vmul.f32 %v445, %v445
  %v693 = vmul.f32 %v447, %v447
  %v694 = vmul.f32 %v450, %v450
  %v695 = vmul.f32 %v452, %v452
  %v696 = vmul.f32 %v455, %v455
  %v697 = vmul.f32 %v457, %v457
  %v698 = vmul.f32 %v460, %v460
  %v699 = vmul.f32 %v462, %v462
  %v700 = vmul.f32 %v465, %v465
  %v701 = vmul.f32 %v467, %v467
  %v702 = vmul.f32 %v470, %v470
  %v703 = vmul.f32 %v472, %v472
  %v704 = vmul.f32 %v475, %v475
  %v705 = vmul.f32 %v477, %v477
  %v706 = vmul.f32 %v480, %v480
  %v707 = vmul.f32 %v482, %v482
  %v708 = vmul.f32 %v485, %v485
  %v709 = vmul.f32 %v487, %v487
  %v710 = vmul.f32 %v490, %v490
  %v711 = vmul.f32 %v492, %v492
  %v712 = vmul.f32 %v495, %v495
  %v713 = vmul.f32 %v497, %v497
  %v714 = vmul.f32 %v500, %v500
  %v715 = vmul.f32 %v502, %v502
  %v716 = vmul.f32 %v505, %v505
  %v717 = vmul.f32 %v507, %v507
  %v718 = vmul.f32 %v510, %v510
  %v719 = vmul.f32 %v512, %v512
  %v720 = vmul.f32 %v515, %v515
  %v721 = vmul.f32 %v517, %v517
  %v722 = vadd.f32 %v658, %v659
  %v723 = vadd.f32 %v722, %v660
  %v724 = vadd.f32 %v723, %v661
  %v725 = vadd.f32 %v724, %v662
  %v726 = vadd.f32 %v725, %v663
  %v727 = vadd.f32 %v726, %v664
  %v728 = vadd.f32 %v727, %v665
  %v729 = vadd.f32 %v728, %v666
  %v730 = vadd.f32 %v729, %v667
  %v731 = vadd.f32 %v730, %v668
  %v732 = vadd.f32 %v731, %v669
  %v733 = vadd.f32 %v732, %v670
  %v734 = vadd.f32 %v733, %v671
  %v735 = vadd.f32 %v734, %v672
  %v736 = vadd.f32 %v735, %v673
  %v737 = vadd.f32 %v736, %v674
  %v738 = vadd.f32 %v737, %v675
  %v739 = vadd.f32 %v738, %v676
  %v740 = vadd.f32 %v739, %v677
  %v741 = vadd.f32 %v740, %v678
  %v742 = vadd.f32 %v741, %v679
  %v743 = vadd.f32 %v742, %v680
  %v744 = vadd.f32 %v743, %v681
  %v745 = vadd.f32 %v744, %v682
  %v746 = vadd.f32 %v745, %v683
  %v747 = vadd.f32 %v746, %v684
  %v748 = vadd.f32 %v747, %v685
  %v749 = vadd.f32 %v748, %v686
  %v750 = vadd.f32 %v749, %v687
  %v751 = vadd.f32 %v750, %v688
  %v752 = vadd.f32 %v751, %v689
  %v753 = vadd.f32 %v752, %v690
  %v754 = vadd.f32 %v753, %v691
  %v755 = vadd.f32 %v754, %v692
  %v756 = vadd.f32 %v755, %v693
  %v757 = vadd.f32 %v756, %v694
  %v758 = vadd.f32 %v757, %v695
  %v759 = vadd.f32 %v758, %v696
  %v760 = vadd.f32 %v759, %v697
  %v761 = vadd.f32 %v760, %v698
  %v762 = vadd.f32 %v761, %v699
  %v763 = vadd.f32 %v762, %v700
  %v764 = vadd.f32 %v763, %v701
  %v765 = vadd.f32 %v764, %v702
  %v766 = vadd.f32 %v765, %v703
  %v767 = vadd.f32 %v766, %v704
  %v768 = vadd.f32 %v767, %v705
  %v769 = vadd.f32 %v768, %v706
  %v770 = vadd.f32 %v769, %v707
  %v771 = vadd.f32 %v770, %v708
  %v772 = vadd.f32 %v771, %v709
  %v773 = vadd.f32 %v772, %v710
  %v774 = vadd.f32 %v773, %v711
  %v775 = vadd.f32 %v774, %v712
  %v776 = vadd.f32 %v775, %v713
  %v777 = vadd.f32 %v776, %v714
  %v778 = vadd.f32 %v777, %v715
  %v779 = vadd.f32 %v778, %v716
  %v780 = vadd.f32 %v779, %v717
  %v781 = vadd.f32 %v780, %v718
  %v782 = vadd.f32 %v781, %v719
  %v783 = vadd.f32 %v782, %v720
  %v784 = vadd.f32 %v783, %v721
  %v785 = vrot.slane %v784, 4
  %v786 = vadd.f32 %v784, %v785
  %v787 = vrot.slane %v786, 2
  %v788 = vadd.f32 %v786, %v787
  %v789 = vrot.slane %v788, 1
  %v790 = vadd.f32 %v788, %v789
  %v791 = vadd.f32 %v657, %v790
  %792 = vst [vmem:[#allocation4] sm:$0x1] %v791
  // Predicated region
  $region26: #{_lambda_.5} parent=0 // pred_check
    %p793 = pneg %p20
  $region27: #{_lambda_.5} parent=0 // pred_check_branch
    %795 = sbr.rel (%p793) target = $region29
  $region28: #{_lambda_.5} parent=0 // pred_region
    %v796 = vld [vmem:[#allocation3] sm:$0x1]
    %v797 = vmul.f32 %v796, 0.001953125
    %v798 = vld [vmem:[#allocation4] sm:$0x1]
    %v799 = vmul.f32 %v798, 0.001953125
    %v800 = vmul.f32 %v797, %v797
    %v801 = vsub.f32 %v799, %v800
    %v802 = vmax.f32 %v801, 0.0
    %v803 = vld [vmem:[%s3] sm:$0x1]
    %v804 = vadd.f32 %v802, 1e-05
    %v805 = vrsqrt.pop %v804
    %v806 = vmul.f32 %v805, %v804
    %v807 = vmul.f32 %v806, %v805
    %v808 = vmul.f32 0.5, %v807
    %v809 = vsub.f32 1.5, %v808
    %v810 = vmul.f32 %v805, %v809
    %vm811 = vweird.f32 %v804
    %vm812 = vweird.f32 %v805
    %vm813 = vmor %vm811, %vm812
    %v814 = vsel %vm813, %v805, %v810
    %v815 = vmul.f32 %v803, %v814
    %v816 = vld [vmem:[%s4] sm:$0x1]
    %v817 = vmul.f32 %v797, %v815
    %v818 = vsub.f32 %v816, %v817
    %v819 = vld [vmem:[#allocation2] sm:$0xff]
    %v820 = vld [vmem:[#allocation2 + $0x8] sm:$0xff]
    %v821 = vld [vmem:[#allocation2 + $0x10] sm:$0xff]
    %v822 = vld [vmem:[#allocation2 + $0x18] sm:$0xff]
    %v823 = vld [vmem:[#allocation2 + $0x20] sm:$0xff]
    %v824 = vld [vmem:[#allocation2 + $0x28] sm:$0xff]
    %v825 = vld [vmem:[#allocation2 + $0x30] sm:$0xff]
    %v826 = vld [vmem:[#allocation2 + $0x38] sm:$0xff]
    %v827 = vld [vmem:[#allocation2 + $0x40] sm:$0xff]
    %v828 = vld [vmem:[#allocation2 + $0x48] sm:$0xff]
    %v829 = vld [vmem:[#allocation2 + $0x50] sm:$0xff]
    %v830 = vld [vmem:[#allocation2 + $0x58] sm:$0xff]
    %v831 = vld [vmem:[#allocation2 + $0x60] sm:$0xff]
    %v832 = vld [vmem:[#allocation2 + $0x68] sm:$0xff]
    %v833 = vld [vmem:[#allocation2 + $0x70] sm:$0xff]
    %v834 = vld [vmem:[#allocation2 + $0x78] sm:$0xff]
    %v835 = vld [vmem:[#allocation2 + $0x80] sm:$0xff]
    %v836 = vld [vmem:[#allocation2 + $0x88] sm:$0xff]
    %v837 = vld [vmem:[#allocation2 + $0x90] sm:$0xff]
    %v838 = vld [vmem:[#allocation2 + $0x98] sm:$0xff]
    %v839 = vld [vmem:[#allocation2 + $0xa0] sm:$0xff]
    %v840 = vld [vmem:[#allocation2 + $0xa8] sm:$0xff]
    %v841 = vld [vmem:[#allocation2 + $0xb0] sm:$0xff]
    %v842 = vld [vmem:[#allocation2 + $0xb8] sm:$0xff]
    %v843 = vld [vmem:[#allocation2 + $0xc0] sm:$0xff]
    %v844 = vld [vmem:[#allocation2 + $0xc8] sm:$0xff]
    %v845 = vld [vmem:[#allocation2 + $0xd0] sm:$0xff]
    %v846 = vld [vmem:[#allocation2 + $0xd8] sm:$0xff]
    %v847 = vld [vmem:[#allocation2 + $0xe0] sm:$0xff]
    %v848 = vld [vmem:[#allocation2 + $0xe8] sm:$0xff]
    %v849 = vld [vmem:[#allocation2 + $0xf0] sm:$0xff]
    %v850 = vld [vmem:[#allocation2 + $0xf8] sm:$0xff]
    %v851 = vld [vmem:[#allocation2 + $0x100] sm:$0xff]
    %v852 = vld [vmem:[#allocation2 + $0x108] sm:$0xff]
    %v853 = vld [vmem:[#allocation2 + $0x110] sm:$0xff]
    %v854 = vld [vmem:[#allocation2 + $0x118] sm:$0xff]
    %v855 = vld [vmem:[#allocation2 + $0x120] sm:$0xff]
    %v856 = vld [vmem:[#allocation2 + $0x128] sm:$0xff]
    %v857 = vld [vmem:[#allocation2 + $0x130] sm:$0xff]
    %v858 = vld [vmem:[#allocation2 + $0x138] sm:$0xff]
    %v859 = vld [vmem:[#allocation2 + $0x140] sm:$0xff]
    %v860 = vld [vmem:[#allocation2 + $0x148] sm:$0xff]
    %v861 = vld [vmem:[#allocation2 + $0x150] sm:$0xff]
    %v862 = vld [vmem:[#allocation2 + $0x158] sm:$0xff]
    %v863 = vld [vmem:[#allocation2 + $0x160] sm:$0xff]
    %v864 = vld [vmem:[#allocation2 + $0x168] sm:$0xff]
    %v865 = vld [vmem:[#allocation2 + $0x170] sm:$0xff]
    %v866 = vld [vmem:[#allocation2 + $0x178] sm:$0xff]
    %v867 = vld [vmem:[#allocation2 + $0x180] sm:$0xff]
    %v868 = vld [vmem:[#allocation2 + $0x188] sm:$0xff]
    %v869 = vld [vmem:[#allocation2 + $0x190] sm:$0xff]
    %v870 = vld [vmem:[#allocation2 + $0x198] sm:$0xff]
    %v871 = vld [vmem:[#allocation2 + $0x1a0] sm:$0xff]
    %v872 = vld [vmem:[#allocation2 + $0x1a8] sm:$0xff]
    %v873 = vld [vmem:[#allocation2 + $0x1b0] sm:$0xff]
    %v874 = vld [vmem:[#allocation2 + $0x1b8] sm:$0xff]
    %v875 = vld [vmem:[#allocation2 + $0x1c0] sm:$0xff]
    %v876 = vld [vmem:[#allocation2 + $0x1c8] sm:$0xff]
    %v877 = vld [vmem:[#allocation2 + $0x1d0] sm:$0xff]
    %v878 = vld [vmem:[#allocation2 + $0x1d8] sm:$0xff]
    %v879 = vld [vmem:[#allocation2 + $0x1e0] sm:$0xff]
    %v880 = vld [vmem:[#allocation2 + $0x1e8] sm:$0xff]
    %v881 = vld [vmem:[#allocation2 + $0x1f0] sm:$0xff]
    %v882 = vld [vmem:[#allocation2 + $0x1f8] sm:$0xff]
    %v884 = vperm.slane %v815, 0
    %v886 = vmul.f32 %v819, %v884
    %v887 = vmul.f32 %v820, %v884
    %v888 = vmul.f32 %v821, %v884
    %v889 = vmul.f32 %v822, %v884
    %v890 = vmul.f32 %v823, %v884
    %v891 = vmul.f32 %v824, %v884
    %v892 = vmul.f32 %v825, %v884
    %v893 = vmul.f32 %v826, %v884
    %v894 = vmul.f32 %v827, %v884
    %v895 = vmul.f32 %v828, %v884
    %v896 = vmul.f32 %v829, %v884
    %v897 = vmul.f32 %v830, %v884
    %v898 = vmul.f32 %v831, %v884
    %v899 = vmul.f32 %v832, %v884
    %v900 = vmul.f32 %v833, %v884
    %v901 = vmul.f32 %v834, %v884
    %v902 = vmul.f32 %v835, %v884
    %v903 = vmul.f32 %v836, %v884
    %v904 = vmul.f32 %v837, %v884
    %v905 = vmul.f32 %v838, %v884
    %v906 = vmul.f32 %v839, %v884
    %v907 = vmul.f32 %v840, %v884
    %v908 = vmul.f32 %v841, %v884
    %v909 = vmul.f32 %v842, %v884
    %v910 = vmul.f32 %v843, %v884
    %v911 = vmul.f32 %v844, %v884
    %v912 = vmul.f32 %v845, %v884
    %v913 = vmul.f32 %v846, %v884
    %v914 = vmul.f32 %v847, %v884
    %v915 = vmul.f32 %v848, %v884
    %v916 = vmul.f32 %v849, %v884
    %v917 = vmul.f32 %v850, %v884
    %v918 = vmul.f32 %v851, %v884
    %v919 = vmul.f32 %v852, %v884
    %v920 = vmul.f32 %v853, %v884
    %v921 = vmul.f32 %v854, %v884
    %v922 = vmul.f32 %v855, %v884
    %v923 = vmul.f32 %v856, %v884
    %v924 = vmul.f32 %v857, %v884
    %v925 = vmul.f32 %v858, %v884
    %v926 = vmul.f32 %v859, %v884
    %v927 = vmul.f32 %v860, %v884
    %v928 = vmul.f32 %v861, %v884
    %v929 = vmul.f32 %v862, %v884
    %v930 = vmul.f32 %v863, %v884
    %v931 = vmul.f32 %v864, %v884
    %v932 = vmul.f32 %v865, %v884
    %v933 = vmul.f32 %v866, %v884
    %v934 = vmul.f32 %v867, %v884
    %v935 = vmul.f32 %v868, %v884
    %v936 = vmul.f32 %v869, %v884
    %v937 = vmul.f32 %v870, %v884
    %v938 = vmul.f32 %v871, %v884
    %v939 = vmul.f32 %v872, %v884
    %v940 = vmul.f32 %v873, %v884
    %v941 = vmul.f32 %v874, %v884
    %v942 = vmul.f32 %v875, %v884
    %v943 = vmul.f32 %v876, %v884
    %v944 = vmul.f32 %v877, %v884
    %v945 = vmul.f32 %v878, %v884
    %v946 = vmul.f32 %v879, %v884
    %v947 = vmul.f32 %v880, %v884
    %v948 = vmul.f32 %v881, %v884
    %v949 = vmul.f32 %v882, %v884
    %v951 = vperm.slane %v818, 0
    %v953 = vadd.f32 %v886, %v951
    %v954 = vadd.f32 %v887, %v951
    %v955 = vadd.f32 %v888, %v951
    %v956 = vadd.f32 %v889, %v951
    %v957 = vadd.f32 %v890, %v951
    %v958 = vadd.f32 %v891, %v951
    %v959 = vadd.f32 %v892, %v951
    %v960 = vadd.f32 %v893, %v951
    %v961 = vadd.f32 %v894, %v951
    %v962 = vadd.f32 %v895, %v951
    %v963 = vadd.f32 %v896, %v951
    %v964 = vadd.f32 %v897, %v951
    %v965 = vadd.f32 %v898, %v951
    %v966 = vadd.f32 %v899, %v951
    %v967 = vadd.f32 %v900, %v951
    %v968 = vadd.f32 %v901, %v951
    %v969 = vadd.f32 %v902, %v951
    %v970 = vadd.f32 %v903, %v951
    %v971 = vadd.f32 %v904, %v951
    %v972 = vadd.f32 %v905, %v951
    %v973 = vadd.f32 %v906, %v951
    %v974 = vadd.f32 %v907, %v951
    %v975 = vadd.f32 %v908, %v951
    %v976 = vadd.f32 %v909, %v951
    %v977 = vadd.f32 %v910, %v951
    %v978 = vadd.f32 %v911, %v951
    %v979 = vadd.f32 %v912, %v951
    %v980 = vadd.f32 %v913, %v951
    %v981 = vadd.f32 %v914, %v951
    %v982 = vadd.f32 %v915, %v951
    %v983 = vadd.f32 %v916, %v951
    %v984 = vadd.f32 %v917, %v951
    %v985 = vadd.f32 %v918, %v951
    %v986 = vadd.f32 %v919, %v951
    %v987 = vadd.f32 %v920, %v951
    %v988 = vadd.f32 %v921, %v951
    %v989 = vadd.f32 %v922, %v951
    %v990 = vadd.f32 %v923, %v951
    %v991 = vadd.f32 %v924, %v951
    %v992 = vadd.f32 %v925, %v951
    %v993 = vadd.f32 %v926, %v951
    %v994 = vadd.f32 %v927, %v951
    %v995 = vadd.f32 %v928, %v951
    %v996 = vadd.f32 %v929, %v951
    %v997 = vadd.f32 %v930, %v951
    %v998 = vadd.f32 %v931, %v951
    %v999 = vadd.f32 %v932, %v951
    %v1000 = vadd.f32 %v933, %v951
    %v1001 = vadd.f32 %v934, %v951
    %v1002 = vadd.f32 %v935, %v951
    %v1003 = vadd.f32 %v936, %v951
    %v1004 = vadd.f32 %v937, %v951
    %v1005 = vadd.f32 %v938, %v951
    %v1006 = vadd.f32 %v939, %v951
    %v1007 = vadd.f32 %v940, %v951
    %v1008 = vadd.f32 %v941, %v951
    %v1009 = vadd.f32 %v942, %v951
    %v1010 = vadd.f32 %v943, %v951
    %v1011 = vadd.f32 %v944, %v951
    %v1012 = vadd.f32 %v945, %v951
    %v1013 = vadd.f32 %v946, %v951
    %v1014 = vadd.f32 %v947, %v951
    %v1015 = vadd.f32 %v948, %v951
    %v1016 = vadd.f32 %v949, %v951
    %vm1017 = vcmp.ge.f32.partialorder %v953, 0.0
    %vm1018 = vcmp.ge.f32.partialorder %v954, 0.0
    %vm1019 = vcmp.ge.f32.partialorder %v955, 0.0
    %vm1020 = vcmp.ge.f32.partialorder %v956, 0.0
    %vm1021 = vcmp.ge.f32.partialorder %v957, 0.0
    %vm1022 = vcmp.ge.f32.partialorder %v958, 0.0
    %vm1023 = vcmp.ge.f32.partialorder %v959, 0.0
    %vm1024 = vcmp.ge.f32.partialorder %v960, 0.0
    %vm1025 = vcmp.ge.f32.partialorder %v961, 0.0
    %vm1026 = vcmp.ge.f32.partialorder %v962, 0.0
    %vm1027 = vcmp.ge.f32.partialorder %v963, 0.0
    %vm1028 = vcmp.ge.f32.partialorder %v964, 0.0
    %vm1029 = vcmp.ge.f32.partialorder %v965, 0.0
    %vm1030 = vcmp.ge.f32.partialorder %v966, 0.0
    %vm1031 = vcmp.ge.f32.partialorder %v967, 0.0
    %vm1032 = vcmp.ge.f32.partialorder %v968, 0.0
    %vm1033 = vcmp.ge.f32.partialorder %v969, 0.0
    %vm1034 = vcmp.ge.f32.partialorder %v970, 0.0
    %vm1035 = vcmp.ge.f32.partialorder %v971, 0.0
    %vm1036 = vcmp.ge.f32.partialorder %v972, 0.0
    %vm1037 = vcmp.ge.f32.partialorder %v973, 0.0
    %vm1038 = vcmp.ge.f32.partialorder %v974, 0.0
    %vm1039 = vcmp.ge.f32.partialorder %v975, 0.0
    %vm1040 = vcmp.ge.f32.partialorder %v976, 0.0
    %vm1041 = vcmp.ge.f32.partialorder %v977, 0.0
    %vm1042 = vcmp.ge.f32.partialorder %v978, 0.0
    %vm1043 = vcmp.ge.f32.partialorder %v979, 0.0
    %vm1044 = vcmp.ge.f32.partialorder %v980, 0.0
    %vm1045 = vcmp.ge.f32.partialorder %v981, 0.0
    %vm1046 = vcmp.ge.f32.partialorder %v982, 0.0
    %vm1047 = vcmp.ge.f32.partialorder %v983, 0.0
    %vm1048 = vcmp.ge.f32.partialorder %v984, 0.0
    %vm1049 = vcmp.ge.f32.partialorder %v985, 0.0
    %vm1050 = vcmp.ge.f32.partialorder %v986, 0.0
    %vm1051 = vcmp.ge.f32.partialorder %v987, 0.0
    %vm1052 = vcmp.ge.f32.partialorder %v988, 0.0
    %vm1053 = vcmp.ge.f32.partialorder %v989, 0.0
    %vm1054 = vcmp.ge.f32.partialorder %v990, 0.0
    %vm1055 = vcmp.ge.f32.partialorder %v991, 0.0
    %vm1056 = vcmp.ge.f32.partialorder %v992, 0.0
    %vm1057 = vcmp.ge.f32.partialorder %v993, 0.0
    %vm1058 = vcmp.ge.f32.partialorder %v994, 0.0
    %vm1059 = vcmp.ge.f32.partialorder %v995, 0.0
    %vm1060 = vcmp.ge.f32.partialorder %v996, 0.0
    %vm1061 = vcmp.ge.f32.partialorder %v997, 0.0
    %vm1062 = vcmp.ge.f32.partialorder %v998, 0.0
    %vm1063 = vcmp.ge.f32.partialorder %v999, 0.0
    %vm1064 = vcmp.ge.f32.partialorder %v1000, 0.0
    %vm1065 = vcmp.ge.f32.partialorder %v1001, 0.0
    %vm1066 = vcmp.ge.f32.partialorder %v1002, 0.0
    %vm1067 = vcmp.ge.f32.partialorder %v1003, 0.0
    %vm1068 = vcmp.ge.f32.partialorder %v1004, 0.0
    %vm1069 = vcmp.ge.f32.partialorder %v1005, 0.0
    %vm1070 = vcmp.ge.f32.partialorder %v1006, 0.0
    %vm1071 = vcmp.ge.f32.partialorder %v1007, 0.0
    %vm1072 = vcmp.ge.f32.partialorder %v1008, 0.0
    %vm1073 = vcmp.ge.f32.partialorder %v1009, 0.0
    %vm1074 = vcmp.ge.f32.partialorder %v1010, 0.0
    %vm1075 = vcmp.ge.f32.partialorder %v1011, 0.0
    %vm1076 = vcmp.ge.f32.partialorder %v1012, 0.0
    %vm1077 = vcmp.ge.f32.partialorder %v1013, 0.0
    %vm1078 = vcmp.ge.f32.partialorder %v1014, 0.0
    %vm1079 = vcmp.ge.f32.partialorder %v1015, 0.0
    %vm1080 = vcmp.ge.f32.partialorder %v1016, 0.0
    %v1081 = vmul.f32 %v953, 0.2
    %v1082 = vmul.f32 %v954, 0.2
    %v1083 = vmul.f32 %v955, 0.2
    %v1084 = vmul.f32 %v956, 0.2
    %v1085 = vmul.f32 %v957, 0.2
    %v1086 = vmul.f32 %v958, 0.2
    %v1087 = vmul.f32 %v959, 0.2
    %v1088 = vmul.f32 %v960, 0.2
    %v1089 = vmul.f32 %v961, 0.2
    %v1090 = vmul.f32 %v962, 0.2
    %v1091 = vmul.f32 %v963, 0.2
    %v1092 = vmul.f32 %v964, 0.2
    %v1093 = vmul.f32 %v965, 0.2
    %v1094 = vmul.f32 %v966, 0.2
    %v1095 = vmul.f32 %v967, 0.2
    %v1096 = vmul.f32 %v968, 0.2
    %v1097 = vmul.f32 %v969, 0.2
    %v1098 = vmul.f32 %v970, 0.2
    %v1099 = vmul.f32 %v971, 0.2
    %v1100 = vmul.f32 %v972, 0.2
    %v1101 = vmul.f32 %v973, 0.2
    %v1102 = vmul.f32 %v974, 0.2
    %v1103 = vmul.f32 %v975, 0.2
    %v1104 = vmul.f32 %v976, 0.2
    %v1105 = vmul.f32 %v977, 0.2
    %v1106 = vmul.f32 %v978, 0.2
    %v1107 = vmul.f32 %v979, 0.2
    %v1108 = vmul.f32 %v980, 0.2
    %v1109 = vmul.f32 %v981, 0.2
    %v1110 = vmul.f32 %v982, 0.2
    %v1111 = vmul.f32 %v983, 0.2
    %v1112 = vmul.f32 %v984, 0.2
    %v1113 = vmul.f32 %v985, 0.2
    %v1114 = vmul.f32 %v986, 0.2
    %v1115 = vmul.f32 %v987, 0.2
    %v1116 = vmul.f32 %v988, 0.2
    %v1117 = vmul.f32 %v989, 0.2
    %v1118 = vmul.f32 %v990, 0.2
    %v1119 = vmul.f32 %v991, 0.2
    %v1120 = vmul.f32 %v992, 0.2
    %v1121 = vmul.f32 %v993, 0.2
    %v1122 = vmul.f32 %v994, 0.2
    %v1123 = vmul.f32 %v995, 0.2
    %v1124 = vmul.f32 %v996, 0.2
    %v1125 = vmul.f32 %v997, 0.2
    %v1126 = vmul.f32 %v998, 0.2
    %v1127 = vmul.f32 %v999, 0.2
    %v1128 = vmul.f32 %v1000, 0.2
    %v1129 = vmul.f32 %v1001, 0.2
    %v1130 = vmul.f32 %v1002, 0.2
    %v1131 = vmul.f32 %v1003, 0.2
    %v1132 = vmul.f32 %v1004, 0.2
    %v1133 = vmul.f32 %v1005, 0.2
    %v1134 = vmul.f32 %v1006, 0.2
    %v1135 = vmul.f32 %v1007, 0.2
    %v1136 = vmul.f32 %v1008, 0.2
    %v1137 = vmul.f32 %v1009, 0.2
    %v1138 = vmul.f32 %v1010, 0.2
    %v1139 = vmul.f32 %v1011, 0.2
    %v1140 = vmul.f32 %v1012, 0.2
    %v1141 = vmul.f32 %v1013, 0.2
    %v1142 = vmul.f32 %v1014, 0.2
    %v1143 = vmul.f32 %v1015, 0.2
    %v1144 = vmul.f32 %v1016, 0.2
    %v1145 = vsel %vm1017, %v953, %v1081
    %v1146 = vsel %vm1018, %v954, %v1082
    %v1147 = vsel %vm1019, %v955, %v1083
    %v1148 = vsel %vm1020, %v956, %v1084
    %v1149 = vsel %vm1021, %v957, %v1085
    %v1150 = vsel %vm1022, %v958, %v1086
    %v1151 = vsel %vm1023, %v959, %v1087
    %v1152 = vsel %vm1024, %v960, %v1088
    %v1153 = vsel %vm1025, %v961, %v1089
    %v1154 = vsel %vm1026, %v962, %v1090
    %v1155 = vsel %vm1027, %v963, %v1091
    %v1156 = vsel %vm1028, %v964, %v1092
    %v1157 = vsel %vm1029, %v965, %v1093
    %v1158 = vsel %vm1030, %v966, %v1094
    %v1159 = vsel %vm1031, %v967, %v1095
    %v1160 = vsel %vm1032, %v968, %v1096
    %v1161 = vsel %vm1033, %v969, %v1097
    %v1162 = vsel %vm1034, %v970, %v1098
    %v1163 = vsel %vm1035, %v971, %v1099
    %v1164 = vsel %vm1036, %v972, %v1100
    %v1165 = vsel %vm1037, %v973, %v1101
    %v1166 = vsel %vm1038, %v974, %v1102
    %v1167 = vsel %vm1039, %v975, %v1103
    %v1168 = vsel %vm1040, %v976, %v1104
    %v1169 = vsel %vm1041, %v977, %v1105
    %v1170 = vsel %vm1042, %v978, %v1106
    %v1171 = vsel %vm1043, %v979, %v1107
    %v1172 = vsel %vm1044, %v980, %v1108
    %v1173 = vsel %vm1045, %v981, %v1109
    %v1174 = vsel %vm1046, %v982, %v1110
    %v1175 = vsel %vm1047, %v983, %v1111
    %v1176 = vsel %vm1048, %v984, %v1112
    %v1177 = vsel %vm1049, %v985, %v1113
    %v1178 = vsel %vm1050, %v986, %v1114
    %v1179 = vsel %vm1051, %v987, %v1115
    %v1180 = vsel %vm1052, %v988, %v1116
    %v1181 = vsel %vm1053, %v989, %v1117
    %v1182 = vsel %vm1054, %v990, %v1118
    %v1183 = vsel %vm1055, %v991, %v1119
    %v1184 = vsel %vm1056, %v992, %v1120
    %v1185 = vsel %vm1057, %v993, %v1121
    %v1186 = vsel %vm1058, %v994, %v1122
    %v1187 = vsel %vm1059, %v995, %v1123
    %v1188 = vsel %vm1060, %v996, %v1124
    %v1189 = vsel %vm1061, %v997, %v1125
    %v1190 = vsel %vm1062, %v998, %v1126
    %v1191 = vsel %vm1063, %v999, %v1127
    %v1192 = vsel %vm1064, %v1000, %v1128
    %v1193 = vsel %vm1065, %v1001, %v1129
    %v1194 = vsel %vm1066, %v1002, %v1130
    %v1195 = vsel %vm1067, %v1003, %v1131
    %v1196 = vsel %vm1068, %v1004, %v1132
    %v1197 = vsel %vm1069, %v1005, %v1133
    %v1198 = vsel %vm1070, %v1006, %v1134
    %v1199 = vsel %vm1071, %v1007, %v1135
    %v1200 = vsel %vm1072, %v1008, %v1136
    %v1201 = vsel %vm1073, %v1009, %v1137
    %v1202 = vsel %vm1074, %v1010, %v1138
    %v1203 = vsel %vm1075, %v1011, %v1139
    %v1204 = vsel %vm1076, %v1012, %v1140
    %v1205 = vsel %vm1077, %v1013, %v1141
    %v1206 = vsel %vm1078, %v1014, %v1142
    %v1207 = vsel %vm1079, %v1015, %v1143
    %v1208 = vsel %vm1080, %v1016, %v1144
    %v1209 = vpack.c.bf16 %v1145, %v1145
    %v1210 = vpack.c.bf16 %v1146, %v1146
    %v1211 = vpack.c.bf16 %v1147, %v1147
    %v1212 = vpack.c.bf16 %v1148, %v1148
    %v1213 = vpack.c.bf16 %v1149, %v1149
    %v1214 = vpack.c.bf16 %v1150, %v1150
    %v1215 = vpack.c.bf16 %v1151, %v1151
    %v1216 = vpack.c.bf16 %v1152, %v1152
    %v1217 = vpack.c.bf16 %v1153, %v1153
    %v1218 = vpack.c.bf16 %v1154, %v1154
    %v1219 = vpack.c.bf16 %v1155, %v1155
    %v1220 = vpack.c.bf16 %v1156, %v1156
    %v1221 = vpack.c.bf16 %v1157, %v1157
    %v1222 = vpack.c.bf16 %v1158, %v1158
    %v1223 = vpack.c.bf16 %v1159, %v1159
    %v1224 = vpack.c.bf16 %v1160, %v1160
    %v1225 = vpack.c.bf16 %v1161, %v1161
    %v1226 = vpack.c.bf16 %v1162, %v1162
    %v1227 = vpack.c.bf16 %v1163, %v1163
    %v1228 = vpack.c.bf16 %v1164, %v1164
    %v1229 = vpack.c.bf16 %v1165, %v1165
    %v1230 = vpack.c.bf16 %v1166, %v1166
    %v1231 = vpack.c.bf16 %v1167, %v1167
    %v1232 = vpack.c.bf16 %v1168, %v1168
    %v1233 = vpack.c.bf16 %v1169, %v1169
    %v1234 = vpack.c.bf16 %v1170, %v1170
    %v1235 = vpack.c.bf16 %v1171, %v1171
    %v1236 = vpack.c.bf16 %v1172, %v1172
    %v1237 = vpack.c.bf16 %v1173, %v1173
    %v1238 = vpack.c.bf16 %v1174, %v1174
    %v1239 = vpack.c.bf16 %v1175, %v1175
    %v1240 = vpack.c.bf16 %v1176, %v1176
    %v1241 = vpack.c.bf16 %v1177, %v1177
    %v1242 = vpack.c.bf16 %v1178, %v1178
    %v1243 = vpack.c.bf16 %v1179, %v1179
    %v1244 = vpack.c.bf16 %v1180, %v1180
    %v1245 = vpack.c.bf16 %v1181, %v1181
    %v1246 = vpack.c.bf16 %v1182, %v1182
    %v1247 = vpack.c.bf16 %v1183, %v1183
    %v1248 = vpack.c.bf16 %v1184, %v1184
    %v1249 = vpack.c.bf16 %v1185, %v1185
    %v1250 = vpack.c.bf16 %v1186, %v1186
    %v1251 = vpack.c.bf16 %v1187, %v1187
    %v1252 = vpack.c.bf16 %v1188, %v1188
    %v1253 = vpack.c.bf16 %v1189, %v1189
    %v1254 = vpack.c.bf16 %v1190, %v1190
    %v1255 = vpack.c.bf16 %v1191, %v1191
    %v1256 = vpack.c.bf16 %v1192, %v1192
    %v1257 = vpack.c.bf16 %v1193, %v1193
    %v1258 = vpack.c.bf16 %v1194, %v1194
    %v1259 = vpack.c.bf16 %v1195, %v1195
    %v1260 = vpack.c.bf16 %v1196, %v1196
    %v1261 = vpack.c.bf16 %v1197, %v1197
    %v1262 = vpack.c.bf16 %v1198, %v1198
    %v1263 = vpack.c.bf16 %v1199, %v1199
    %v1264 = vpack.c.bf16 %v1200, %v1200
    %v1265 = vpack.c.bf16 %v1201, %v1201
    %v1266 = vpack.c.bf16 %v1202, %v1202
    %v1267 = vpack.c.bf16 %v1203, %v1203
    %v1268 = vpack.c.bf16 %v1204, %v1204
    %v1269 = vpack.c.bf16 %v1205, %v1205
    %v1270 = vpack.c.bf16 %v1206, %v1206
    %v1271 = vpack.c.bf16 %v1207, %v1207
    %v1272 = vpack.c.bf16 %v1208, %v1208
    %1273 = vst [vmem:[%s5] sm:$0xf] %v1209
    %1274 = vst [vmem:[%s5 + $0x4] sm:$0xf] %v1210
    %1275 = vst [vmem:[%s5 + $0x8] sm:$0xf] %v1211
    %1276 = vst [vmem:[%s5 + $0xc] sm:$0xf] %v1212
    %1277 = vst [vmem:[%s5 + $0x10] sm:$0xf] %v1213
    %1278 = vst [vmem:[%s5 + $0x14] sm:$0xf] %v1214
    %1279 = vst [vmem:[%s5 + $0x18] sm:$0xf] %v1215
    %1280 = vst [vmem:[%s5 + $0x1c] sm:$0xf] %v1216
    %1281 = vst [vmem:[%s5 + $0x20] sm:$0xf] %v1217
    %1282 = vst [vmem:[%s5 + $0x24] sm:$0xf] %v1218
    %1283 = vst [vmem:[%s5 + $0x28] sm:$0xf] %v1219
    %1284 = vst [vmem:[%s5 + $0x2c] sm:$0xf] %v1220
    %1285 = vst [vmem:[%s5 + $0x30] sm:$0xf] %v1221
    %1286 = vst [vmem:[%s5 + $0x34] sm:$0xf] %v1222
    %1287 = vst [vmem:[%s5 + $0x38] sm:$0xf] %v1223
    %1288 = vst [vmem:[%s5 + $0x3c] sm:$0xf] %v1224
    %1289 = vst [vmem:[%s5 + $0x40] sm:$0xf] %v1225
    %1290 = vst [vmem:[%s5 + $0x44] sm:$0xf] %v1226
    %1291 = vst [vmem:[%s5 + $0x48] sm:$0xf] %v1227
    %1292 = vst [vmem:[%s5 + $0x4c] sm:$0xf] %v1228
    %1293 = vst [vmem:[%s5 + $0x50] sm:$0xf] %v1229
    %1294 = vst [vmem:[%s5 + $0x54] sm:$0xf] %v1230
    %1295 = vst [vmem:[%s5 + $0x58] sm:$0xf] %v1231
    %1296 = vst [vmem:[%s5 + $0x5c] sm:$0xf] %v1232
    %1297 = vst [vmem:[%s5 + $0x60] sm:$0xf] %v1233
    %1298 = vst [vmem:[%s5 + $0x64] sm:$0xf] %v1234
    %1299 = vst [vmem:[%s5 + $0x68] sm:$0xf] %v1235
    %1300 = vst [vmem:[%s5 + $0x6c] sm:$0xf] %v1236
    %1301 = vst [vmem:[%s5 + $0x70] sm:$0xf] %v1237
    %1302 = vst [vmem:[%s5 + $0x74] sm:$0xf] %v1238
    %1303 = vst [vmem:[%s5 + $0x78] sm:$0xf] %v1239
    %1304 = vst [vmem:[%s5 + $0x7c] sm:$0xf] %v1240
    %1305 = vst [vmem:[%s5 + $0x80] sm:$0xf] %v1241
    %1306 = vst [vmem:[%s5 + $0x84] sm:$0xf] %v1242
    %1307 = vst [vmem:[%s5 + $0x88] sm:$0xf] %v1243
    %1308 = vst [vmem:[%s5 + $0x8c] sm:$0xf] %v1244
    %1309 = vst [vmem:[%s5 + $0x90] sm:$0xf] %v1245
    %1310 = vst [vmem:[%s5 + $0x94] sm:$0xf] %v1246
    %1311 = vst [vmem:[%s5 + $0x98] sm:$0xf] %v1247
    %1312 = vst [vmem:[%s5 + $0x9c] sm:$0xf] %v1248
    %1313 = vst [vmem:[%s5 + $0xa0] sm:$0xf] %v1249
    %1314 = vst [vmem:[%s5 + $0xa4] sm:$0xf] %v1250
    %1315 = vst [vmem:[%s5 + $0xa8] sm:$0xf] %v1251
    %1316 = vst [vmem:[%s5 + $0xac] sm:$0xf] %v1252
    %1317 = vst [vmem:[%s5 + $0xb0] sm:$0xf] %v1253
    %1318 = vst [vmem:[%s5 + $0xb4] sm:$0xf] %v1254
    %1319 = vst [vmem:[%s5 + $0xb8] sm:$0xf] %v1255
    %1320 = vst [vmem:[%s5 + $0xbc] sm:$0xf] %v1256
    %1321 = vst [vmem:[%s5 + $0xc0] sm:$0xf] %v1257
    %1322 = vst [vmem:[%s5 + $0xc4] sm:$0xf] %v1258
    %1323 = vst [vmem:[%s5 + $0xc8] sm:$0xf] %v1259
    %1324 = vst [vmem:[%s5 + $0xcc] sm:$0xf] %v1260
    %1325 = vst [vmem:[%s5 + $0xd0] sm:$0xf] %v1261
    %1326 = vst [vmem:[%s5 + $0xd4] sm:$0xf] %v1262
    %1327 = vst [vmem:[%s5 + $0xd8] sm:$0xf] %v1263
    %1328 = vst [vmem:[%s5 + $0xdc] sm:$0xf] %v1264
    %1329 = vst [vmem:[%s5 + $0xe0] sm:$0xf] %v1265
    %1330 = vst [vmem:[%s5 + $0xe4] sm:$0xf] %v1266
    %1331 = vst [vmem:[%s5 + $0xe8] sm:$0xf] %v1267
    %1332 = vst [vmem:[%s5 + $0xec] sm:$0xf] %v1268
    %1333 = vst [vmem:[%s5 + $0xf0] sm:$0xf] %v1269
    %1334 = vst [vmem:[%s5 + $0xf4] sm:$0xf] %v1270
    %1335 = vst [vmem:[%s5 + $0xf8] sm:$0xf] %v1271
    %1336 = vst [vmem:[%s5 + $0xfc] sm:$0xf] %v1272
  $region29: #{_lambda_.5} parent=0 // pred_fallthru
    _
  // Predicated region
  $region30: #{_lambda_.5} parent=0 // pred_check
    _
  $region31: #{_lambda_.5} parent=0 // pred_check_branch
    %1338 = sbr.rel (0) target = $region33
  $region32: #{_lambda_.5} parent=0 // pred_region
    _
  $region33: #{_lambda_.5} parent=0 // pred_fallthru
    _
  // Predicated region
  $region34: #{_lambda_.5} parent=0 // pred_check
    _
  $region35: #{_lambda_.5} parent=0 // pred_check_branch
    %1340 = sbr.rel (0) target = $region37
  $region36: #{_lambda_.5} parent=0 // pred_region
    _
  $region37: #{_lambda_.5} parent=0 // pred_fallthru
    _

// kernel: _lambda_.6
$region0: #{_lambda_.6}
  #allocation0 [shape = 'u32[]', space=smem, size = 0x4, offset = 0x4, fixed_abs, tag = 'smem constant byte address 0x4 - core index']
  #allocation1 [shape = 'u32[72,128]{1,0:T(1,128)}', space=vmem, size = 0x9000, scoped, tag = 'internal scratch']
  #allocation2 [shape = 'f32[128,128]{1,0:T(8,128)}', space=vmem, size = 0x10000, scoped, tag = 'scratch operand']
  #allocation3 [shape = 'f32[1,128]{1,0:T(1,128)}', space=vmem, size = 0x200, scoped, tag = 'scratch operand']
  #allocation4 [shape = 'f32[1,128]{1,0:T(1,128)}', space=vmem, size = 0x200, scoped, tag = 'scratch operand']
  %s0 = inlined_call_operand.vmem [shape: bf16[128,256], index: 0, kind: input, shape index: {}]
  %s1 = inlined_call_operand.vmem [shape: bf16[256,128], index: 1, kind: input, shape index: {}]
  %s2 = inlined_call_operand.vmem [shape: f32[1,128], index: 2, kind: input, shape index: {}]
  %s3 = inlined_call_operand.vmem [shape: f32[1,128], index: 3, kind: input, shape index: {}]
  %s4 = inlined_call_operand.vmem [shape: f32[1,128], index: 4, kind: input, shape index: {}]
  %s5 = inlined_call_operand.vmem [shape: bf16[128,128], index: 5, kind: output, shape index: {}]
  %s6 = sld [smem:[#allocation0]]
  $region38: #{_lambda_.6} parent=0
    _
  %s8 = ssub.s32 1, %s6
  %s9 = scalar_select 0, %s8, %s6
  // Predicated region
  $region2: #{_lambda_.6} parent=0 // pred_check
    _
  $region3: #{_lambda_.6} parent=0 // pred_check_branch
    %11 = sbr.rel (0) target = $region5
  $region4: #{_lambda_.6} parent=0 // pred_region
    _
  $region5: #{_lambda_.6} parent=0 // pred_fallthru
    _
  // Predicated region
  $region6: #{_lambda_.6} parent=0 // pred_check
    _
  $region7: #{_lambda_.6} parent=0 // pred_check_branch
    %13 = sbr.rel (0) target = $region9
  $region8: #{_lambda_.6} parent=0 // pred_region
    _
  $region9: #{_lambda_.6} parent=0 // pred_fallthru
    _
  // Predicated region
  $region10: #{_lambda_.6} parent=0 // pred_check
    _
  $region11: #{_lambda_.6} parent=0 // pred_check_branch
    %15 = sbr.rel (0) target = $region13
  $region12: #{_lambda_.6} parent=0 // pred_region
    _
  $region13: #{_lambda_.6} parent=0 // pred_fallthru
    _
  // Predicated region
  $region14: #{_lambda_.6} parent=0 // pred_check
    _
  $region15: #{_lambda_.6} parent=0 // pred_check_branch
    %17 = sbr.rel (0) target = $region17
  $region16: #{_lambda_.6} parent=0 // pred_region
    _
  $region17: #{_lambda_.6} parent=0 // pred_fallthru
    _
  // Predicated region
  $region18: #{_lambda_.6} parent=0 // pred_check
    _
  $region19: #{_lambda_.6} parent=0 // pred_check_branch
    %19 = sbr.rel (0) target = $region21
  $region20: #{_lambda_.6} parent=0 // pred_region
    _
  $region21: #{_lambda_.6} parent=0 // pred_fallthru
    _
  %p20 = scmp.eq.s32.totalorder 0, 0
  // Predicated region
  $region22: #{_lambda_.6} parent=0 // pred_check
    %p21 = pneg %p20
  $region23: #{_lambda_.6} parent=0 // pred_check_branch
    %23 = sbr.rel (%p21) target = $region25
  $region24: #{_lambda_.6} parent=0 // pred_region
    %24 = vst [vmem:[#allocation3] sm:$0x1] 0.0
    %25 = vst [vmem:[#allocation4] sm:$0x1] 0.0
  $region25: #{_lambda_.6} parent=0 // pred_fallthru
    _
  %v26 = vld [vmem:[%s0] sm:$0xff]
  %v27 = vld [vmem:[%s0 + $0x8] sm:$0xff]
  %v28 = vld [vmem:[%s0 + $0x10] sm:$0xff]
  %v29 = vld [vmem:[%s0 + $0x18] sm:$0xff]
  %v30 = vld [vmem:[%s0 + $0x20] sm:$0xff]
  %v31 = vld [vmem:[%s0 + $0x28] sm:$0xff]
  %v32 = vld [vmem:[%s0 + $0x30] sm:$0xff]
  %v33 = vld [vmem:[%s0 + $0x38] sm:$0xff]
  %v34 = vld [vmem:[%s0 + $0x40] sm:$0xff]
  %v35 = vld [vmem:[%s0 + $0x48] sm:$0xff]
  %v36 = vld [vmem:[%s0 + $0x50] sm:$0xff]
  %v37 = vld [vmem:[%s0 + $0x58] sm:$0xff]
  %v38 = vld [vmem:[%s0 + $0x60] sm:$0xff]
  %v39 = vld [vmem:[%s0 + $0x68] sm:$0xff]
  %v40 = vld [vmem:[%s0 + $0x70] sm:$0xff]
  %v41 = vld [vmem:[%s0 + $0x78] sm:$0xff]
  %v42 = vld [vmem:[%s1] sm:$0xf]
  %v43 = vld [vmem:[%s1 + $0x4] sm:$0xf]
  %v44 = vld [vmem:[%s1 + $0x8] sm:$0xf]
  %v45 = vld [vmem:[%s1 + $0xc] sm:$0xf]
  %v46 = vld [vmem:[%s1 + $0x10] sm:$0xf]
  %v47 = vld [vmem:[%s1 + $0x14] sm:$0xf]
  %v48 = vld [vmem:[%s1 + $0x18] sm:$0xf]
  %v49 = vld [vmem:[%s1 + $0x1c] sm:$0xf]
  %v50 = vld [vmem:[%s1 + $0x20] sm:$0xf]
  %v51 = vld [vmem:[%s1 + $0x24] sm:$0xf]
  %v52 = vld [vmem:[%s1 + $0x28] sm:$0xf]
  %v53 = vld [vmem:[%s1 + $0x2c] sm:$0xf]
  %v54 = vld [vmem:[%s1 + $0x30] sm:$0xf]
  %v55 = vld [vmem:[%s1 + $0x34] sm:$0xf]
  %v56 = vld [vmem:[%s1 + $0x38] sm:$0xf]
  %v57 = vld [vmem:[%s1 + $0x3c] sm:$0xf]
  %v58 = vld [vmem:[%s1 + $0x40] sm:$0xf]
  %v59 = vld [vmem:[%s1 + $0x44] sm:$0xf]
  %v60 = vld [vmem:[%s1 + $0x48] sm:$0xf]
  %v61 = vld [vmem:[%s1 + $0x4c] sm:$0xf]
  %v62 = vld [vmem:[%s1 + $0x50] sm:$0xf]
  %v63 = vld [vmem:[%s1 + $0x54] sm:$0xf]
  %v64 = vld [vmem:[%s1 + $0x58] sm:$0xf]
  %v65 = vld [vmem:[%s1 + $0x5c] sm:$0xf]
  %v66 = vld [vmem:[%s1 + $0x60] sm:$0xf]
  %v67 = vld [vmem:[%s1 + $0x64] sm:$0xf]
  %v68 = vld [vmem:[%s1 + $0x68] sm:$0xf]
  %v69 = vld [vmem:[%s1 + $0x6c] sm:$0xf]
  %v70 = vld [vmem:[%s1 + $0x70] sm:$0xf]
  %v71 = vld [vmem:[%s1 + $0x74] sm:$0xf]
  %v72 = vld [vmem:[%s1 + $0x78] sm:$0xf]
  %v73 = vld [vmem:[%s1 + $0x7c] sm:$0xf]
  %v74 = vld [vmem:[%s2] sm:$0x1]
  %v76 = vperm.slane %v74, 0
  %v94 = vunpack.c.l.b16 %v26
  %v95 = vunpack.c.h.b16 %v26
  %v96 = vunpack.c.l.b16 %v27
  %v97 = vunpack.c.h.b16 %v27
  %v98 = vunpack.c.l.b16 %v28
  %v99 = vunpack.c.h.b16 %v28
  %v100 = vunpack.c.l.b16 %v29
  %v101 = vunpack.c.h.b16 %v29
  %v102 = vunpack.c.l.b16 %v30
  %v103 = vunpack.c.h.b16 %v30
  %v104 = vunpack.c.l.b16 %v31
  %v105 = vunpack.c.h.b16 %v31
  %v106 = vunpack.c.l.b16 %v32
  %v107 = vunpack.c.h.b16 %v32
  %v108 = vunpack.c.l.b16 %v33
  %v109 = vunpack.c.h.b16 %v33
  %v110 = vunpack.c.l.b16 %v34
  %v111 = vunpack.c.h.b16 %v34
  %v112 = vunpack.c.l.b16 %v35
  %v113 = vunpack.c.h.b16 %v35
  %v114 = vunpack.c.l.b16 %v36
  %v115 = vunpack.c.h.b16 %v36
  %v116 = vunpack.c.l.b16 %v37
  %v117 = vunpack.c.h.b16 %v37
  %v118 = vunpack.c.l.b16 %v38
  %v119 = vunpack.c.h.b16 %v38
  %v120 = vunpack.c.l.b16 %v39
  %v121 = vunpack.c.h.b16 %v39
  %v122 = vunpack.c.l.b16 %v40
  %v123 = vunpack.c.h.b16 %v40
  %v124 = vunpack.c.l.b16 %v41
  %v125 = vunpack.c.h.b16 %v41
  %v126 = vpack.c.b16 %v96, %v94
  %v127 = vpack.c.b16 %v97, %v95
  %v128 = vpack.c.b16 %v100, %v98
  %v129 = vpack.c.b16 %v101, %v99
  %v130 = vpack.c.b16 %v104, %v102
  %v131 = vpack.c.b16 %v105, %v103
  %v132 = vpack.c.b16 %v108, %v106
  %v133 = vpack.c.b16 %v109, %v107
  %v134 = vpack.c.b16 %v112, %v110
  %v135 = vpack.c.b16 %v113, %v111
  %v136 = vpack.c.b16 %v116, %v114
  %v137 = vpack.c.b16 %v117, %v115
  %v138 = vpack.c.b16 %v120, %v118
  %v139 = vpack.c.b16 %v121, %v119
  %v140 = vpack.c.b16 %v124, %v122
  %v141 = vpack.c.b16 %v125, %v123
  %v190 = vunpack.c.l.b16 %v42
  %v191 = vunpack.c.l.b16 %v43
  %v192 = vunpack.c.l.b16 %v44
  %v193 = vunpack.c.l.b16 %v45
  %v194 = vunpack.c.l.b16 %v46
  %v195 = vunpack.c.l.b16 %v47
  %v196 = vunpack.c.l.b16 %v48
  %v197 = vunpack.c.l.b16 %v49
  %v198 = vunpack.c.l.b16 %v50
  %v199 = vunpack.c.l.b16 %v51
  %v200 = vunpack.c.l.b16 %v52
  %v201 = vunpack.c.l.b16 %v53
  %v202 = vunpack.c.l.b16 %v54
  %v203 = vunpack.c.l.b16 %v55
  %v204 = vunpack.c.l.b16 %v56
  %v205 = vunpack.c.l.b16 %v57
  %v206 = vunpack.c.l.b16 %v58
  %v207 = vunpack.c.l.b16 %v59
  %v208 = vunpack.c.l.b16 %v60
  %v209 = vunpack.c.l.b16 %v61
  %v210 = vunpack.c.l.b16 %v62
  %v211 = vunpack.c.l.b16 %v63
  %v212 = vunpack.c.l.b16 %v64
  %v213 = vunpack.c.l.b16 %v65
  %v214 = vunpack.c.l.b16 %v66
  %v215 = vunpack.c.l.b16 %v67
  %v216 = vunpack.c.l.b16 %v68
  %v217 = vunpack.c.l.b16 %v69
  %v218 = vunpack.c.l.b16 %v70
  %v219 = vunpack.c.l.b16 %v71
  %v220 = vunpack.c.l.b16 %v72
  %v221 = vunpack.c.l.b16 %v73
  %v222 = vpack.c.b16 %v191, %v190
  %v223 = vpack.c.b16 %v193, %v192
  %v224 = vpack.c.b16 %v195, %v194
  %v225 = vpack.c.b16 %v197, %v196
  %v226 = vpack.c.b16 %v199, %v198
  %v227 = vpack.c.b16 %v201, %v200
  %v228 = vpack.c.b16 %v203, %v202
  %v229 = vpack.c.b16 %v205, %v204
  %v230 = vpack.c.b16 %v207, %v206
  %v231 = vpack.c.b16 %v209, %v208
  %v232 = vpack.c.b16 %v211, %v210
  %v233 = vpack.c.b16 %v213, %v212
  %v234 = vpack.c.b16 %v215, %v214
  %v235 = vpack.c.b16 %v217, %v216
  %v236 = vpack.c.b16 %v219, %v218
  %v237 = vpack.c.b16 %v221, %v220
  %254 = vmatpush.bf16.msra.mxu0 %v229
  %255 = vmatpush.bf16.msra.mxu0 %v228
  %256 = vmatpush.bf16.msra.mxu0 %v227
  %257 = vmatpush.bf16.msra.mxu0 %v226
  %258 = vmatpush.bf16.msra.mxu0 %v225
  %259 = vmatpush.bf16.msra.mxu0 %v224
  %260 = vmatpush.bf16.msra.mxu0 %v223
  %261 = vmatpush.bf16.msra.mxu0 %v222
  %262 = vmatmul.bf16.gmra.mxu0 %v126
  %v263 = vpop.f32.mrf.mxu0
  %v264 = vadd.f32 %v76, %v263
  %v265 = vpop.f32.mrf.mxu0
  %v266 = vadd.f32 %v76, %v265
  %267 = vmatmul.bf16.gmra.mxu0 %v128
  %v268 = vpop.f32.mrf.mxu0
  %v269 = vadd.f32 %v76, %v268
  %v270 = vpop.f32.mrf.mxu0
  %v271 = vadd.f32 %v76, %v270
  %272 = vmatmul.bf16.gmra.mxu0 %v130
  %v273 = vpop.f32.mrf.mxu0
  %v274 = vadd.f32 %v76, %v273
  %v275 = vpop.f32.mrf.mxu0
  %v276 = vadd.f32 %v76, %v275
  %277 = vmatmul.bf16.gmra.mxu0 %v132
  %v278 = vpop.f32.mrf.mxu0
  %v279 = vadd.f32 %v76, %v278
  %v280 = vpop.f32.mrf.mxu0
  %v281 = vadd.f32 %v76, %v280
  %282 = vmatmul.bf16.gmra.mxu0 %v134
  %v283 = vpop.f32.mrf.mxu0
  %v284 = vadd.f32 %v76, %v283
  %v285 = vpop.f32.mrf.mxu0
  %v286 = vadd.f32 %v76, %v285
  %287 = vmatmul.bf16.gmra.mxu0 %v136
  %v288 = vpop.f32.mrf.mxu0
  %v289 = vadd.f32 %v76, %v288
  %v290 = vpop.f32.mrf.mxu0
  %v291 = vadd.f32 %v76, %v290
  %292 = vmatmul.bf16.gmra.mxu0 %v138
  %v293 = vpop.f32.mrf.mxu0
  %v294 = vadd.f32 %v76, %v293
  %v295 = vpop.f32.mrf.mxu0
  %v296 = vadd.f32 %v76, %v295
  %297 = vmatmul.bf16.gmra.mxu0 %v140
  %v298 = vpop.f32.mrf.mxu0
  %v299 = vadd.f32 %v76, %v298
  %v300 = vpop.f32.mrf.mxu0
  %v301 = vadd.f32 %v76, %v300
  %302 = vdwg.mxu0
  %303 = vmatpush.bf16.msra.mxu0 %v237
  %304 = vmatpush.bf16.msra.mxu0 %v236
  %305 = vmatpush.bf16.msra.mxu0 %v235
  %306 = vmatpush.bf16.msra.mxu0 %v234
  %307 = vmatpush.bf16.msra.mxu0 %v233
  %308 = vmatpush.bf16.msra.mxu0 %v232
  %309 = vmatpush.bf16.msra.mxu0 %v231
  %310 = vmatpush.bf16.msra.mxu0 %v230
  %311 = vmatmul.bf16.gmra.mxu0 %v127
  %v312 = vpop.f32.mrf.mxu0
  %v313 = vadd.f32 %v264, %v312
  %v314 = vpop.f32.mrf.mxu0
  %v315 = vadd.f32 %v266, %v314
  %316 = vmatmul.bf16.gmra.mxu0 %v129
  %v317 = vpop.f32.mrf.mxu0
  %v318 = vadd.f32 %v269, %v317
  %v319 = vpop.f32.mrf.mxu0
  %v320 = vadd.f32 %v271, %v319
  %321 = vmatmul.bf16.gmra.mxu0 %v131
  %v322 = vpop.f32.mrf.mxu0
  %v323 = vadd.f32 %v274, %v322
  %v324 = vpop.f32.mrf.mxu0
  %v325 = vadd.f32 %v276, %v324
  %326 = vmatmul.bf16.gmra.mxu0 %v133
  %v327 = vpop.f32.mrf.mxu0
  %v328 = vadd.f32 %v279, %v327
  %v329 = vpop.f32.mrf.mxu0
  %v330 = vadd.f32 %v281, %v329
  %331 = vmatmul.bf16.gmra.mxu0 %v135
  %v332 = vpop.f32.mrf.mxu0
  %v333 = vadd.f32 %v284, %v332
  %v334 = vpop.f32.mrf.mxu0
  %v335 = vadd.f32 %v286, %v334
  %336 = vmatmul.bf16.gmra.mxu0 %v137
  %v337 = vpop.f32.mrf.mxu0
  %v338 = vadd.f32 %v289, %v337
  %v339 = vpop.f32.mrf.mxu0
  %v340 = vadd.f32 %v291, %v339
  %341 = vmatmul.bf16.gmra.mxu0 %v139
  %v342 = vpop.f32.mrf.mxu0
  %v343 = vadd.f32 %v294, %v342
  %v344 = vpop.f32.mrf.mxu0
  %v345 = vadd.f32 %v296, %v344
  %346 = vmatmul.bf16.gmra.mxu0 %v141
  %v347 = vpop.f32.mrf.mxu0
  %v348 = vadd.f32 %v299, %v347
  %v349 = vpop.f32.mrf.mxu0
  %v350 = vadd.f32 %v301, %v349
  %351 = vdwg.mxu0
  %s352 = smul.u32 0, 128
  %s353 = scalar_lea.vmem [#allocation2], %s352
  %354 = vst [vmem:[%s353] sm:$0xff] %v313
  %355 = vst [vmem:[%s353 + $0x8] sm:$0xff] %v315
  %356 = vst [vmem:[%s353 + $0x10] sm:$0xff] %v318
  %357 = vst [vmem:[%s353 + $0x18] sm:$0xff] %v320
  %358 = vst [vmem:[%s353 + $0x20] sm:$0xff] %v323
  %359 = vst [vmem:[%s353 + $0x28] sm:$0xff] %v325
  %360 = vst [vmem:[%s353 + $0x30] sm:$0xff] %v328
  %361 = vst [vmem:[%s353 + $0x38] sm:$0xff] %v330
  %362 = vst [vmem:[%s353 + $0x40] sm:$0xff] %v333
  %363 = vst [vmem:[%s353 + $0x48] sm:$0xff] %v335
  %364 = vst [vmem:[%s353 + $0x50] sm:$0xff] %v338
  %365 = vst [vmem:[%s353 + $0x58] sm:$0xff] %v340
  %366 = vst [vmem:[%s353 + $0x60] sm:$0xff] %v343
  %367 = vst [vmem:[%s353 + $0x68] sm:$0xff] %v345
  %368 = vst [vmem:[%s353 + $0x70] sm:$0xff] %v348
  %369 = vst [vmem:[%s353 + $0x78] sm:$0xff] %v350
  %v370 = vld [vmem:[#allocation3] sm:$0x1]
  %v371 = vadd.f32 %v313, %v315
  %v372 = vadd.f32 %v371, %v318
  %v373 = vadd.f32 %v372, %v320
  %v374 = vadd.f32 %v373, %v323
  %v375 = vadd.f32 %v374, %v325
  %v376 = vadd.f32 %v375, %v328
  %v377 = vadd.f32 %v376, %v330
  %v378 = vadd.f32 %v377, %v333
  %v379 = vadd.f32 %v378, %v335
  %v380 = vadd.f32 %v379, %v338
  %v381 = vadd.f32 %v380, %v340
  %v382 = vadd.f32 %v381, %v343
  %v383 = vadd.f32 %v382, %v345
  %v384 = vadd.f32 %v383, %v348
  %v385 = vadd.f32 %v384, %v350
  %v386 = vrot.slane %v385, 4
  %v387 = vadd.f32 %v385, %v386
  %v388 = vrot.slane %v387, 2
  %v389 = vadd.f32 %v387, %v388
  %v390 = vrot.slane %v389, 1
  %v391 = vadd.f32 %v389, %v390
  %v392 = vadd.f32 %v370, %v391
  %393 = vst [vmem:[#allocation3] sm:$0x1] %v392
  %v394 = vld [vmem:[#allocation4] sm:$0x1]
  %v395 = vmul.f32 %v313, %v313
  %v396 = vmul.f32 %v315, %v315
  %v397 = vmul.f32 %v318, %v318
  %v398 = vmul.f32 %v320, %v320
  %v399 = vmul.f32 %v323, %v323
  %v400 = vmul.f32 %v325, %v325
  %v401 = vmul.f32 %v328, %v328
  %v402 = vmul.f32 %v330, %v330
  %v403 = vmul.f32 %v333, %v333
  %v404 = vmul.f32 %v335, %v335
  %v405 = vmul.f32 %v338, %v338
  %v406 = vmul.f32 %v340, %v340
  %v407 = vmul.f32 %v343, %v343
  %v408 = vmul.f32 %v345, %v345
  %v409 = vmul.f32 %v348, %v348
  %v410 = vmul.f32 %v350, %v350
  %v411 = vadd.f32 %v395, %v396
  %v412 = vadd.f32 %v411, %v397
  %v413 = vadd.f32 %v412, %v398
  %v414 = vadd.f32 %v413, %v399
  %v415 = vadd.f32 %v414, %v400
  %v416 = vadd.f32 %v415, %v401
  %v417 = vadd.f32 %v416, %v402
  %v418 = vadd.f32 %v417, %v403
  %v419 = vadd.f32 %v418, %v404
  %v420 = vadd.f32 %v419, %v405
  %v421 = vadd.f32 %v420, %v406
  %v422 = vadd.f32 %v421, %v407
  %v423 = vadd.f32 %v422, %v408
  %v424 = vadd.f32 %v423, %v409
  %v425 = vadd.f32 %v424, %v410
  %v426 = vrot.slane %v425, 4
  %v427 = vadd.f32 %v425, %v426
  %v428 = vrot.slane %v427, 2
  %v429 = vadd.f32 %v427, %v428
  %v430 = vrot.slane %v429, 1
  %v431 = vadd.f32 %v429, %v430
  %v432 = vadd.f32 %v394, %v431
  %433 = vst [vmem:[#allocation4] sm:$0x1] %v432
  // Predicated region
  $region26: #{_lambda_.6} parent=0 // pred_check
    %p434 = pneg %p20
  $region27: #{_lambda_.6} parent=0 // pred_check_branch
    %436 = sbr.rel (%p434) target = $region29
  $region28: #{_lambda_.6} parent=0 // pred_region
    %v437 = vld [vmem:[#allocation3] sm:$0x1]
    %v438 = vmul.f32 %v437, 0.0078125
    %v439 = vld [vmem:[#allocation4] sm:$0x1]
    %v440 = vmul.f32 %v439, 0.0078125
    %v441 = vmul.f32 %v438, %v438
    %v442 = vsub.f32 %v440, %v441
    %v443 = vmax.f32 %v442, 0.0
    %v444 = vld [vmem:[%s3] sm:$0x1]
    %v445 = vadd.f32 %v443, 1e-05
    %v446 = vrsqrt.pop %v445
    %v447 = vmul.f32 %v446, %v445
    %v448 = vmul.f32 %v447, %v446
    %v449 = vmul.f32 0.5, %v448
    %v450 = vsub.f32 1.5, %v449
    %v451 = vmul.f32 %v446, %v450
    %vm452 = vweird.f32 %v445
    %vm453 = vweird.f32 %v446
    %vm454 = vmor %vm452, %vm453
    %v455 = vsel %vm454, %v446, %v451
    %v456 = vmul.f32 %v444, %v455
    %v457 = vld [vmem:[%s4] sm:$0x1]
    %v458 = vmul.f32 %v438, %v456
    %v459 = vsub.f32 %v457, %v458
    %v460 = vld [vmem:[#allocation2] sm:$0xff]
    %v461 = vld [vmem:[#allocation2 + $0x8] sm:$0xff]
    %v462 = vld [vmem:[#allocation2 + $0x10] sm:$0xff]
    %v463 = vld [vmem:[#allocation2 + $0x18] sm:$0xff]
    %v464 = vld [vmem:[#allocation2 + $0x20] sm:$0xff]
    %v465 = vld [vmem:[#allocation2 + $0x28] sm:$0xff]
    %v466 = vld [vmem:[#allocation2 + $0x30] sm:$0xff]
    %v467 = vld [vmem:[#allocation2 + $0x38] sm:$0xff]
    %v468 = vld [vmem:[#allocation2 + $0x40] sm:$0xff]
    %v469 = vld [vmem:[#allocation2 + $0x48] sm:$0xff]
    %v470 = vld [vmem:[#allocation2 + $0x50] sm:$0xff]
    %v471 = vld [vmem:[#allocation2 + $0x58] sm:$0xff]
    %v472 = vld [vmem:[#allocation2 + $0x60] sm:$0xff]
    %v473 = vld [vmem:[#allocation2 + $0x68] sm:$0xff]
    %v474 = vld [vmem:[#allocation2 + $0x70] sm:$0xff]
    %v475 = vld [vmem:[#allocation2 + $0x78] sm:$0xff]
    %v477 = vperm.slane %v456, 0
    %v479 = vmul.f32 %v460, %v477
    %v480 = vmul.f32 %v461, %v477
    %v481 = vmul.f32 %v462, %v477
    %v482 = vmul.f32 %v463, %v477
    %v483 = vmul.f32 %v464, %v477
    %v484 = vmul.f32 %v465, %v477
    %v485 = vmul.f32 %v466, %v477
    %v486 = vmul.f32 %v467, %v477
    %v487 = vmul.f32 %v468, %v477
    %v488 = vmul.f32 %v469, %v477
    %v489 = vmul.f32 %v470, %v477
    %v490 = vmul.f32 %v471, %v477
    %v491 = vmul.f32 %v472, %v477
    %v492 = vmul.f32 %v473, %v477
    %v493 = vmul.f32 %v474, %v477
    %v494 = vmul.f32 %v475, %v477
    %v496 = vperm.slane %v459, 0
    %v498 = vadd.f32 %v479, %v496
    %v499 = vadd.f32 %v480, %v496
    %v500 = vadd.f32 %v481, %v496
    %v501 = vadd.f32 %v482, %v496
    %v502 = vadd.f32 %v483, %v496
    %v503 = vadd.f32 %v484, %v496
    %v504 = vadd.f32 %v485, %v496
    %v505 = vadd.f32 %v486, %v496
    %v506 = vadd.f32 %v487, %v496
    %v507 = vadd.f32 %v488, %v496
    %v508 = vadd.f32 %v489, %v496
    %v509 = vadd.f32 %v490, %v496
    %v510 = vadd.f32 %v491, %v496
    %v511 = vadd.f32 %v492, %v496
    %v512 = vadd.f32 %v493, %v496
    %v513 = vadd.f32 %v494, %v496
    %vm514 = vcmp.ge.f32.partialorder %v498, 0.0
    %vm515 = vcmp.ge.f32.partialorder %v499, 0.0
    %vm516 = vcmp.ge.f32.partialorder %v500, 0.0
    %vm517 = vcmp.ge.f32.partialorder %v501, 0.0
    %vm518 = vcmp.ge.f32.partialorder %v502, 0.0
    %vm519 = vcmp.ge.f32.partialorder %v503, 0.0
    %vm520 = vcmp.ge.f32.partialorder %v504, 0.0
    %vm521 = vcmp.ge.f32.partialorder %v505, 0.0
    %vm522 = vcmp.ge.f32.partialorder %v506, 0.0
    %vm523 = vcmp.ge.f32.partialorder %v507, 0.0
    %vm524 = vcmp.ge.f32.partialorder %v508, 0.0
    %vm525 = vcmp.ge.f32.partialorder %v509, 0.0
    %vm526 = vcmp.ge.f32.partialorder %v510, 0.0
    %vm527 = vcmp.ge.f32.partialorder %v511, 0.0
    %vm528 = vcmp.ge.f32.partialorder %v512, 0.0
    %vm529 = vcmp.ge.f32.partialorder %v513, 0.0
    %v530 = vmul.f32 %v498, 0.2
    %v531 = vmul.f32 %v499, 0.2
    %v532 = vmul.f32 %v500, 0.2
    %v533 = vmul.f32 %v501, 0.2
    %v534 = vmul.f32 %v502, 0.2
    %v535 = vmul.f32 %v503, 0.2
    %v536 = vmul.f32 %v504, 0.2
    %v537 = vmul.f32 %v505, 0.2
    %v538 = vmul.f32 %v506, 0.2
    %v539 = vmul.f32 %v507, 0.2
    %v540 = vmul.f32 %v508, 0.2
    %v541 = vmul.f32 %v509, 0.2
    %v542 = vmul.f32 %v510, 0.2
    %v543 = vmul.f32 %v511, 0.2
    %v544 = vmul.f32 %v512, 0.2
    %v545 = vmul.f32 %v513, 0.2
    %v546 = vsel %vm514, %v498, %v530
    %v547 = vsel %vm515, %v499, %v531
    %v548 = vsel %vm516, %v500, %v532
    %v549 = vsel %vm517, %v501, %v533
    %v550 = vsel %vm518, %v502, %v534
    %v551 = vsel %vm519, %v503, %v535
    %v552 = vsel %vm520, %v504, %v536
    %v553 = vsel %vm521, %v505, %v537
    %v554 = vsel %vm522, %v506, %v538
    %v555 = vsel %vm523, %v507, %v539
    %v556 = vsel %vm524, %v508, %v540
    %v557 = vsel %vm525, %v509, %v541
    %v558 = vsel %vm526, %v510, %v542
    %v559 = vsel %vm527, %v511, %v543
    %v560 = vsel %vm528, %v512, %v544
    %v561 = vsel %vm529, %v513, %v545
    %v562 = vpack.c.bf16 %v546, %v546
    %v563 = vpack.c.bf16 %v547, %v547
    %v564 = vpack.c.bf16 %v548, %v548
    %v565 = vpack.c.bf16 %v549, %v549
    %v566 = vpack.c.bf16 %v550, %v550
    %v567 = vpack.c.bf16 %v551, %v551
    %v568 = vpack.c.bf16 %v552, %v552
    %v569 = vpack.c.bf16 %v553, %v553
    %v570 = vpack.c.bf16 %v554, %v554
    %v571 = vpack.c.bf16 %v555, %v555
    %v572 = vpack.c.bf16 %v556, %v556
    %v573 = vpack.c.bf16 %v557, %v557
    %v574 = vpack.c.bf16 %v558, %v558
    %v575 = vpack.c.bf16 %v559, %v559
    %v576 = vpack.c.bf16 %v560, %v560
    %v577 = vpack.c.bf16 %v561, %v561
    %578 = vst [vmem:[%s5] sm:$0xf] %v562
    %579 = vst [vmem:[%s5 + $0x4] sm:$0xf] %v563
    %580 = vst [vmem:[%s5 + $0x8] sm:$0xf] %v564
    %581 = vst [vmem:[%s5 + $0xc] sm:$0xf] %v565
    %582 = vst [vmem:[%s5 + $0x10] sm:$0xf] %v566
    %583 = vst [vmem:[%s5 + $0x14] sm:$0xf] %v567
    %584 = vst [vmem:[%s5 + $0x18] sm:$0xf] %v568
    %585 = vst [vmem:[%s5 + $0x1c] sm:$0xf] %v569
    %586 = vst [vmem:[%s5 + $0x20] sm:$0xf] %v570
    %587 = vst [vmem:[%s5 + $0x24] sm:$0xf] %v571
    %588 = vst [vmem:[%s5 + $0x28] sm:$0xf] %v572
    %589 = vst [vmem:[%s5 + $0x2c] sm:$0xf] %v573
    %590 = vst [vmem:[%s5 + $0x30] sm:$0xf] %v574
    %591 = vst [vmem:[%s5 + $0x34] sm:$0xf] %v575
    %592 = vst [vmem:[%s5 + $0x38] sm:$0xf] %v576
    %593 = vst [vmem:[%s5 + $0x3c] sm:$0xf] %v577
  $region29: #{_lambda_.6} parent=0 // pred_fallthru
    _
  // Predicated region
  $region30: #{_lambda_.6} parent=0 // pred_check
    _
  $region31: #{_lambda_.6} parent=0 // pred_check_branch
    %595 = sbr.rel (0) target = $region33
  $region32: #{_lambda_.6} parent=0 // pred_region
    _
  $region33: #{_lambda_.6} parent=0 // pred_fallthru
    _
  // Predicated region
  $region34: #{_lambda_.6} parent=0 // pred_check
    _
  $region35: #{_lambda_.6} parent=0 // pred_check_branch
    %597 = sbr.rel (0) target = $region37
  $region36: #{_lambda_.6} parent=0 // pred_region
    _
  $region37: #{_lambda_.6} parent=0 // pred_fallthru
    _

// kernel: _lambda_.7
$region0: #{_lambda_.7}
  #allocation0 [shape = 'u32[]', space=smem, size = 0x4, offset = 0x4, fixed_abs, tag = 'smem constant byte address 0x4 - core index']
  #allocation1 [shape = 'u32[72,128]{1,0:T(1,128)}', space=vmem, size = 0x9000, scoped, tag = 'internal scratch']
  %s0 = inlined_call_operand.vmem [shape: bf16[32,512], index: 0, kind: input, shape index: {}]
  %s1 = inlined_call_operand.vmem [shape: bf16[512,128], index: 1, kind: input, shape index: {}]
  %s2 = inlined_call_operand.vmem [shape: f32[1,128], index: 2, kind: input, shape index: {}]
  %s3 = inlined_call_operand.vmem [shape: f32[1,128], index: 3, kind: input, shape index: {}]
  %s4 = inlined_call_operand.vmem [shape: f32[1,128], index: 4, kind: input, shape index: {}]
  %s5 = inlined_call_operand.vmem [shape: bf16[16,128,128], index: 5, kind: input, shape index: {}]
  %s6 = inlined_call_operand.vmem [shape: f32[1,128], index: 6, kind: input, shape index: {}]
  %s7 = inlined_call_operand.vmem [shape: f32[2,128], index: 7, kind: output, shape index: {}]
  %s8 = sld [smem:[#allocation0]]
  $region38: #{_lambda_.7} parent=0
    _
  %s10 = ssub.s32 1, %s8
  %s11 = scalar_select 0, %s10, %s8
  // Predicated region
  $region2: #{_lambda_.7} parent=0 // pred_check
    _
  $region3: #{_lambda_.7} parent=0 // pred_check_branch
    %13 = sbr.rel (0) target = $region5
  $region4: #{_lambda_.7} parent=0 // pred_region
    _
  $region5: #{_lambda_.7} parent=0 // pred_fallthru
    _
  // Predicated region
  $region6: #{_lambda_.7} parent=0 // pred_check
    _
  $region7: #{_lambda_.7} parent=0 // pred_check_branch
    %15 = sbr.rel (0) target = $region9
  $region8: #{_lambda_.7} parent=0 // pred_region
    _
  $region9: #{_lambda_.7} parent=0 // pred_fallthru
    _
  // Predicated region
  $region10: #{_lambda_.7} parent=0 // pred_check
    _
  $region11: #{_lambda_.7} parent=0 // pred_check_branch
    %17 = sbr.rel (0) target = $region13
  $region12: #{_lambda_.7} parent=0 // pred_region
    _
  $region13: #{_lambda_.7} parent=0 // pred_fallthru
    _
  // Predicated region
  $region14: #{_lambda_.7} parent=0 // pred_check
    _
  $region15: #{_lambda_.7} parent=0 // pred_check_branch
    %19 = sbr.rel (0) target = $region17
  $region16: #{_lambda_.7} parent=0 // pred_region
    _
  $region17: #{_lambda_.7} parent=0 // pred_fallthru
    _
  // Predicated region
  $region18: #{_lambda_.7} parent=0 // pred_check
    _
  $region19: #{_lambda_.7} parent=0 // pred_check_branch
    %21 = sbr.rel (0) target = $region21
  $region20: #{_lambda_.7} parent=0 // pred_region
    _
  $region21: #{_lambda_.7} parent=0 // pred_fallthru
    _
  // Predicated region
  $region22: #{_lambda_.7} parent=0 // pred_check
    _
  $region23: #{_lambda_.7} parent=0 // pred_check_branch
    %23 = sbr.rel (0) target = $region25
  $region24: #{_lambda_.7} parent=0 // pred_region
    _
  $region25: #{_lambda_.7} parent=0 // pred_fallthru
    _
  // Predicated region
  $region26: #{_lambda_.7} parent=0 // pred_check
    _
  $region27: #{_lambda_.7} parent=0 // pred_check_branch
    %25 = sbr.rel (0) target = $region29
  $region28: #{_lambda_.7} parent=0 // pred_region
    _
  $region29: #{_lambda_.7} parent=0 // pred_fallthru
    _
  %v26 = vld [vmem:[%s0] sm:$0xff]
  %v27 = vld [vmem:[%s0 + $0x8] sm:$0xff]
  %v28 = vld [vmem:[%s0 + $0x10] sm:$0xff]
  %v29 = vld [vmem:[%s0 + $0x18] sm:$0xff]
  %v30 = vld [vmem:[%s0 + $0x20] sm:$0xff]
  %v31 = vld [vmem:[%s0 + $0x28] sm:$0xff]
  %v32 = vld [vmem:[%s0 + $0x30] sm:$0xff]
  %v33 = vld [vmem:[%s0 + $0x38] sm:$0xff]
  %v34 = vld [vmem:[%s1] sm:$0xf]
  %v35 = vld [vmem:[%s1 + $0x4] sm:$0xf]
  %v36 = vld [vmem:[%s1 + $0x8] sm:$0xf]
  %v37 = vld [vmem:[%s1 + $0xc] sm:$0xf]
  %v38 = vld [vmem:[%s1 + $0x10] sm:$0xf]
  %v39 = vld [vmem:[%s1 + $0x14] sm:$0xf]
  %v40 = vld [vmem:[%s1 + $0x18] sm:$0xf]
  %v41 = vld [vmem:[%s1 + $0x1c] sm:$0xf]
  %v42 = vld [vmem:[%s1 + $0x20] sm:$0xf]
  %v43 = vld [vmem:[%s1 + $0x24] sm:$0xf]
  %v44 = vld [vmem:[%s1 + $0x28] sm:$0xf]
  %v45 = vld [vmem:[%s1 + $0x2c] sm:$0xf]
  %v46 = vld [vmem:[%s1 + $0x30] sm:$0xf]
  %v47 = vld [vmem:[%s1 + $0x34] sm:$0xf]
  %v48 = vld [vmem:[%s1 + $0x38] sm:$0xf]
  %v49 = vld [vmem:[%s1 + $0x3c] sm:$0xf]
  %v50 = vld [vmem:[%s1 + $0x40] sm:$0xf]
  %v51 = vld [vmem:[%s1 + $0x44] sm:$0xf]
  %v52 = vld [vmem:[%s1 + $0x48] sm:$0xf]
  %v53 = vld [vmem:[%s1 + $0x4c] sm:$0xf]
  %v54 = vld [vmem:[%s1 + $0x50] sm:$0xf]
  %v55 = vld [vmem:[%s1 + $0x54] sm:$0xf]
  %v56 = vld [vmem:[%s1 + $0x58] sm:$0xf]
  %v57 = vld [vmem:[%s1 + $0x5c] sm:$0xf]
  %v58 = vld [vmem:[%s1 + $0x60] sm:$0xf]
  %v59 = vld [vmem:[%s1 + $0x64] sm:$0xf]
  %v60 = vld [vmem:[%s1 + $0x68] sm:$0xf]
  %v61 = vld [vmem:[%s1 + $0x6c] sm:$0xf]
  %v62 = vld [vmem:[%s1 + $0x70] sm:$0xf]
  %v63 = vld [vmem:[%s1 + $0x74] sm:$0xf]
  %v64 = vld [vmem:[%s1 + $0x78] sm:$0xf]
  %v65 = vld [vmem:[%s1 + $0x7c] sm:$0xf]
  %v66 = vld [vmem:[%s1 + $0x80] sm:$0xf]
  %v67 = vld [vmem:[%s1 + $0x84] sm:$0xf]
  %v68 = vld [vmem:[%s1 + $0x88] sm:$0xf]
  %v69 = vld [vmem:[%s1 + $0x8c] sm:$0xf]
  %v70 = vld [vmem:[%s1 + $0x90] sm:$0xf]
  %v71 = vld [vmem:[%s1 + $0x94] sm:$0xf]
  %v72 = vld [vmem:[%s1 + $0x98] sm:$0xf]
  %v73 = vld [vmem:[%s1 + $0x9c] sm:$0xf]
  %v74 = vld [vmem:[%s1 + $0xa0] sm:$0xf]
  %v75 = vld [vmem:[%s1 + $0xa4] sm:$0xf]
  %v76 = vld [vmem:[%s1 + $0xa8] sm:$0xf]
  %v77 = vld [vmem:[%s1 + $0xac] sm:$0xf]
  %v78 = vld [vmem:[%s1 + $0xb0] sm:$0xf]
  %v79 = vld [vmem:[%s1 + $0xb4] sm:$0xf]
  %v80 = vld [vmem:[%s1 + $0xb8] sm:$0xf]
  %v81 = vld [vmem:[%s1 + $0xbc] sm:$0xf]
  %v82 = vld [vmem:[%s1 + $0xc0] sm:$0xf]
  %v83 = vld [vmem:[%s1 + $0xc4] sm:$0xf]
  %v84 = vld [vmem:[%s1 + $0xc8] sm:$0xf]
  %v85 = vld [vmem:[%s1 + $0xcc] sm:$0xf]
  %v86 = vld [vmem:[%s1 + $0xd0] sm:$0xf]
  %v87 = vld [vmem:[%s1 + $0xd4] sm:$0xf]
  %v88 = vld [vmem:[%s1 + $0xd8] sm:$0xf]
  %v89 = vld [vmem:[%s1 + $0xdc] sm:$0xf]
  %v90 = vld [vmem:[%s1 + $0xe0] sm:$0xf]
  %v91 = vld [vmem:[%s1 + $0xe4] sm:$0xf]
  %v92 = vld [vmem:[%s1 + $0xe8] sm:$0xf]
  %v93 = vld [vmem:[%s1 + $0xec] sm:$0xf]
  %v94 = vld [vmem:[%s1 + $0xf0] sm:$0xf]
  %v95 = vld [vmem:[%s1 + $0xf4] sm:$0xf]
  %v96 = vld [vmem:[%s1 + $0xf8] sm:$0xf]
  %v97 = vld [vmem:[%s1 + $0xfc] sm:$0xf]
  %v98 = vld [vmem:[%s2] sm:$0x1]
  %v100 = vperm.slane %v98, 0
  %v110 = vunpack.c.l.b16 %v26
  %v111 = vunpack.c.h.b16 %v26
  %v112 = vunpack.c.l.b16 %v27
  %v113 = vunpack.c.h.b16 %v27
  %v114 = vunpack.c.l.b16 %v28
  %v115 = vunpack.c.h.b16 %v28
  %v116 = vunpack.c.l.b16 %v29
  %v117 = vunpack.c.h.b16 %v29
  %v118 = vunpack.c.l.b16 %v30
  %v119 = vunpack.c.h.b16 %v30
  %v120 = vunpack.c.l.b16 %v31
  %v121 = vunpack.c.h.b16 %v31
  %v122 = vunpack.c.l.b16 %v32
  %v123 = vunpack.c.h.b16 %v32
  %v124 = vunpack.c.l.b16 %v33
  %v125 = vunpack.c.h.b16 %v33
  %v126 = vpack.c.b16 %v114, %v110
  %v127 = vpack.c.b16 %v115, %v111
  %v128 = vpack.c.b16 %v116, %v112
  %v129 = vpack.c.b16 %v117, %v113
  %v130 = vpack.c.b16 %v122, %v118
  %v131 = vpack.c.b16 %v123, %v119
  %v132 = vpack.c.b16 %v124, %v120
  %v133 = vpack.c.b16 %v125, %v121
  %v206 = vunpack.c.l.b16 %v34
  %v207 = vunpack.c.l.b16 %v35
  %v208 = vunpack.c.l.b16 %v36
  %v209 = vunpack.c.l.b16 %v37
  %v210 = vunpack.c.l.b16 %v38
  %v211 = vunpack.c.l.b16 %v39
  %v212 = vunpack.c.l.b16 %v40
  %v213 = vunpack.c.l.b16 %v41
  %v214 = vunpack.c.l.b16 %v42
  %v215 = vunpack.c.l.b16 %v43
  %v216 = vunpack.c.l.b16 %v44
  %v217 = vunpack.c.l.b16 %v45
  %v218 = vunpack.c.l.b16 %v46
  %v219 = vunpack.c.l.b16 %v47
  %v220 = vunpack.c.l.b16 %v48
  %v221 = vunpack.c.l.b16 %v49
  %v222 = vunpack.c.l.b16 %v50
  %v223 = vunpack.c.l.b16 %v51
  %v224 = vunpack.c.l.b16 %v52
  %v225 = vunpack.c.l.b16 %v53
  %v226 = vunpack.c.l.b16 %v54
  %v227 = vunpack.c.l.b16 %v55
  %v228 = vunpack.c.l.b16 %v56
  %v229 = vunpack.c.l.b16 %v57
  %v230 = vunpack.c.l.b16 %v58
  %v231 = vunpack.c.l.b16 %v59
  %v232 = vunpack.c.l.b16 %v60
  %v233 = vunpack.c.l.b16 %v61
  %v234 = vunpack.c.l.b16 %v62
  %v235 = vunpack.c.l.b16 %v63
  %v236 = vunpack.c.l.b16 %v64
  %v237 = vunpack.c.l.b16 %v65
  %v238 = vunpack.c.l.b16 %v66
  %v239 = vunpack.c.l.b16 %v67
  %v240 = vunpack.c.l.b16 %v68
  %v241 = vunpack.c.l.b16 %v69
  %v242 = vunpack.c.l.b16 %v70
  %v243 = vunpack.c.l.b16 %v71
  %v244 = vunpack.c.l.b16 %v72
  %v245 = vunpack.c.l.b16 %v73
  %v246 = vunpack.c.l.b16 %v74
  %v247 = vunpack.c.l.b16 %v75
  %v248 = vunpack.c.l.b16 %v76
  %v249 = vunpack.c.l.b16 %v77
  %v250 = vunpack.c.l.b16 %v78
  %v251 = vunpack.c.l.b16 %v79
  %v252 = vunpack.c.l.b16 %v80
  %v253 = vunpack.c.l.b16 %v81
  %v254 = vunpack.c.l.b16 %v82
  %v255 = vunpack.c.l.b16 %v83
  %v256 = vunpack.c.l.b16 %v84
  %v257 = vunpack.c.l.b16 %v85
  %v258 = vunpack.c.l.b16 %v86
  %v259 = vunpack.c.l.b16 %v87
  %v260 = vunpack.c.l.b16 %v88
  %v261 = vunpack.c.l.b16 %v89
  %v262 = vunpack.c.l.b16 %v90
  %v263 = vunpack.c.l.b16 %v91
  %v264 = vunpack.c.l.b16 %v92
  %v265 = vunpack.c.l.b16 %v93
  %v266 = vunpack.c.l.b16 %v94
  %v267 = vunpack.c.l.b16 %v95
  %v268 = vunpack.c.l.b16 %v96
  %v269 = vunpack.c.l.b16 %v97
  %v270 = vpack.c.b16 %v207, %v206
  %v271 = vpack.c.b16 %v209, %v208
  %v272 = vpack.c.b16 %v211, %v210
  %v273 = vpack.c.b16 %v213, %v212
  %v274 = vpack.c.b16 %v215, %v214
  %v275 = vpack.c.b16 %v217, %v216
  %v276 = vpack.c.b16 %v219, %v218
  %v277 = vpack.c.b16 %v221, %v220
  %v278 = vpack.c.b16 %v223, %v222
  %v279 = vpack.c.b16 %v225, %v224
  %v280 = vpack.c.b16 %v227, %v226
  %v281 = vpack.c.b16 %v229, %v228
  %v282 = vpack.c.b16 %v231, %v230
  %v283 = vpack.c.b16 %v233, %v232
  %v284 = vpack.c.b16 %v235, %v234
  %v285 = vpack.c.b16 %v237, %v236
  %v286 = vpack.c.b16 %v239, %v238
  %v287 = vpack.c.b16 %v241, %v240
  %v288 = vpack.c.b16 %v243, %v242
  %v289 = vpack.c.b16 %v245, %v244
  %v290 = vpack.c.b16 %v247, %v246
  %v291 = vpack.c.b16 %v249, %v248
  %v292 = vpack.c.b16 %v251, %v250
  %v293 = vpack.c.b16 %v253, %v252
  %v294 = vpack.c.b16 %v255, %v254
  %v295 = vpack.c.b16 %v257, %v256
  %v296 = vpack.c.b16 %v259, %v258
  %v297 = vpack.c.b16 %v261, %v260
  %v298 = vpack.c.b16 %v263, %v262
  %v299 = vpack.c.b16 %v265, %v264
  %v300 = vpack.c.b16 %v267, %v266
  %v301 = vpack.c.b16 %v269, %v268
  %334 = vmatpush.bf16.msra.mxu0 %v277
  %335 = vmatpush.bf16.msra.mxu0 %v276
  %336 = vmatpush.bf16.msra.mxu0 %v275
  %337 = vmatpush.bf16.msra.mxu0 %v274
  %338 = vmatpush.bf16.msra.mxu0 %v273
  %339 = vmatpush.bf16.msra.mxu0 %v272
  %340 = vmatpush.bf16.msra.mxu0 %v271
  %341 = vmatpush.bf16.msra.mxu0 %v270
  %342 = vmatmul.bf16.gmra.mxu0 %v126
  %v343 = vpop.f32.mrf.mxu0
  %v344 = vadd.f32 %v100, %v343
  %v345 = vpop.f32.mrf.mxu0
  %v346 = vadd.f32 %v100, %v345
  %347 = vmatmul.bf16.gmra.mxu0 %v130
  %v348 = vpop.f32.mrf.mxu0
  %v349 = vadd.f32 %v100, %v348
  %v350 = vpop.f32.mrf.mxu0
  %v351 = vadd.f32 %v100, %v350
  %352 = vdwg.mxu0
  %353 = vmatpush.bf16.msra.mxu0 %v285
  %354 = vmatpush.bf16.msra.mxu0 %v284
  %355 = vmatpush.bf16.msra.mxu0 %v283
  %356 = vmatpush.bf16.msra.mxu0 %v282
  %357 = vmatpush.bf16.msra.mxu0 %v281
  %358 = vmatpush.bf16.msra.mxu0 %v280
  %359 = vmatpush.bf16.msra.mxu0 %v279
  %360 = vmatpush.bf16.msra.mxu0 %v278
  %361 = vmatmul.bf16.gmra.mxu0 %v127
  %v362 = vpop.f32.mrf.mxu0
  %v363 = vadd.f32 %v344, %v362
  %v364 = vpop.f32.mrf.mxu0
  %v365 = vadd.f32 %v346, %v364
  %366 = vmatmul.bf16.gmra.mxu0 %v131
  %v367 = vpop.f32.mrf.mxu0
  %v368 = vadd.f32 %v349, %v367
  %v369 = vpop.f32.mrf.mxu0
  %v370 = vadd.f32 %v351, %v369
  %371 = vdwg.mxu0
  %372 = vmatpush.bf16.msra.mxu0 %v293
  %373 = vmatpush.bf16.msra.mxu0 %v292
  %374 = vmatpush.bf16.msra.mxu0 %v291
  %375 = vmatpush.bf16.msra.mxu0 %v290
  %376 = vmatpush.bf16.msra.mxu0 %v289
  %377 = vmatpush.bf16.msra.mxu0 %v288
  %378 = vmatpush.bf16.msra.mxu0 %v287
  %379 = vmatpush.bf16.msra.mxu0 %v286
  %380 = vmatmul.bf16.gmra.mxu0 %v128
  %v381 = vpop.f32.mrf.mxu0
  %v382 = vadd.f32 %v363, %v381
  %v383 = vpop.f32.mrf.mxu0
  %v384 = vadd.f32 %v365, %v383
  %385 = vmatmul.bf16.gmra.mxu0 %v132
  %v386 = vpop.f32.mrf.mxu0
  %v387 = vadd.f32 %v368, %v386
  %v388 = vpop.f32.mrf.mxu0
  %v389 = vadd.f32 %v370, %v388
  %390 = vdwg.mxu0
  %391 = vmatpush.bf16.msra.mxu0 %v301
  %392 = vmatpush.bf16.msra.mxu0 %v300
  %393 = vmatpush.bf16.msra.mxu0 %v299
  %394 = vmatpush.bf16.msra.mxu0 %v298
  %395 = vmatpush.bf16.msra.mxu0 %v297
  %396 = vmatpush.bf16.msra.mxu0 %v296
  %397 = vmatpush.bf16.msra.mxu0 %v295
  %398 = vmatpush.bf16.msra.mxu0 %v294
  %399 = vmatmul.bf16.gmra.mxu0 %v129
  %v400 = vpop.f32.mrf.mxu0
  %v401 = vadd.f32 %v382, %v400
  %v402 = vpop.f32.mrf.mxu0
  %v403 = vadd.f32 %v384, %v402
  %404 = vmatmul.bf16.gmra.mxu0 %v133
  %v405 = vpop.f32.mrf.mxu0
  %v406 = vadd.f32 %v387, %v405
  %v407 = vpop.f32.mrf.mxu0
  %v408 = vadd.f32 %v389, %v407
  %409 = vdwg.mxu0
  %v410 = vadd.f32 %v401, %v403
  %v411 = vadd.f32 %v410, %v406
  %v412 = vadd.f32 %v411, %v408
  %v413 = vrot.slane %v412, 4
  %v414 = vadd.f32 %v412, %v413
  %v415 = vrot.slane %v414, 2
  %v416 = vadd.f32 %v414, %v415
  %v417 = vrot.slane %v416, 1
  %v418 = vadd.f32 %v416, %v417
  %v419 = vmul.f32 %v418, 0.03125
  %v420 = vmul.f32 %v401, %v401
  %v421 = vmul.f32 %v403, %v403
  %v422 = vmul.f32 %v406, %v406
  %v423 = vmul.f32 %v408, %v408
  %v424 = vadd.f32 %v420, %v421
  %v425 = vadd.f32 %v424, %v422
  %v426 = vadd.f32 %v425, %v423
  %v427 = vrot.slane %v426, 4
  %v428 = vadd.f32 %v426, %v427
  %v429 = vrot.slane %v428, 2
  %v430 = vadd.f32 %v428, %v429
  %v431 = vrot.slane %v430, 1
  %v432 = vadd.f32 %v430, %v431
  %v433 = vmul.f32 %v432, 0.03125
  %v434 = vmul.f32 %v419, %v419
  %v435 = vsub.f32 %v433, %v434
  %v436 = vmax.f32 %v435, 0.0
  %v437 = vld [vmem:[%s3] sm:$0x1]
  %v438 = vadd.f32 %v436, 1e-05
  %v439 = vrsqrt.pop %v438
  %v440 = vmul.f32 %v439, %v438
  %v441 = vmul.f32 %v440, %v439
  %v442 = vmul.f32 0.5, %v441
  %v443 = vsub.f32 1.5, %v442
  %v444 = vmul.f32 %v439, %v443
  %vm445 = vweird.f32 %v438
  %vm446 = vweird.f32 %v439
  %vm447 = vmor %vm445, %vm446
  %v448 = vsel %vm447, %v439, %v444
  %v449 = vmul.f32 %v437, %v448
  %v450 = vld [vmem:[%s4] sm:$0x1]
  %v451 = vmul.f32 %v419, %v449
  %v452 = vsub.f32 %v450, %v451
  %v454 = vperm.slane %v449, 0
  %v456 = vmul.f32 %v401, %v454
  %v457 = vmul.f32 %v403, %v454
  %v458 = vmul.f32 %v406, %v454
  %v459 = vmul.f32 %v408, %v454
  %v461 = vperm.slane %v452, 0
  %v463 = vadd.f32 %v456, %v461
  %v464 = vadd.f32 %v457, %v461
  %v465 = vadd.f32 %v458, %v461
  %v466 = vadd.f32 %v459, %v461
  %vm467 = vcmp.ge.f32.partialorder %v463, 0.0
  %vm468 = vcmp.ge.f32.partialorder %v464, 0.0
  %vm469 = vcmp.ge.f32.partialorder %v465, 0.0
  %vm470 = vcmp.ge.f32.partialorder %v466, 0.0
  %v471 = vmul.f32 %v463, 0.01
  %v472 = vmul.f32 %v464, 0.01
  %v473 = vmul.f32 %v465, 0.01
  %v474 = vmul.f32 %v466, 0.01
  %v475 = vsel %vm467, %v463, %v471
  %v476 = vsel %vm468, %v464, %v472
  %v477 = vsel %vm469, %v465, %v473
  %v478 = vsel %vm470, %v466, %v474
  %v479 = vpack.c.bf16 %v475, %v475
  %v480 = vld [vmem:[%s5] sm:$0xf]
  %v481 = vld [vmem:[%s5 + $0x4] sm:$0xf]
  %v482 = vld [vmem:[%s5 + $0x8] sm:$0xf]
  %v483 = vld [vmem:[%s5 + $0xc] sm:$0xf]
  %v484 = vld [vmem:[%s5 + $0x10] sm:$0xf]
  %v485 = vld [vmem:[%s5 + $0x14] sm:$0xf]
  %v486 = vld [vmem:[%s5 + $0x18] sm:$0xf]
  %v487 = vld [vmem:[%s5 + $0x1c] sm:$0xf]
  %v488 = vld [vmem:[%s5 + $0x20] sm:$0xf]
  %v489 = vld [vmem:[%s5 + $0x24] sm:$0xf]
  %v490 = vld [vmem:[%s5 + $0x28] sm:$0xf]
  %v491 = vld [vmem:[%s5 + $0x2c] sm:$0xf]
  %v492 = vld [vmem:[%s5 + $0x30] sm:$0xf]
  %v493 = vld [vmem:[%s5 + $0x34] sm:$0xf]
  %v494 = vld [vmem:[%s5 + $0x38] sm:$0xf]
  %v495 = vld [vmem:[%s5 + $0x3c] sm:$0xf]
  %s496 = scalar_lea.vmem %s5, 64
  %v497 = vld [vmem:[%s496] sm:$0xf]
  %v498 = vld [vmem:[%s496 + $0x4] sm:$0xf]
  %v499 = vld [vmem:[%s496 + $0x8] sm:$0xf]
  %v500 = vld [vmem:[%s496 + $0xc] sm:$0xf]
  %v501 = vld [vmem:[%s496 + $0x10] sm:$0xf]
  %v502 = vld [vmem:[%s496 + $0x14] sm:$0xf]
  %v503 = vld [vmem:[%s496 + $0x18] sm:$0xf]
  %v504 = vld [vmem:[%s496 + $0x1c] sm:$0xf]
  %v505 = vld [vmem:[%s496 + $0x20] sm:$0xf]
  %v506 = vld [vmem:[%s496 + $0x24] sm:$0xf]
  %v507 = vld [vmem:[%s496 + $0x28] sm:$0xf]
  %v508 = vld [vmem:[%s496 + $0x2c] sm:$0xf]
  %v509 = vld [vmem:[%s496 + $0x30] sm:$0xf]
  %v510 = vld [vmem:[%s496 + $0x34] sm:$0xf]
  %v511 = vld [vmem:[%s496 + $0x38] sm:$0xf]
  %v512 = vld [vmem:[%s496 + $0x3c] sm:$0xf]
  %v514 = vrot.slane %v479, 1
  %v532 = vunpack.c.l.b16 %v497
  %v533 = vunpack.c.l.b16 %v498
  %v534 = vunpack.c.l.b16 %v499
  %v535 = vunpack.c.l.b16 %v500
  %v536 = vunpack.c.l.b16 %v501
  %v537 = vunpack.c.l.b16 %v502
  %v538 = vunpack.c.l.b16 %v503
  %v539 = vunpack.c.l.b16 %v504
  %v540 = vunpack.c.l.b16 %v505
  %v541 = vunpack.c.l.b16 %v506
  %v542 = vunpack.c.l.b16 %v507
  %v543 = vunpack.c.l.b16 %v508
  %v544 = vunpack.c.l.b16 %v509
  %v545 = vunpack.c.l.b16 %v510
  %v546 = vunpack.c.l.b16 %v511
  %v547 = vunpack.c.l.b16 %v512
  %v548 = vpack.c.b16 %v533, %v532
  %v549 = vpack.c.b16 %v535, %v534
  %v550 = vpack.c.b16 %v537, %v536
  %v551 = vpack.c.b16 %v539, %v538
  %v552 = vpack.c.b16 %v541, %v540
  %v553 = vpack.c.b16 %v543, %v542
  %v554 = vpack.c.b16 %v545, %v544
  %v555 = vpack.c.b16 %v547, %v546
  %564 = vmatpush.bf16.msra.mxu0 %v555
  %565 = vmatpush.bf16.msra.mxu0 %v554
  %566 = vmatpush.bf16.msra.mxu0 %v553
  %567 = vmatpush.bf16.msra.mxu0 %v552
  %568 = vmatpush.bf16.msra.mxu0 %v551
  %569 = vmatpush.bf16.msra.mxu0 %v550
  %570 = vmatpush.bf16.msra.mxu0 %v549
  %571 = vmatpush.bf16.msra.mxu0 %v548
  %572 = vmatmul.bf16.gmra.mxu0 %v514
  %v573 = vpop.f32.mrf.mxu0
  %v574 = vadd.f32 0.0, %v573
  %v575 = vpop.f32.mrf.mxu0
  %576 = vdwg.mxu0
  %v593 = vunpack.c.l.b16 %v480
  %v594 = vunpack.c.l.b16 %v481
  %v595 = vunpack.c.l.b16 %v482
  %v596 = vunpack.c.l.b16 %v483
  %v597 = vunpack.c.l.b16 %v484
  %v598 = vunpack.c.l.b16 %v485
  %v599 = vunpack.c.l.b16 %v486
  %v600 = vunpack.c.l.b16 %v487
  %v601 = vunpack.c.l.b16 %v488
  %v602 = vunpack.c.l.b16 %v489
  %v603 = vunpack.c.l.b16 %v490
  %v604 = vunpack.c.l.b16 %v491
  %v605 = vunpack.c.l.b16 %v492
  %v606 = vunpack.c.l.b16 %v493
  %v607 = vunpack.c.l.b16 %v494
  %v608 = vunpack.c.l.b16 %v495
  %v609 = vpack.c.b16 %v594, %v593
  %v610 = vpack.c.b16 %v596, %v595
  %v611 = vpack.c.b16 %v598, %v597
  %v612 = vpack.c.b16 %v600, %v599
  %v613 = vpack.c.b16 %v602, %v601
  %v614 = vpack.c.b16 %v604, %v603
  %v615 = vpack.c.b16 %v606, %v605
  %v616 = vpack.c.b16 %v608, %v607
  %625 = vmatpush.bf16.msra.mxu0 %v616
  %626 = vmatpush.bf16.msra.mxu0 %v615
  %627 = vmatpush.bf16.msra.mxu0 %v614
  %628 = vmatpush.bf16.msra.mxu0 %v613
  %629 = vmatpush.bf16.msra.mxu0 %v612
  %630 = vmatpush.bf16.msra.mxu0 %v611
  %631 = vmatpush.bf16.msra.mxu0 %v610
  %632 = vmatpush.bf16.msra.mxu0 %v609
  %633 = vmatmul.bf16.gmra.mxu0 %v479
  %v634 = vpop.f32.mrf.mxu0
  %v635 = vadd.f32 %v574, %v634
  %v636 = vpop.f32.mrf.mxu0
  %637 = vdwg.mxu0
  %s638 = scalar_lea.vmem %s5, 128
  %v639 = vld [vmem:[%s638] sm:$0xf]
  %v640 = vld [vmem:[%s638 + $0x4] sm:$0xf]
  %v641 = vld [vmem:[%s638 + $0x8] sm:$0xf]
  %v642 = vld [vmem:[%s638 + $0xc] sm:$0xf]
  %v643 = vld [vmem:[%s638 + $0x10] sm:$0xf]
  %v644 = vld [vmem:[%s638 + $0x14] sm:$0xf]
  %v645 = vld [vmem:[%s638 + $0x18] sm:$0xf]
  %v646 = vld [vmem:[%s638 + $0x1c] sm:$0xf]
  %v647 = vld [vmem:[%s638 + $0x20] sm:$0xf]
  %v648 = vld [vmem:[%s638 + $0x24] sm:$0xf]
  %v649 = vld [vmem:[%s638 + $0x28] sm:$0xf]
  %v650 = vld [vmem:[%s638 + $0x2c] sm:$0xf]
  %v651 = vld [vmem:[%s638 + $0x30] sm:$0xf]
  %v652 = vld [vmem:[%s638 + $0x34] sm:$0xf]
  %v653 = vld [vmem:[%s638 + $0x38] sm:$0xf]
  %v654 = vld [vmem:[%s638 + $0x3c] sm:$0xf]
  %v655 = vrot.slane %v479, 2
  %v673 = vunpack.c.l.b16 %v639
  %v674 = vunpack.c.l.b16 %v640
  %v675 = vunpack.c.l.b16 %v641
  %v676 = vunpack.c.l.b16 %v642
  %v677 = vunpack.c.l.b16 %v643
  %v678 = vunpack.c.l.b16 %v644
  %v679 = vunpack.c.l.b16 %v645
  %v680 = vunpack.c.l.b16 %v646
  %v681 = vunpack.c.l.b16 %v647
  %v682 = vunpack.c.l.b16 %v648
  %v683 = vunpack.c.l.b16 %v649
  %v684 = vunpack.c.l.b16 %v650
  %v685 = vunpack.c.l.b16 %v651
  %v686 = vunpack.c.l.b16 %v652
  %v687 = vunpack.c.l.b16 %v653
  %v688 = vunpack.c.l.b16 %v654
  %v689 = vpack.c.b16 %v674, %v673
  %v690 = vpack.c.b16 %v676, %v675
  %v691 = vpack.c.b16 %v678, %v677
  %v692 = vpack.c.b16 %v680, %v679
  %v693 = vpack.c.b16 %v682, %v681
  %v694 = vpack.c.b16 %v684, %v683
  %v695 = vpack.c.b16 %v686, %v685
  %v696 = vpack.c.b16 %v688, %v687
  %705 = vmatpush.bf16.msra.mxu0 %v696
  %706 = vmatpush.bf16.msra.mxu0 %v695
  %707 = vmatpush.bf16.msra.mxu0 %v694
  %708 = vmatpush.bf16.msra.mxu0 %v693
  %709 = vmatpush.bf16.msra.mxu0 %v692
  %710 = vmatpush.bf16.msra.mxu0 %v691
  %711 = vmatpush.bf16.msra.mxu0 %v690
  %712 = vmatpush.bf16.msra.mxu0 %v689
  %713 = vmatmul.bf16.gmra.mxu0 %v655
  %v714 = vpop.f32.mrf.mxu0
  %v715 = vadd.f32 0.0, %v714
  %v716 = vpop.f32.mrf.mxu0
  %717 = vdwg.mxu0
  %v718 = vadd.f32 %v635, %v715
  %s719 = scalar_lea.vmem %s5, 192
  %v720 = vld [vmem:[%s719] sm:$0xf]
  %v721 = vld [vmem:[%s719 + $0x4] sm:$0xf]
  %v722 = vld [vmem:[%s719 + $0x8] sm:$0xf]
  %v723 = vld [vmem:[%s719 + $0xc] sm:$0xf]
  %v724 = vld [vmem:[%s719 + $0x10] sm:$0xf]
  %v725 = vld [vmem:[%s719 + $0x14] sm:$0xf]
  %v726 = vld [vmem:[%s719 + $0x18] sm:$0xf]
  %v727 = vld [vmem:[%s719 + $0x1c] sm:$0xf]
  %v728 = vld [vmem:[%s719 + $0x20] sm:$0xf]
  %v729 = vld [vmem:[%s719 + $0x24] sm:$0xf]
  %v730 = vld [vmem:[%s719 + $0x28] sm:$0xf]
  %v731 = vld [vmem:[%s719 + $0x2c] sm:$0xf]
  %v732 = vld [vmem:[%s719 + $0x30] sm:$0xf]
  %v733 = vld [vmem:[%s719 + $0x34] sm:$0xf]
  %v734 = vld [vmem:[%s719 + $0x38] sm:$0xf]
  %v735 = vld [vmem:[%s719 + $0x3c] sm:$0xf]
  %v736 = vrot.slane %v479, 3
  %v754 = vunpack.c.l.b16 %v720
  %v755 = vunpack.c.l.b16 %v721
  %v756 = vunpack.c.l.b16 %v722
  %v757 = vunpack.c.l.b16 %v723
  %v758 = vunpack.c.l.b16 %v724
  %v759 = vunpack.c.l.b16 %v725
  %v760 = vunpack.c.l.b16 %v726
  %v761 = vunpack.c.l.b16 %v727
  %v762 = vunpack.c.l.b16 %v728
  %v763 = vunpack.c.l.b16 %v729
  %v764 = vunpack.c.l.b16 %v730
  %v765 = vunpack.c.l.b16 %v731
  %v766 = vunpack.c.l.b16 %v732
  %v767 = vunpack.c.l.b16 %v733
  %v768 = vunpack.c.l.b16 %v734
  %v769 = vunpack.c.l.b16 %v735
  %v770 = vpack.c.b16 %v755, %v754
  %v771 = vpack.c.b16 %v757, %v756
  %v772 = vpack.c.b16 %v759, %v758
  %v773 = vpack.c.b16 %v761, %v760
  %v774 = vpack.c.b16 %v763, %v762
  %v775 = vpack.c.b16 %v765, %v764
  %v776 = vpack.c.b16 %v767, %v766
  %v777 = vpack.c.b16 %v769, %v768
  %786 = vmatpush.bf16.msra.mxu0 %v777
  %787 = vmatpush.bf16.msra.mxu0 %v776
  %788 = vmatpush.bf16.msra.mxu0 %v775
  %789 = vmatpush.bf16.msra.mxu0 %v774
  %790 = vmatpush.bf16.msra.mxu0 %v773
  %791 = vmatpush.bf16.msra.mxu0 %v772
  %792 = vmatpush.bf16.msra.mxu0 %v771
  %793 = vmatpush.bf16.msra.mxu0 %v770
  %794 = vmatmul.bf16.gmra.mxu0 %v736
  %v795 = vpop.f32.mrf.mxu0
  %v796 = vadd.f32 0.0, %v795
  %v797 = vpop.f32.mrf.mxu0
  %798 = vdwg.mxu0
  %v799 = vadd.f32 %v718, %v796
  %v800 = vpack.c.bf16 %v476, %v476
  %s801 = scalar_lea.vmem %s5, 256
  %v802 = vld [vmem:[%s801] sm:$0xf]
  %v803 = vld [vmem:[%s801 + $0x4] sm:$0xf]
  %v804 = vld [vmem:[%s801 + $0x8] sm:$0xf]
  %v805 = vld [vmem:[%s801 + $0xc] sm:$0xf]
  %v806 = vld [vmem:[%s801 + $0x10] sm:$0xf]
  %v807 = vld [vmem:[%s801 + $0x14] sm:$0xf]
  %v808 = vld [vmem:[%s801 + $0x18] sm:$0xf]
  %v809 = vld [vmem:[%s801 + $0x1c] sm:$0xf]
  %v810 = vld [vmem:[%s801 + $0x20] sm:$0xf]
  %v811 = vld [vmem:[%s801 + $0x24] sm:$0xf]
  %v812 = vld [vmem:[%s801 + $0x28] sm:$0xf]
  %v813 = vld [vmem:[%s801 + $0x2c] sm:$0xf]
  %v814 = vld [vmem:[%s801 + $0x30] sm:$0xf]
  %v815 = vld [vmem:[%s801 + $0x34] sm:$0xf]
  %v816 = vld [vmem:[%s801 + $0x38] sm:$0xf]
  %v817 = vld [vmem:[%s801 + $0x3c] sm:$0xf]
  %v834 = vunpack.c.l.b16 %v802
  %v835 = vunpack.c.l.b16 %v803
  %v836 = vunpack.c.l.b16 %v804
  %v837 = vunpack.c.l.b16 %v805
  %v838 = vunpack.c.l.b16 %v806
  %v839 = vunpack.c.l.b16 %v807
  %v840 = vunpack.c.l.b16 %v808
  %v841 = vunpack.c.l.b16 %v809
  %v842 = vunpack.c.l.b16 %v810
  %v843 = vunpack.c.l.b16 %v811
  %v844 = vunpack.c.l.b16 %v812
  %v845 = vunpack.c.l.b16 %v813
  %v846 = vunpack.c.l.b16 %v814
  %v847 = vunpack.c.l.b16 %v815
  %v848 = vunpack.c.l.b16 %v816
  %v849 = vunpack.c.l.b16 %v817
  %v850 = vpack.c.b16 %v835, %v834
  %v851 = vpack.c.b16 %v837, %v836
  %v852 = vpack.c.b16 %v839, %v838
  %v853 = vpack.c.b16 %v841, %v840
  %v854 = vpack.c.b16 %v843, %v842
  %v855 = vpack.c.b16 %v845, %v844
  %v856 = vpack.c.b16 %v847, %v846
  %v857 = vpack.c.b16 %v849, %v848
  %866 = vmatpush.bf16.msra.mxu0 %v857
  %867 = vmatpush.bf16.msra.mxu0 %v856
  %868 = vmatpush.bf16.msra.mxu0 %v855
  %869 = vmatpush.bf16.msra.mxu0 %v854
  %870 = vmatpush.bf16.msra.mxu0 %v853
  %871 = vmatpush.bf16.msra.mxu0 %v852
  %872 = vmatpush.bf16.msra.mxu0 %v851
  %873 = vmatpush.bf16.msra.mxu0 %v850
  %874 = vmatmul.bf16.gmra.mxu0 %v800
  %v875 = vpop.f32.mrf.mxu0
  %v876 = vadd.f32 0.0, %v875
  %v877 = vpop.f32.mrf.mxu0
  %878 = vdwg.mxu0
  %v879 = vadd.f32 %v799, %v876
  %s880 = scalar_lea.vmem %s5, 320
  %v881 = vld [vmem:[%s880] sm:$0xf]
  %v882 = vld [vmem:[%s880 + $0x4] sm:$0xf]
  %v883 = vld [vmem:[%s880 + $0x8] sm:$0xf]
  %v884 = vld [vmem:[%s880 + $0xc] sm:$0xf]
  %v885 = vld [vmem:[%s880 + $0x10] sm:$0xf]
  %v886 = vld [vmem:[%s880 + $0x14] sm:$0xf]
  %v887 = vld [vmem:[%s880 + $0x18] sm:$0xf]
  %v888 = vld [vmem:[%s880 + $0x1c] sm:$0xf]
  %v889 = vld [vmem:[%s880 + $0x20] sm:$0xf]
  %v890 = vld [vmem:[%s880 + $0x24] sm:$0xf]
  %v891 = vld [vmem:[%s880 + $0x28] sm:$0xf]
  %v892 = vld [vmem:[%s880 + $0x2c] sm:$0xf]
  %v893 = vld [vmem:[%s880 + $0x30] sm:$0xf]
  %v894 = vld [vmem:[%s880 + $0x34] sm:$0xf]
  %v895 = vld [vmem:[%s880 + $0x38] sm:$0xf]
  %v896 = vld [vmem:[%s880 + $0x3c] sm:$0xf]
  %v898 = vrot.slane %v800, 1
  %v916 = vunpack.c.l.b16 %v881
  %v917 = vunpack.c.l.b16 %v882
  %v918 = vunpack.c.l.b16 %v883
  %v919 = vunpack.c.l.b16 %v884
  %v920 = vunpack.c.l.b16 %v885
  %v921 = vunpack.c.l.b16 %v886
  %v922 = vunpack.c.l.b16 %v887
  %v923 = vunpack.c.l.b16 %v888
  %v924 = vunpack.c.l.b16 %v889
  %v925 = vunpack.c.l.b16 %v890
  %v926 = vunpack.c.l.b16 %v891
  %v927 = vunpack.c.l.b16 %v892
  %v928 = vunpack.c.l.b16 %v893
  %v929 = vunpack.c.l.b16 %v894
  %v930 = vunpack.c.l.b16 %v895
  %v931 = vunpack.c.l.b16 %v896
  %v932 = vpack.c.b16 %v917, %v916
  %v933 = vpack.c.b16 %v919, %v918
  %v934 = vpack.c.b16 %v921, %v920
  %v935 = vpack.c.b16 %v923, %v922
  %v936 = vpack.c.b16 %v925, %v924
  %v937 = vpack.c.b16 %v927, %v926
  %v938 = vpack.c.b16 %v929, %v928
  %v939 = vpack.c.b16 %v931, %v930
  %948 = vmatpush.bf16.msra.mxu0 %v939
  %949 = vmatpush.bf16.msra.mxu0 %v938
  %950 = vmatpush.bf16.msra.mxu0 %v937
  %951 = vmatpush.bf16.msra.mxu0 %v936
  %952 = vmatpush.bf16.msra.mxu0 %v935
  %953 = vmatpush.bf16.msra.mxu0 %v934
  %954 = vmatpush.bf16.msra.mxu0 %v933
  %955 = vmatpush.bf16.msra.mxu0 %v932
  %956 = vmatmul.bf16.gmra.mxu0 %v898
  %v957 = vpop.f32.mrf.mxu0
  %v958 = vadd.f32 0.0, %v957
  %v959 = vpop.f32.mrf.mxu0
  %960 = vdwg.mxu0
  %v961 = vadd.f32 %v879, %v958
  %s962 = scalar_lea.vmem %s5, 384
  %v963 = vld [vmem:[%s962] sm:$0xf]
  %v964 = vld [vmem:[%s962 + $0x4] sm:$0xf]
  %v965 = vld [vmem:[%s962 + $0x8] sm:$0xf]
  %v966 = vld [vmem:[%s962 + $0xc] sm:$0xf]
  %v967 = vld [vmem:[%s962 + $0x10] sm:$0xf]
  %v968 = vld [vmem:[%s962 + $0x14] sm:$0xf]
  %v969 = vld [vmem:[%s962 + $0x18] sm:$0xf]
  %v970 = vld [vmem:[%s962 + $0x1c] sm:$0xf]
  %v971 = vld [vmem:[%s962 + $0x20] sm:$0xf]
  %v972 = vld [vmem:[%s962 + $0x24] sm:$0xf]
  %v973 = vld [vmem:[%s962 + $0x28] sm:$0xf]
  %v974 = vld [vmem:[%s962 + $0x2c] sm:$0xf]
  %v975 = vld [vmem:[%s962 + $0x30] sm:$0xf]
  %v976 = vld [vmem:[%s962 + $0x34] sm:$0xf]
  %v977 = vld [vmem:[%s962 + $0x38] sm:$0xf]
  %v978 = vld [vmem:[%s962 + $0x3c] sm:$0xf]
  %v979 = vrot.slane %v800, 2
  %v997 = vunpack.c.l.b16 %v963
  %v998 = vunpack.c.l.b16 %v964
  %v999 = vunpack.c.l.b16 %v965
  %v1000 = vunpack.c.l.b16 %v966
  %v1001 = vunpack.c.l.b16 %v967
  %v1002 = vunpack.c.l.b16 %v968
  %v1003 = vunpack.c.l.b16 %v969
  %v1004 = vunpack.c.l.b16 %v970
  %v1005 = vunpack.c.l.b16 %v971
  %v1006 = vunpack.c.l.b16 %v972
  %v1007 = vunpack.c.l.b16 %v973
  %v1008 = vunpack.c.l.b16 %v974
  %v1009 = vunpack.c.l.b16 %v975
  %v1010 = vunpack.c.l.b16 %v976
  %v1011 = vunpack.c.l.b16 %v977
  %v1012 = vunpack.c.l.b16 %v978
  %v1013 = vpack.c.b16 %v998, %v997
  %v1014 = vpack.c.b16 %v1000, %v999
  %v1015 = vpack.c.b16 %v1002, %v1001
  %v1016 = vpack.c.b16 %v1004, %v1003
  %v1017 = vpack.c.b16 %v1006, %v1005
  %v1018 = vpack.c.b16 %v1008, %v1007
  %v1019 = vpack.c.b16 %v1010, %v1009
  %v1020 = vpack.c.b16 %v1012, %v1011
  %1029 = vmatpush.bf16.msra.mxu0 %v1020
  %1030 = vmatpush.bf16.msra.mxu0 %v1019
  %1031 = vmatpush.bf16.msra.mxu0 %v1018
  %1032 = vmatpush.bf16.msra.mxu0 %v1017
  %1033 = vmatpush.bf16.msra.mxu0 %v1016
  %1034 = vmatpush.bf16.msra.mxu0 %v1015
  %1035 = vmatpush.bf16.msra.mxu0 %v1014
  %1036 = vmatpush.bf16.msra.mxu0 %v1013
  %1037 = vmatmul.bf16.gmra.mxu0 %v979
  %v1038 = vpop.f32.mrf.mxu0
  %v1039 = vadd.f32 0.0, %v1038
  %v1040 = vpop.f32.mrf.mxu0
  %1041 = vdwg.mxu0
  %v1042 = vadd.f32 %v961, %v1039
  %s1043 = scalar_lea.vmem %s5, 448
  %v1044 = vld [vmem:[%s1043] sm:$0xf]
  %v1045 = vld [vmem:[%s1043 + $0x4] sm:$0xf]
  %v1046 = vld [vmem:[%s1043 + $0x8] sm:$0xf]
  %v1047 = vld [vmem:[%s1043 + $0xc] sm:$0xf]
  %v1048 = vld [vmem:[%s1043 + $0x10] sm:$0xf]
  %v1049 = vld [vmem:[%s1043 + $0x14] sm:$0xf]
  %v1050 = vld [vmem:[%s1043 + $0x18] sm:$0xf]
  %v1051 = vld [vmem:[%s1043 + $0x1c] sm:$0xf]
  %v1052 = vld [vmem:[%s1043 + $0x20] sm:$0xf]
  %v1053 = vld [vmem:[%s1043 + $0x24] sm:$0xf]
  %v1054 = vld [vmem:[%s1043 + $0x28] sm:$0xf]
  %v1055 = vld [vmem:[%s1043 + $0x2c] sm:$0xf]
  %v1056 = vld [vmem:[%s1043 + $0x30] sm:$0xf]
  %v1057 = vld [vmem:[%s1043 + $0x34] sm:$0xf]
  %v1058 = vld [vmem:[%s1043 + $0x38] sm:$0xf]
  %v1059 = vld [vmem:[%s1043 + $0x3c] sm:$0xf]
  %v1060 = vrot.slane %v800, 3
  %v1078 = vunpack.c.l.b16 %v1044
  %v1079 = vunpack.c.l.b16 %v1045
  %v1080 = vunpack.c.l.b16 %v1046
  %v1081 = vunpack.c.l.b16 %v1047
  %v1082 = vunpack.c.l.b16 %v1048
  %v1083 = vunpack.c.l.b16 %v1049
  %v1084 = vunpack.c.l.b16 %v1050
  %v1085 = vunpack.c.l.b16 %v1051
  %v1086 = vunpack.c.l.b16 %v1052
  %v1087 = vunpack.c.l.b16 %v1053
  %v1088 = vunpack.c.l.b16 %v1054
  %v1089 = vunpack.c.l.b16 %v1055
  %v1090 = vunpack.c.l.b16 %v1056
  %v1091 = vunpack.c.l.b16 %v1057
  %v1092 = vunpack.c.l.b16 %v1058
  %v1093 = vunpack.c.l.b16 %v1059
  %v1094 = vpack.c.b16 %v1079, %v1078
  %v1095 = vpack.c.b16 %v1081, %v1080
  %v1096 = vpack.c.b16 %v1083, %v1082
  %v1097 = vpack.c.b16 %v1085, %v1084
  %v1098 = vpack.c.b16 %v1087, %v1086
  %v1099 = vpack.c.b16 %v1089, %v1088
  %v1100 = vpack.c.b16 %v1091, %v1090
  %v1101 = vpack.c.b16 %v1093, %v1092
  %1110 = vmatpush.bf16.msra.mxu0 %v1101
  %1111 = vmatpush.bf16.msra.mxu0 %v1100
  %1112 = vmatpush.bf16.msra.mxu0 %v1099
  %1113 = vmatpush.bf16.msra.mxu0 %v1098
  %1114 = vmatpush.bf16.msra.mxu0 %v1097
  %1115 = vmatpush.bf16.msra.mxu0 %v1096
  %1116 = vmatpush.bf16.msra.mxu0 %v1095
  %1117 = vmatpush.bf16.msra.mxu0 %v1094
  %1118 = vmatmul.bf16.gmra.mxu0 %v1060
  %v1119 = vpop.f32.mrf.mxu0
  %v1120 = vadd.f32 0.0, %v1119
  %v1121 = vpop.f32.mrf.mxu0
  %1122 = vdwg.mxu0
  %v1123 = vadd.f32 %v1042, %v1120
  %v1124 = vpack.c.bf16 %v477, %v477
  %s1125 = scalar_lea.vmem %s5, 512
  %v1126 = vld [vmem:[%s1125] sm:$0xf]
  %v1127 = vld [vmem:[%s1125 + $0x4] sm:$0xf]
  %v1128 = vld [vmem:[%s1125 + $0x8] sm:$0xf]
  %v1129 = vld [vmem:[%s1125 + $0xc] sm:$0xf]
  %v1130 = vld [vmem:[%s1125 + $0x10] sm:$0xf]
  %v1131 = vld [vmem:[%s1125 + $0x14] sm:$0xf]
  %v1132 = vld [vmem:[%s1125 + $0x18] sm:$0xf]
  %v1133 = vld [vmem:[%s1125 + $0x1c] sm:$0xf]
  %v1134 = vld [vmem:[%s1125 + $0x20] sm:$0xf]
  %v1135 = vld [vmem:[%s1125 + $0x24] sm:$0xf]
  %v1136 = vld [vmem:[%s1125 + $0x28] sm:$0xf]
  %v1137 = vld [vmem:[%s1125 + $0x2c] sm:$0xf]
  %v1138 = vld [vmem:[%s1125 + $0x30] sm:$0xf]
  %v1139 = vld [vmem:[%s1125 + $0x34] sm:$0xf]
  %v1140 = vld [vmem:[%s1125 + $0x38] sm:$0xf]
  %v1141 = vld [vmem:[%s1125 + $0x3c] sm:$0xf]
  %v1158 = vunpack.c.l.b16 %v1126
  %v1159 = vunpack.c.l.b16 %v1127
  %v1160 = vunpack.c.l.b16 %v1128
  %v1161 = vunpack.c.l.b16 %v1129
  %v1162 = vunpack.c.l.b16 %v1130
  %v1163 = vunpack.c.l.b16 %v1131
  %v1164 = vunpack.c.l.b16 %v1132
  %v1165 = vunpack.c.l.b16 %v1133
  %v1166 = vunpack.c.l.b16 %v1134
  %v1167 = vunpack.c.l.b16 %v1135
  %v1168 = vunpack.c.l.b16 %v1136
  %v1169 = vunpack.c.l.b16 %v1137
  %v1170 = vunpack.c.l.b16 %v1138
  %v1171 = vunpack.c.l.b16 %v1139
  %v1172 = vunpack.c.l.b16 %v1140
  %v1173 = vunpack.c.l.b16 %v1141
  %v1174 = vpack.c.b16 %v1159, %v1158
  %v1175 = vpack.c.b16 %v1161, %v1160
  %v1176 = vpack.c.b16 %v1163, %v1162
  %v1177 = vpack.c.b16 %v1165, %v1164
  %v1178 = vpack.c.b16 %v1167, %v1166
  %v1179 = vpack.c.b16 %v1169, %v1168
  %v1180 = vpack.c.b16 %v1171, %v1170
  %v1181 = vpack.c.b16 %v1173, %v1172
  %1190 = vmatpush.bf16.msra.mxu0 %v1181
  %1191 = vmatpush.bf16.msra.mxu0 %v1180
  %1192 = vmatpush.bf16.msra.mxu0 %v1179
  %1193 = vmatpush.bf16.msra.mxu0 %v1178
  %1194 = vmatpush.bf16.msra.mxu0 %v1177
  %1195 = vmatpush.bf16.msra.mxu0 %v1176
  %1196 = vmatpush.bf16.msra.mxu0 %v1175
  %1197 = vmatpush.bf16.msra.mxu0 %v1174
  %1198 = vmatmul.bf16.gmra.mxu0 %v1124
  %v1199 = vpop.f32.mrf.mxu0
  %v1200 = vadd.f32 0.0, %v1199
  %v1201 = vpop.f32.mrf.mxu0
  %1202 = vdwg.mxu0
  %v1203 = vadd.f32 %v1123, %v1200
  %s1204 = scalar_lea.vmem %s5, 576
  %v1205 = vld [vmem:[%s1204] sm:$0xf]
  %v1206 = vld [vmem:[%s1204 + $0x4] sm:$0xf]
  %v1207 = vld [vmem:[%s1204 + $0x8] sm:$0xf]
  %v1208 = vld [vmem:[%s1204 + $0xc] sm:$0xf]
  %v1209 = vld [vmem:[%s1204 + $0x10] sm:$0xf]
  %v1210 = vld [vmem:[%s1204 + $0x14] sm:$0xf]
  %v1211 = vld [vmem:[%s1204 + $0x18] sm:$0xf]
  %v1212 = vld [vmem:[%s1204 + $0x1c] sm:$0xf]
  %v1213 = vld [vmem:[%s1204 + $0x20] sm:$0xf]
  %v1214 = vld [vmem:[%s1204 + $0x24] sm:$0xf]
  %v1215 = vld [vmem:[%s1204 + $0x28] sm:$0xf]
  %v1216 = vld [vmem:[%s1204 + $0x2c] sm:$0xf]
  %v1217 = vld [vmem:[%s1204 + $0x30] sm:$0xf]
  %v1218 = vld [vmem:[%s1204 + $0x34] sm:$0xf]
  %v1219 = vld [vmem:[%s1204 + $0x38] sm:$0xf]
  %v1220 = vld [vmem:[%s1204 + $0x3c] sm:$0xf]
  %v1222 = vrot.slane %v1124, 1
  %v1240 = vunpack.c.l.b16 %v1205
  %v1241 = vunpack.c.l.b16 %v1206
  %v1242 = vunpack.c.l.b16 %v1207
  %v1243 = vunpack.c.l.b16 %v1208
  %v1244 = vunpack.c.l.b16 %v1209
  %v1245 = vunpack.c.l.b16 %v1210
  %v1246 = vunpack.c.l.b16 %v1211
  %v1247 = vunpack.c.l.b16 %v1212
  %v1248 = vunpack.c.l.b16 %v1213
  %v1249 = vunpack.c.l.b16 %v1214
  %v1250 = vunpack.c.l.b16 %v1215
  %v1251 = vunpack.c.l.b16 %v1216
  %v1252 = vunpack.c.l.b16 %v1217
  %v1253 = vunpack.c.l.b16 %v1218
  %v1254 = vunpack.c.l.b16 %v1219
  %v1255 = vunpack.c.l.b16 %v1220
  %v1256 = vpack.c.b16 %v1241, %v1240
  %v1257 = vpack.c.b16 %v1243, %v1242
  %v1258 = vpack.c.b16 %v1245, %v1244
  %v1259 = vpack.c.b16 %v1247, %v1246
  %v1260 = vpack.c.b16 %v1249, %v1248
  %v1261 = vpack.c.b16 %v1251, %v1250
  %v1262 = vpack.c.b16 %v1253, %v1252
  %v1263 = vpack.c.b16 %v1255, %v1254
  %1272 = vmatpush.bf16.msra.mxu0 %v1263
  %1273 = vmatpush.bf16.msra.mxu0 %v1262
  %1274 = vmatpush.bf16.msra.mxu0 %v1261
  %1275 = vmatpush.bf16.msra.mxu0 %v1260
  %1276 = vmatpush.bf16.msra.mxu0 %v1259
  %1277 = vmatpush.bf16.msra.mxu0 %v1258
  %1278 = vmatpush.bf16.msra.mxu0 %v1257
  %1279 = vmatpush.bf16.msra.mxu0 %v1256
  %1280 = vmatmul.bf16.gmra.mxu0 %v1222
  %v1281 = vpop.f32.mrf.mxu0
  %v1282 = vadd.f32 0.0, %v1281
  %v1283 = vpop.f32.mrf.mxu0
  %1284 = vdwg.mxu0
  %v1285 = vadd.f32 %v1203, %v1282
  %s1286 = scalar_lea.vmem %s5, 640
  %v1287 = vld [vmem:[%s1286] sm:$0xf]
  %v1288 = vld [vmem:[%s1286 + $0x4] sm:$0xf]
  %v1289 = vld [vmem:[%s1286 + $0x8] sm:$0xf]
  %v1290 = vld [vmem:[%s1286 + $0xc] sm:$0xf]
  %v1291 = vld [vmem:[%s1286 + $0x10] sm:$0xf]
  %v1292 = vld [vmem:[%s1286 + $0x14] sm:$0xf]
  %v1293 = vld [vmem:[%s1286 + $0x18] sm:$0xf]
  %v1294 = vld [vmem:[%s1286 + $0x1c] sm:$0xf]
  %v1295 = vld [vmem:[%s1286 + $0x20] sm:$0xf]
  %v1296 = vld [vmem:[%s1286 + $0x24] sm:$0xf]
  %v1297 = vld [vmem:[%s1286 + $0x28] sm:$0xf]
  %v1298 = vld [vmem:[%s1286 + $0x2c] sm:$0xf]
  %v1299 = vld [vmem:[%s1286 + $0x30] sm:$0xf]
  %v1300 = vld [vmem:[%s1286 + $0x34] sm:$0xf]
  %v1301 = vld [vmem:[%s1286 + $0x38] sm:$0xf]
  %v1302 = vld [vmem:[%s1286 + $0x3c] sm:$0xf]
  %v1303 = vrot.slane %v1124, 2
  %v1321 = vunpack.c.l.b16 %v1287
  %v1322 = vunpack.c.l.b16 %v1288
  %v1323 = vunpack.c.l.b16 %v1289
  %v1324 = vunpack.c.l.b16 %v1290
  %v1325 = vunpack.c.l.b16 %v1291
  %v1326 = vunpack.c.l.b16 %v1292
  %v1327 = vunpack.c.l.b16 %v1293
  %v1328 = vunpack.c.l.b16 %v1294
  %v1329 = vunpack.c.l.b16 %v1295
  %v1330 = vunpack.c.l.b16 %v1296
  %v1331 = vunpack.c.l.b16 %v1297
  %v1332 = vunpack.c.l.b16 %v1298
  %v1333 = vunpack.c.l.b16 %v1299
  %v1334 = vunpack.c.l.b16 %v1300
  %v1335 = vunpack.c.l.b16 %v1301
  %v1336 = vunpack.c.l.b16 %v1302
  %v1337 = vpack.c.b16 %v1322, %v1321
  %v1338 = vpack.c.b16 %v1324, %v1323
  %v1339 = vpack.c.b16 %v1326, %v1325
  %v1340 = vpack.c.b16 %v1328, %v1327
  %v1341 = vpack.c.b16 %v1330, %v1329
  %v1342 = vpack.c.b16 %v1332, %v1331
  %v1343 = vpack.c.b16 %v1334, %v1333
  %v1344 = vpack.c.b16 %v1336, %v1335
  %1353 = vmatpush.bf16.msra.mxu0 %v1344
  %1354 = vmatpush.bf16.msra.mxu0 %v1343
  %1355 = vmatpush.bf16.msra.mxu0 %v1342
  %1356 = vmatpush.bf16.msra.mxu0 %v1341
  %1357 = vmatpush.bf16.msra.mxu0 %v1340
  %1358 = vmatpush.bf16.msra.mxu0 %v1339
  %1359 = vmatpush.bf16.msra.mxu0 %v1338
  %1360 = vmatpush.bf16.msra.mxu0 %v1337
  %1361 = vmatmul.bf16.gmra.mxu0 %v1303
  %v1362 = vpop.f32.mrf.mxu0
  %v1363 = vadd.f32 0.0, %v1362
  %v1364 = vpop.f32.mrf.mxu0
  %1365 = vdwg.mxu0
  %v1366 = vadd.f32 %v1285, %v1363
  %s1367 = scalar_lea.vmem %s5, 704
  %v1368 = vld [vmem:[%s1367] sm:$0xf]
  %v1369 = vld [vmem:[%s1367 + $0x4] sm:$0xf]
  %v1370 = vld [vmem:[%s1367 + $0x8] sm:$0xf]
  %v1371 = vld [vmem:[%s1367 + $0xc] sm:$0xf]
  %v1372 = vld [vmem:[%s1367 + $0x10] sm:$0xf]
  %v1373 = vld [vmem:[%s1367 + $0x14] sm:$0xf]
  %v1374 = vld [vmem:[%s1367 + $0x18] sm:$0xf]
  %v1375 = vld [vmem:[%s1367 + $0x1c] sm:$0xf]
  %v1376 = vld [vmem:[%s1367 + $0x20] sm:$0xf]
  %v1377 = vld [vmem:[%s1367 + $0x24] sm:$0xf]
  %v1378 = vld [vmem:[%s1367 + $0x28] sm:$0xf]
  %v1379 = vld [vmem:[%s1367 + $0x2c] sm:$0xf]
  %v1380 = vld [vmem:[%s1367 + $0x30] sm:$0xf]
  %v1381 = vld [vmem:[%s1367 + $0x34] sm:$0xf]
  %v1382 = vld [vmem:[%s1367 + $0x38] sm:$0xf]
  %v1383 = vld [vmem:[%s1367 + $0x3c] sm:$0xf]
  %v1384 = vrot.slane %v1124, 3
  %v1402 = vunpack.c.l.b16 %v1368
  %v1403 = vunpack.c.l.b16 %v1369
  %v1404 = vunpack.c.l.b16 %v1370
  %v1405 = vunpack.c.l.b16 %v1371
  %v1406 = vunpack.c.l.b16 %v1372
  %v1407 = vunpack.c.l.b16 %v1373
  %v1408 = vunpack.c.l.b16 %v1374
  %v1409 = vunpack.c.l.b16 %v1375
  %v1410 = vunpack.c.l.b16 %v1376
  %v1411 = vunpack.c.l.b16 %v1377
  %v1412 = vunpack.c.l.b16 %v1378
  %v1413 = vunpack.c.l.b16 %v1379
  %v1414 = vunpack.c.l.b16 %v1380
  %v1415 = vunpack.c.l.b16 %v1381
  %v1416 = vunpack.c.l.b16 %v1382
  %v1417 = vunpack.c.l.b16 %v1383
  %v1418 = vpack.c.b16 %v1403, %v1402
  %v1419 = vpack.c.b16 %v1405, %v1404
  %v1420 = vpack.c.b16 %v1407, %v1406
  %v1421 = vpack.c.b16 %v1409, %v1408
  %v1422 = vpack.c.b16 %v1411, %v1410
  %v1423 = vpack.c.b16 %v1413, %v1412
  %v1424 = vpack.c.b16 %v1415, %v1414
  %v1425 = vpack.c.b16 %v1417, %v1416
  %1434 = vmatpush.bf16.msra.mxu0 %v1425
  %1435 = vmatpush.bf16.msra.mxu0 %v1424
  %1436 = vmatpush.bf16.msra.mxu0 %v1423
  %1437 = vmatpush.bf16.msra.mxu0 %v1422
  %1438 = vmatpush.bf16.msra.mxu0 %v1421
  %1439 = vmatpush.bf16.msra.mxu0 %v1420
  %1440 = vmatpush.bf16.msra.mxu0 %v1419
  %1441 = vmatpush.bf16.msra.mxu0 %v1418
  %1442 = vmatmul.bf16.gmra.mxu0 %v1384
  %v1443 = vpop.f32.mrf.mxu0
  %v1444 = vadd.f32 0.0, %v1443
  %v1445 = vpop.f32.mrf.mxu0
  %1446 = vdwg.mxu0
  %v1447 = vadd.f32 %v1366, %v1444
  %v1448 = vpack.c.bf16 %v478, %v478
  %s1449 = scalar_lea.vmem %s5, 768
  %v1450 = vld [vmem:[%s1449] sm:$0xf]
  %v1451 = vld [vmem:[%s1449 + $0x4] sm:$0xf]
  %v1452 = vld [vmem:[%s1449 + $0x8] sm:$0xf]
  %v1453 = vld [vmem:[%s1449 + $0xc] sm:$0xf]
  %v1454 = vld [vmem:[%s1449 + $0x10] sm:$0xf]
  %v1455 = vld [vmem:[%s1449 + $0x14] sm:$0xf]
  %v1456 = vld [vmem:[%s1449 + $0x18] sm:$0xf]
  %v1457 = vld [vmem:[%s1449 + $0x1c] sm:$0xf]
  %v1458 = vld [vmem:[%s1449 + $0x20] sm:$0xf]
  %v1459 = vld [vmem:[%s1449 + $0x24] sm:$0xf]
  %v1460 = vld [vmem:[%s1449 + $0x28] sm:$0xf]
  %v1461 = vld [vmem:[%s1449 + $0x2c] sm:$0xf]
  %v1462 = vld [vmem:[%s1449 + $0x30] sm:$0xf]
  %v1463 = vld [vmem:[%s1449 + $0x34] sm:$0xf]
  %v1464 = vld [vmem:[%s1449 + $0x38] sm:$0xf]
  %v1465 = vld [vmem:[%s1449 + $0x3c] sm:$0xf]
  %v1482 = vunpack.c.l.b16 %v1450
  %v1483 = vunpack.c.l.b16 %v1451
  %v1484 = vunpack.c.l.b16 %v1452
  %v1485 = vunpack.c.l.b16 %v1453
  %v1486 = vunpack.c.l.b16 %v1454
  %v1487 = vunpack.c.l.b16 %v1455
  %v1488 = vunpack.c.l.b16 %v1456
  %v1489 = vunpack.c.l.b16 %v1457
  %v1490 = vunpack.c.l.b16 %v1458
  %v1491 = vunpack.c.l.b16 %v1459
  %v1492 = vunpack.c.l.b16 %v1460
  %v1493 = vunpack.c.l.b16 %v1461
  %v1494 = vunpack.c.l.b16 %v1462
  %v1495 = vunpack.c.l.b16 %v1463
  %v1496 = vunpack.c.l.b16 %v1464
  %v1497 = vunpack.c.l.b16 %v1465
  %v1498 = vpack.c.b16 %v1483, %v1482
  %v1499 = vpack.c.b16 %v1485, %v1484
  %v1500 = vpack.c.b16 %v1487, %v1486
  %v1501 = vpack.c.b16 %v1489, %v1488
  %v1502 = vpack.c.b16 %v1491, %v1490
  %v1503 = vpack.c.b16 %v1493, %v1492
  %v1504 = vpack.c.b16 %v1495, %v1494
  %v1505 = vpack.c.b16 %v1497, %v1496
  %1514 = vmatpush.bf16.msra.mxu0 %v1505
  %1515 = vmatpush.bf16.msra.mxu0 %v1504
  %1516 = vmatpush.bf16.msra.mxu0 %v1503
  %1517 = vmatpush.bf16.msra.mxu0 %v1502
  %1518 = vmatpush.bf16.msra.mxu0 %v1501
  %1519 = vmatpush.bf16.msra.mxu0 %v1500
  %1520 = vmatpush.bf16.msra.mxu0 %v1499
  %1521 = vmatpush.bf16.msra.mxu0 %v1498
  %1522 = vmatmul.bf16.gmra.mxu0 %v1448
  %v1523 = vpop.f32.mrf.mxu0
  %v1524 = vadd.f32 0.0, %v1523
  %v1525 = vpop.f32.mrf.mxu0
  %1526 = vdwg.mxu0
  %v1527 = vadd.f32 %v1447, %v1524
  %s1528 = scalar_lea.vmem %s5, 832
  %v1529 = vld [vmem:[%s1528] sm:$0xf]
  %v1530 = vld [vmem:[%s1528 + $0x4] sm:$0xf]
  %v1531 = vld [vmem:[%s1528 + $0x8] sm:$0xf]
  %v1532 = vld [vmem:[%s1528 + $0xc] sm:$0xf]
  %v1533 = vld [vmem:[%s1528 + $0x10] sm:$0xf]
  %v1534 = vld [vmem:[%s1528 + $0x14] sm:$0xf]
  %v1535 = vld [vmem:[%s1528 + $0x18] sm:$0xf]
  %v1536 = vld [vmem:[%s1528 + $0x1c] sm:$0xf]
  %v1537 = vld [vmem:[%s1528 + $0x20] sm:$0xf]
  %v1538 = vld [vmem:[%s1528 + $0x24] sm:$0xf]
  %v1539 = vld [vmem:[%s1528 + $0x28] sm:$0xf]
  %v1540 = vld [vmem:[%s1528 + $0x2c] sm:$0xf]
  %v1541 = vld [vmem:[%s1528 + $0x30] sm:$0xf]
  %v1542 = vld [vmem:[%s1528 + $0x34] sm:$0xf]
  %v1543 = vld [vmem:[%s1528 + $0x38] sm:$0xf]
  %v1544 = vld [vmem:[%s1528 + $0x3c] sm:$0xf]
  %v1546 = vrot.slane %v1448, 1
  %v1564 = vunpack.c.l.b16 %v1529
  %v1565 = vunpack.c.l.b16 %v1530
  %v1566 = vunpack.c.l.b16 %v1531
  %v1567 = vunpack.c.l.b16 %v1532
  %v1568 = vunpack.c.l.b16 %v1533
  %v1569 = vunpack.c.l.b16 %v1534
  %v1570 = vunpack.c.l.b16 %v1535
  %v1571 = vunpack.c.l.b16 %v1536
  %v1572 = vunpack.c.l.b16 %v1537
  %v1573 = vunpack.c.l.b16 %v1538
  %v1574 = vunpack.c.l.b16 %v1539
  %v1575 = vunpack.c.l.b16 %v1540
  %v1576 = vunpack.c.l.b16 %v1541
  %v1577 = vunpack.c.l.b16 %v1542
  %v1578 = vunpack.c.l.b16 %v1543
  %v1579 = vunpack.c.l.b16 %v1544
  %v1580 = vpack.c.b16 %v1565, %v1564
  %v1581 = vpack.c.b16 %v1567, %v1566
  %v1582 = vpack.c.b16 %v1569, %v1568
  %v1583 = vpack.c.b16 %v1571, %v1570
  %v1584 = vpack.c.b16 %v1573, %v1572
  %v1585 = vpack.c.b16 %v1575, %v1574
  %v1586 = vpack.c.b16 %v1577, %v1576
  %v1587 = vpack.c.b16 %v1579, %v1578
  %1596 = vmatpush.bf16.msra.mxu0 %v1587
  %1597 = vmatpush.bf16.msra.mxu0 %v1586
  %1598 = vmatpush.bf16.msra.mxu0 %v1585
  %1599 = vmatpush.bf16.msra.mxu0 %v1584
  %1600 = vmatpush.bf16.msra.mxu0 %v1583
  %1601 = vmatpush.bf16.msra.mxu0 %v1582
  %1602 = vmatpush.bf16.msra.mxu0 %v1581
  %1603 = vmatpush.bf16.msra.mxu0 %v1580
  %1604 = vmatmul.bf16.gmra.mxu0 %v1546
  %v1605 = vpop.f32.mrf.mxu0
  %v1606 = vadd.f32 0.0, %v1605
  %v1607 = vpop.f32.mrf.mxu0
  %1608 = vdwg.mxu0
  %v1609 = vadd.f32 %v1527, %v1606
  %s1610 = scalar_lea.vmem %s5, 896
  %v1611 = vld [vmem:[%s1610] sm:$0xf]
  %v1612 = vld [vmem:[%s1610 + $0x4] sm:$0xf]
  %v1613 = vld [vmem:[%s1610 + $0x8] sm:$0xf]
  %v1614 = vld [vmem:[%s1610 + $0xc] sm:$0xf]
  %v1615 = vld [vmem:[%s1610 + $0x10] sm:$0xf]
  %v1616 = vld [vmem:[%s1610 + $0x14] sm:$0xf]
  %v1617 = vld [vmem:[%s1610 + $0x18] sm:$0xf]
  %v1618 = vld [vmem:[%s1610 + $0x1c] sm:$0xf]
  %v1619 = vld [vmem:[%s1610 + $0x20] sm:$0xf]
  %v1620 = vld [vmem:[%s1610 + $0x24] sm:$0xf]
  %v1621 = vld [vmem:[%s1610 + $0x28] sm:$0xf]
  %v1622 = vld [vmem:[%s1610 + $0x2c] sm:$0xf]
  %v1623 = vld [vmem:[%s1610 + $0x30] sm:$0xf]
  %v1624 = vld [vmem:[%s1610 + $0x34] sm:$0xf]
  %v1625 = vld [vmem:[%s1610 + $0x38] sm:$0xf]
  %v1626 = vld [vmem:[%s1610 + $0x3c] sm:$0xf]
  %v1627 = vrot.slane %v1448, 2
  %v1645 = vunpack.c.l.b16 %v1611
  %v1646 = vunpack.c.l.b16 %v1612
  %v1647 = vunpack.c.l.b16 %v1613
  %v1648 = vunpack.c.l.b16 %v1614
  %v1649 = vunpack.c.l.b16 %v1615
  %v1650 = vunpack.c.l.b16 %v1616
  %v1651 = vunpack.c.l.b16 %v1617
  %v1652 = vunpack.c.l.b16 %v1618
  %v1653 = vunpack.c.l.b16 %v1619
  %v1654 = vunpack.c.l.b16 %v1620
  %v1655 = vunpack.c.l.b16 %v1621
  %v1656 = vunpack.c.l.b16 %v1622
  %v1657 = vunpack.c.l.b16 %v1623
  %v1658 = vunpack.c.l.b16 %v1624
  %v1659 = vunpack.c.l.b16 %v1625
  %v1660 = vunpack.c.l.b16 %v1626
  %v1661 = vpack.c.b16 %v1646, %v1645
  %v1662 = vpack.c.b16 %v1648, %v1647
  %v1663 = vpack.c.b16 %v1650, %v1649
  %v1664 = vpack.c.b16 %v1652, %v1651
  %v1665 = vpack.c.b16 %v1654, %v1653
  %v1666 = vpack.c.b16 %v1656, %v1655
  %v1667 = vpack.c.b16 %v1658, %v1657
  %v1668 = vpack.c.b16 %v1660, %v1659
  %1677 = vmatpush.bf16.msra.mxu0 %v1668
  %1678 = vmatpush.bf16.msra.mxu0 %v1667
  %1679 = vmatpush.bf16.msra.mxu0 %v1666
  %1680 = vmatpush.bf16.msra.mxu0 %v1665
  %1681 = vmatpush.bf16.msra.mxu0 %v1664
  %1682 = vmatpush.bf16.msra.mxu0 %v1663
  %1683 = vmatpush.bf16.msra.mxu0 %v1662
  %1684 = vmatpush.bf16.msra.mxu0 %v1661
  %1685 = vmatmul.bf16.gmra.mxu0 %v1627
  %v1686 = vpop.f32.mrf.mxu0
  %v1687 = vadd.f32 0.0, %v1686
  %v1688 = vpop.f32.mrf.mxu0
  %1689 = vdwg.mxu0
  %v1690 = vadd.f32 %v1609, %v1687
  %s1691 = scalar_lea.vmem %s5, 960
  %v1692 = vld [vmem:[%s1691] sm:$0xf]
  %v1693 = vld [vmem:[%s1691 + $0x4] sm:$0xf]
  %v1694 = vld [vmem:[%s1691 + $0x8] sm:$0xf]
  %v1695 = vld [vmem:[%s1691 + $0xc] sm:$0xf]
  %v1696 = vld [vmem:[%s1691 + $0x10] sm:$0xf]
  %v1697 = vld [vmem:[%s1691 + $0x14] sm:$0xf]
  %v1698 = vld [vmem:[%s1691 + $0x18] sm:$0xf]
  %v1699 = vld [vmem:[%s1691 + $0x1c] sm:$0xf]
  %v1700 = vld [vmem:[%s1691 + $0x20] sm:$0xf]
  %v1701 = vld [vmem:[%s1691 + $0x24] sm:$0xf]
  %v1702 = vld [vmem:[%s1691 + $0x28] sm:$0xf]
  %v1703 = vld [vmem:[%s1691 + $0x2c] sm:$0xf]
  %v1704 = vld [vmem:[%s1691 + $0x30] sm:$0xf]
  %v1705 = vld [vmem:[%s1691 + $0x34] sm:$0xf]
  %v1706 = vld [vmem:[%s1691 + $0x38] sm:$0xf]
  %v1707 = vld [vmem:[%s1691 + $0x3c] sm:$0xf]
  %v1708 = vrot.slane %v1448, 3
  %v1726 = vunpack.c.l.b16 %v1692
  %v1727 = vunpack.c.l.b16 %v1693
  %v1728 = vunpack.c.l.b16 %v1694
  %v1729 = vunpack.c.l.b16 %v1695
  %v1730 = vunpack.c.l.b16 %v1696
  %v1731 = vunpack.c.l.b16 %v1697
  %v1732 = vunpack.c.l.b16 %v1698
  %v1733 = vunpack.c.l.b16 %v1699
  %v1734 = vunpack.c.l.b16 %v1700
  %v1735 = vunpack.c.l.b16 %v1701
  %v1736 = vunpack.c.l.b16 %v1702
  %v1737 = vunpack.c.l.b16 %v1703
  %v1738 = vunpack.c.l.b16 %v1704
  %v1739 = vunpack.c.l.b16 %v1705
  %v1740 = vunpack.c.l.b16 %v1706
  %v1741 = vunpack.c.l.b16 %v1707
  %v1742 = vpack.c.b16 %v1727, %v1726
  %v1743 = vpack.c.b16 %v1729, %v1728
  %v1744 = vpack.c.b16 %v1731, %v1730
  %v1745 = vpack.c.b16 %v1733, %v1732
  %v1746 = vpack.c.b16 %v1735, %v1734
  %v1747 = vpack.c.b16 %v1737, %v1736
  %v1748 = vpack.c.b16 %v1739, %v1738
  %v1749 = vpack.c.b16 %v1741, %v1740
  %1758 = vmatpush.bf16.msra.mxu0 %v1749
  %1759 = vmatpush.bf16.msra.mxu0 %v1748
  %1760 = vmatpush.bf16.msra.mxu0 %v1747
  %1761 = vmatpush.bf16.msra.mxu0 %v1746
  %1762 = vmatpush.bf16.msra.mxu0 %v1745
  %1763 = vmatpush.bf16.msra.mxu0 %v1744
  %1764 = vmatpush.bf16.msra.mxu0 %v1743
  %1765 = vmatpush.bf16.msra.mxu0 %v1742
  %1766 = vmatmul.bf16.gmra.mxu0 %v1708
  %v1767 = vpop.f32.mrf.mxu0
  %v1768 = vadd.f32 0.0, %v1767
  %v1769 = vpop.f32.mrf.mxu0
  %1770 = vdwg.mxu0
  %v1771 = vadd.f32 %v1690, %v1768
  %v1772 = vld [vmem:[%s6] sm:$0x1]
  %v1774 = vperm.slane %v1772, 0
  %v1776 = vadd.f32 %v1771, %v1774
  %v1777 = vlaneseq
  %v1778 = vand.u32 %v1777, 127
  %vm1779 = vcmp.eq.s32.totalorder %v1778, 0
  %v1780 = vxor.u32 %v1776, 2147483648
  %v1781 = vmul.f32 %v1780, 1.442695
  %v1782 = vpow.pop %v1781
  %v1783 = vadd.f32 %v1782, 1.0
  %v1784 = vrcp.pop %v1783
  %v1785 = vmul.f32 %v1783, %v1784
  %v1786 = vsub.f32 1.0, %v1785
  %v1787 = vmul.f32 %v1784, %v1786
  %v1788 = vadd.f32 %v1784, %v1787
  %vm1789 = vweird.f32 %v1783
  %vm1790 = vweird.f32 %v1784
  %vm1791 = vmor %vm1789, %vm1790
  %v1792 = vsel %vm1791, %v1784, %v1788
  %v1793 = vand.u32 2147483647, %v1783
  %vm1794 = vcmp.eq.f32.partialorder %v1793, 8.507059e+37
  %v1795 = vand.u32 %v1783, 2147483648
  %v1796 = vor.u32 1.1754944e-38, %v1795
  %v1797 = vsel %vm1794, %v1796, %v1792
  %v1798 = vmul.f32 1.0, %v1797
  %v1799 = vsel %vm1779, %v1798, %v1776
  %1800 = vst [vmem:[%s7] sm:$0x3] %v1799
  // Predicated region
  $region30: #{_lambda_.7} parent=0 // pred_check
    _
  $region31: #{_lambda_.7} parent=0 // pred_check_branch
    %1802 = sbr.rel (0) target = $region33
  $region32: #{_lambda_.7} parent=0 // pred_region
    _
  $region33: #{_lambda_.7} parent=0 // pred_fallthru
    _
  // Predicated region
  $region34: #{_lambda_.7} parent=0 // pred_check
    _
  $region35: #{_lambda_.7} parent=0 // pred_check_branch
    %1804 = sbr.rel (0) target = $region37
  $region36: #{_lambda_.7} parent=0 // pred_region
    _
  $region37: #{_lambda_.7} parent=0 // pred_fallthru
    _

</llo_original>
